<compile_context>
chip_gen: v7x
topology: tpu7x:2x2x1
jax: 0.10.0
libtpu: 0.0.40
codegen_flags: <defaults>
</compile_context>

<pallas_src>
import math
from functools import partial

import jax
import jax.numpy as jnp
from jax.experimental import pallas as pl
from jax.experimental.pallas import tpu as pltpu


# ----------------------------- helpers -------------------------------------

def _cp(*sem):
    return pltpu.CompilerParams(
        dimension_semantics=tuple(sem),
        vmem_limit_bytes=64 * 1024 * 1024,   # <= physical VMEM on v5e/v6e/v7x
    )


def _pick_tile(dim, pref, align):
    """Largest tile <= pref that is a multiple of `align` AND divides `dim`;
    otherwise the full dim (full-extent blocks are always legal)."""
    if dim <= pref:
        return dim
    t = (pref // align) * align
    while t >= align:
        if dim % t == 0:
            return t
        t -= align
    return dim


# ----------------------------- Pallas kernels ------------------------------

def _linear_kernel(x_ref, w_ref, b_ref, o_ref, acc_ref):
    """Tiled matmul with K-axis accumulation (pattern P1+P3)."""
    k = pl.program_id(2)

    @pl.when(k == 0)
    def _():
        acc_ref[...] = jnp.zeros_like(acc_ref)

    acc_ref[...] += jnp.dot(x_ref[...].astype(jnp.bfloat16), w_ref[...],
                            preferred_element_type=jnp.float32)

    @pl.when(k == pl.num_programs(2) - 1)
    def _():
        o_ref[...] = acc_ref[...] + b_ref[...]


def linear(x2d, w, b, *, tm=256, tn=512, tk=512):
    """x2d: (M, K) f32 @ w: (K, N) bf16 + b: (N,) f32 -> (M, N) f32."""
    m, kdim = x2d.shape
    n = w.shape[1]
    tm = _pick_tile(m, tm, 8)
    tn = _pick_tile(n, tn, 128)
    tk = _pick_tile(kdim, tk, 128)
    grid = (m // tm, n // tn, kdim // tk)
    return pl.pallas_call(
        _linear_kernel,
        grid=grid,
        in_specs=[
            pl.BlockSpec((tm, tk), lambda i, j, k: (i, k)),
            pl.BlockSpec((tk, tn), lambda i, j, k: (k, j)),
            pl.BlockSpec((1, tn), lambda i, j, k: (0, j)),
        ],
        out_specs=pl.BlockSpec((tm, tn), lambda i, j, k: (i, j)),
        out_shape=jax.ShapeDtypeStruct((m, n), jnp.float32),
        scratch_shapes=[pltpu.VMEM((tm, tn), jnp.float32)],
        compiler_params=_cp("parallel", "parallel", "arbitrary"),
    )(x2d, w, b.reshape(1, n))


def _fused_proj_kernel(x_ref, *refs):
    """One activation-tile load, N projections, N outputs."""
    n = len(refs) // 3
    w_refs, b_refs, o_refs = refs[:n], refs[n:2 * n], refs[2 * n:]
    x = x_ref[...].astype(jnp.bfloat16)
    for w_ref, b_ref, o_ref in zip(w_refs, b_refs, o_refs):
        o_ref[...] = (jnp.dot(x, w_ref[...], preferred_element_type=jnp.float32)
                      + b_ref[...])


def fused_proj(x2d, ws, bs, *, tm=256):
    """Fused projections of one input: returns [x@w_i + b_i for i]."""
    m, din = x2d.shape
    tm = _pick_tile(m, tm, 8)
    douts = [w.shape[1] for w in ws]
    in_specs = [pl.BlockSpec((tm, din), lambda i: (i, 0))]
    in_specs += [pl.BlockSpec(w.shape, lambda i: (0, 0)) for w in ws]
    in_specs += [pl.BlockSpec((1, d_o), lambda i: (0, 0)) for d_o in douts]
    out_specs = [pl.BlockSpec((tm, d_o), lambda i: (i, 0)) for d_o in douts]
    out_shape = [jax.ShapeDtypeStruct((m, d_o), jnp.float32) for d_o in douts]
    return pl.pallas_call(
        _fused_proj_kernel,
        grid=(m // tm,),
        in_specs=in_specs,
        out_specs=out_specs,
        out_shape=out_shape,
        compiler_params=_cp("parallel"),
    )(x2d, *ws, *[b.reshape(1, -1) for b in bs])


def _proj_add_ln_kernel(x_ref, w_ref, b_ref, r_ref, g_ref, bt_ref, o_ref):
    """LayerNorm((x @ w + b) + residual) with eps=1e-12 (biased variance)."""
    y = (jnp.dot(x_ref[...].astype(jnp.bfloat16), w_ref[...],
                 preferred_element_type=jnp.float32) + b_ref[...]) + r_ref[...]
    mean = jnp.mean(y, axis=-1, keepdims=True)
    var = jnp.mean((y - mean) ** 2, axis=-1, keepdims=True)
    y = (y - mean) * jax.lax.rsqrt(var + 1e-12)
    o_ref[...] = g_ref[...] * y + bt_ref[...]


def proj_add_ln(x2d, w, b, res2d, gamma, beta, *, tm=256):
    m, din = x2d.shape
    dout = w.shape[1]
    tm = _pick_tile(m, tm, 8)
    return pl.pallas_call(
        _proj_add_ln_kernel,
        grid=(m // tm,),
        in_specs=[
            pl.BlockSpec((tm, din), lambda i: (i, 0)),
            pl.BlockSpec((din, dout), lambda i: (0, 0)),
            pl.BlockSpec((1, dout), lambda i: (0, 0)),
            pl.BlockSpec((tm, dout), lambda i: (i, 0)),
            pl.BlockSpec((1, dout), lambda i: (0, 0)),
            pl.BlockSpec((1, dout), lambda i: (0, 0)),
        ],
        out_specs=pl.BlockSpec((tm, dout), lambda i: (i, 0)),
        out_shape=jax.ShapeDtypeStruct((m, dout), jnp.float32),
        compiler_params=_cp("parallel"),
    )(x2d, w, b.reshape(1, dout), res2d, gamma.reshape(1, dout), beta.reshape(1, dout))


def _ffn_add_ln_kernel(x_ref, w1_ref, b1_ref, w2_ref, b2_ref, g_ref, bt_ref, o_ref):
    """LayerNorm(FFN(x) + x): relu(x@w1+b1)@w2+b2 + x, then LN (eps=1e-12)."""
    x = x_ref[...]
    h = jnp.dot(x.astype(jnp.bfloat16), w1_ref[...],
                preferred_element_type=jnp.float32) + b1_ref[...]
    h = jnp.maximum(h, 0.0)
    y = jnp.dot(h.astype(jnp.bfloat16), w2_ref[...],
                preferred_element_type=jnp.float32) + b2_ref[...]
    y = y + x
    mean = jnp.mean(y, axis=-1, keepdims=True)
    var = jnp.mean((y - mean) ** 2, axis=-1, keepdims=True)
    y = (y - mean) * jax.lax.rsqrt(var + 1e-12)
    o_ref[...] = g_ref[...] * y + bt_ref[...]


def ffn_add_ln(x2d, w1, b1, w2, b2, gamma, beta, *, tm=256):
    m, d = x2d.shape
    f = w1.shape[1]
    tm = _pick_tile(m, tm, 8)
    return pl.pallas_call(
        _ffn_add_ln_kernel,
        grid=(m // tm,),
        in_specs=[
            pl.BlockSpec((tm, d), lambda i: (i, 0)),
            pl.BlockSpec((d, f), lambda i: (0, 0)),
            pl.BlockSpec((1, f), lambda i: (0, 0)),
            pl.BlockSpec((f, d), lambda i: (0, 0)),
            pl.BlockSpec((1, d), lambda i: (0, 0)),
            pl.BlockSpec((1, d), lambda i: (0, 0)),
            pl.BlockSpec((1, d), lambda i: (0, 0)),
        ],
        out_specs=pl.BlockSpec((tm, d), lambda i: (i, 0)),
        out_shape=jax.ShapeDtypeStruct((m, d), jnp.float32),
        compiler_params=_cp("parallel"),
    )(x2d, w1, b1.reshape(1, f), w2, b2.reshape(1, d),
      gamma.reshape(1, d), beta.reshape(1, d))


def _mha_kernel(q_ref, k_ref, v_ref, m_ref, o_ref, *, n_head, scale):
    """All heads of one batch element; lane-dense (S, D) in/out; mask loaded once."""
    sq, d = q_ref.shape
    dh = d // n_head
    q = q_ref[...].astype(jnp.bfloat16)                  # (Sq, D)
    k = k_ref[...].astype(jnp.bfloat16)                  # (Sk, D)
    v = v_ref[...].astype(jnp.bfloat16)                  # (Sk, D)
    neg = m_ref[...].astype(jnp.int32) == 0              # (Sq, Sk) bool
    dn_qk = (((1,), (1,)), ((), ()))                     # q @ k^T
    dn_pv = (((1,), (0,)), ((), ()))                     # p @ v
    outs = []
    for h in range(n_head):                              # static unroll over heads
        qh = jax.lax.slice_in_dim(q, h * dh, (h + 1) * dh, axis=1)
        kh = jax.lax.slice_in_dim(k, h * dh, (h + 1) * dh, axis=1)
        vh = jax.lax.slice_in_dim(v, h * dh, (h + 1) * dh, axis=1)
        s = jax.lax.dot_general(qh, kh, dn_qk,
                                preferred_element_type=jnp.float32) * scale
        s = jnp.where(neg, jnp.float32(-10000.0), s)     # masked_fill(mask==0, -10000)
        s = s - jnp.max(s, axis=-1, keepdims=True)
        p = jnp.exp(s)
        p = p * pl.reciprocal(jnp.sum(p, axis=-1, keepdims=True), approx=True)
        outs.append(jax.lax.dot_general(p.astype(jnp.bfloat16), vh, dn_pv,
                                        preferred_element_type=jnp.float32))
    o_ref[...] = jnp.concatenate(outs, axis=-1)          # one dense (Sq, D) store


def sdpa(q, k, v, mask, n_head):
    """q: (B,Sq,D), k/v: (B,Sk,D), mask: (B,Sq,Sk) int8 -> (B,Sq,D)."""
    bsz, sq, d = q.shape
    sk = k.shape[1]
    scale = 1.0 / math.sqrt(d // n_head)
    return pl.pallas_call(
        partial(_mha_kernel, n_head=n_head, scale=scale),
        grid=(bsz,),
        in_specs=[
            pl.BlockSpec((None, sq, d), lambda b: (b, 0, 0)),
            pl.BlockSpec((None, sk, d), lambda b: (b, 0, 0)),
            pl.BlockSpec((None, sk, d), lambda b: (b, 0, 0)),
            pl.BlockSpec((None, sq, sk), lambda b: (b, 0, 0)),
        ],
        out_specs=pl.BlockSpec((None, sq, d), lambda b: (b, 0, 0)),
        out_shape=jax.ShapeDtypeStruct((bsz, sq, d), jnp.float32),
        compiler_params=_cp("parallel"),
    )(q, k, v, mask)


# ----------------------------- model pieces --------------------------------

def multi_head_attention(p, q_in, kv_in, mask, n_head, *, self_attn):
    """Returns the pre-output-projection context (B, Sq, D)."""
    bsz, sq, d = q_in.shape
    sk = kv_in.shape[1]
    if self_attn:   # fused Q/K/V projection: one activation read, three dots
        q, k, v = fused_proj(q_in.reshape(bsz * sq, d),
                             (p["w_q"], p["w_k"], p["w_v"]),
                             (p["b_q"], p["b_k"], p["b_v"]))
    else:           # cross-attention: Q from decoder states, fused K/V from encoder
        (q,) = fused_proj(q_in.reshape(bsz * sq, d), (p["w_q"],), (p["b_q"],))
        k, v = fused_proj(kv_in.reshape(bsz * sk, d),
                          (p["w_k"], p["w_v"]), (p["b_k"], p["b_v"]))
    return sdpa(q.reshape(bsz, sq, d), k.reshape(bsz, sk, d),
                v.reshape(bsz, sk, d), mask, n_head)


def positional_encoding(max_len, d_model):
    pos = jnp.arange(max_len, dtype=jnp.float32)[:, None]
    _2i = jnp.arange(0, d_model, 2, dtype=jnp.float32)
    angles = pos / (10000.0 ** (_2i / d_model))
    enc = jnp.zeros((max_len, d_model), dtype=jnp.float32)
    enc = enc.at[:, 0::2].set(jnp.sin(angles))
    enc = enc.at[:, 1::2].set(jnp.cos(angles))
    return enc


def transformer_embedding(tokens, emb_table, pos_enc):
    # dropout treated as identity (eval mode); gather + add stay in XLA
    _, seq_len = tokens.shape
    tok = jnp.take(emb_table, tokens, axis=0)            # (B, S, D)
    return tok + pos_enc[:seq_len, :][None, :, :]


def encoder_layer(p, x, src_mask, n_head):
    bsz, s, d = x.shape
    x2 = x.reshape(bsz * s, d)
    ctx = multi_head_attention(p["attn"], x, x, src_mask, n_head, self_attn=True)
    x2 = proj_add_ln(ctx.reshape(bsz * s, d), p["attn"]["w_cat"], p["attn"]["b_cat"],
                     x2, p["norm1_g"], p["norm1_b"])
    x2 = ffn_add_ln(x2, p["ffn_w1"], p["ffn_b1"], p["ffn_w2"], p["ffn_b2"],
                    p["norm2_g"], p["norm2_b"])
    return x2.reshape(bsz, s, d)


def decoder_layer(p, dec, enc, trg_mask, src_trg_mask, n_head):
    bsz, s, d = dec.shape
    x2 = dec.reshape(bsz * s, d)
    ctx = multi_head_attention(p["self_attn"], dec, dec, trg_mask, n_head,
                               self_attn=True)
    x2 = proj_add_ln(ctx.reshape(bsz * s, d),
                     p["self_attn"]["w_cat"], p["self_attn"]["b_cat"],
                     x2, p["norm1_g"], p["norm1_b"])
    x3 = x2.reshape(bsz, s, d)
    ctx = multi_head_attention(p["cross_attn"], x3, enc, src_trg_mask, n_head,
                               self_attn=False)
    x2 = proj_add_ln(ctx.reshape(bsz * s, d),
                     p["cross_attn"]["w_cat"], p["cross_attn"]["b_cat"],
                     x2, p["norm2_g"], p["norm2_b"])
    x2 = ffn_add_ln(x2, p["ffn_w1"], p["ffn_b1"], p["ffn_w2"], p["ffn_b2"],
                    p["norm3_g"], p["norm3_b"])
    return x2.reshape(bsz, s, d)


def make_pad_mask(q_tok, k_tok, src_pad_idx):
    # NB: the reference module uses src_pad_idx for BOTH q and k (reproduced exactly).
    k_ne = (k_tok != src_pad_idx)[:, None, :]   # (B,1,Lk)
    q_ne = (q_tok != src_pad_idx)[:, :, None]   # (B,Lq,1)
    return (k_ne & q_ne).astype(jnp.int8)       # (B,Lq,Lk) int8 (1=keep, 0=mask)


def make_no_peak_mask(q_tok, k_tok):
    lq, lk = q_tok.shape[1], k_tok.shape[1]
    return jnp.tril(jnp.ones((lq, lk), dtype=jnp.int8))


def transformer_forward(params, src, trg, cfg):
    n_head = cfg["n_head"]
    src_mask = make_pad_mask(src, src, cfg["src_pad_idx"])
    src_trg_mask = make_pad_mask(trg, src, cfg["src_pad_idx"])
    trg_mask = make_pad_mask(trg, trg, cfg["src_pad_idx"]) * \
        make_no_peak_mask(trg, trg)[None, :, :]

    # ---- encoder ----
    x = transformer_embedding(src, params["enc_emb"], params["pos_enc"])
    for lp in params["enc_layers"]:
        x = encoder_layer(lp, x, src_mask, n_head)
    enc_src = x

    # ---- decoder ----
    y = transformer_embedding(trg, params["dec_emb"], params["pos_enc"])
    for lp in params["dec_layers"]:
        y = decoder_layer(lp, y, enc_src, trg_mask, src_trg_mask, n_head)

    bsz, s, d = y.shape
    logits = linear(y.reshape(bsz * s, d), params["out_w"], params["out_b"])
    return logits.reshape(bsz, s, -1)


# ----------------------------- parameter init ------------------------------

def init_params(key, cfg):
    d_model, n_head = cfg["d_model"], cfg["n_head"]
    ffn_hidden, n_layers = cfg["ffn_hidden"], cfg["n_layers"]
    keys = iter(jax.random.split(key, 512))

    def lin(din, dout):
        bound = 1.0 / math.sqrt(din)
        w = jax.random.uniform(next(keys), (din, dout), jnp.float32, -bound, bound)
        b = jax.random.uniform(next(keys), (dout,), jnp.float32, -bound, bound)
        # Weights stored bf16 for the MXU; biases (added post-accumulation) stay f32.
        return w.astype(jnp.bfloat16), b

    def attn_params():
        p = {}
        for name in ("q", "k", "v", "cat"):
            w, b = lin(d_model, d_model)
            p[f"w_{name}"] = w
            p[f"b_{name}"] = b
        return p

    def enc_layer_params():
        w1, b1 = lin(d_model, ffn_hidden)
        w2, b2 = lin(ffn_hidden, d_model)
        return {
            "attn": attn_params(),
            "norm1_g": jnp.ones((d_model,), jnp.float32),
            "norm1_b": jnp.zeros((d_model,), jnp.float32),
            "ffn_w1": w1, "ffn_b1": b1, "ffn_w2": w2, "ffn_b2": b2,
            "norm2_g": jnp.ones((d_model,), jnp.float32),
            "norm2_b": jnp.zeros((d_model,), jnp.float32),
        }

    def dec_layer_params():
        w1, b1 = lin(d_model, ffn_hidden)
        w2, b2 = lin(ffn_hidden, d_model)
        return {
            "self_attn": attn_params(),
            "norm1_g": jnp.ones((d_model,), jnp.float32),
            "norm1_b": jnp.zeros((d_model,), jnp.float32),
            "cross_attn": attn_params(),
            "norm2_g": jnp.ones((d_model,), jnp.float32),
            "norm2_b": jnp.zeros((d_model,), jnp.float32),
            "ffn_w1": w1, "ffn_b1": b1, "ffn_w2": w2, "ffn_b2": b2,
            "norm3_g": jnp.ones((d_model,), jnp.float32),
            "norm3_b": jnp.zeros((d_model,), jnp.float32),
        }

    # nn.Embedding(vocab, d_model, padding_idx=1): N(0,1) init, pad row zeroed.
    enc_emb = jax.random.normal(next(keys), (cfg["enc_voc_size"], d_model), jnp.float32)
    enc_emb = enc_emb.at[1].set(0.0)
    dec_emb = jax.random.normal(next(keys), (cfg["dec_voc_size"], d_model), jnp.float32)
    dec_emb = dec_emb.at[1].set(0.0)

    out_w, out_b = lin(d_model, cfg["dec_voc_size"])

    return {
        "enc_emb": enc_emb,
        "dec_emb": dec_emb,
        "pos_enc": positional_encoding(cfg["max_len"], d_model),
        "enc_layers": [enc_layer_params() for _ in range(n_layers)],
        "dec_layers": [dec_layer_params() for _ in range(n_layers)],
        "out_w": out_w,
        "out_b": out_b,
    }


# ------------------------------------ main ---------------------------------

if __name__ == "__main__":
    cfg = dict(
        src_pad_idx=1, trg_pad_idx=1, trg_sos_idx=2,
        enc_voc_size=50, dec_voc_size=50,
        d_model=32, n_head=4, max_len=16,
        ffn_hidden=64, n_layers=2, drop_prob=0.0,  # dropout identity (eval mode)
    )
    B, S_SRC, S_TRG = 2, 8, 8

    root = jax.random.PRNGKey(0)
    k_params, k_src, k_trg = jax.random.split(root, 3)
    params = init_params(k_params, cfg)

    src = jax.random.randint(k_src, (B, S_SRC), 0, cfg["enc_voc_size"], dtype=jnp.int32)
    trg = jax.random.randint(k_trg, (B, S_TRG), 0, cfg["dec_voc_size"], dtype=jnp.int32)
    # sprinkle some pad tokens so the masks are non-trivial
    src = src.at[0, -2:].set(cfg["src_pad_idx"])
    trg = trg.at[1, -3:].set(cfg["trg_pad_idx"])

    fwd = jax.jit(partial(transformer_forward, cfg=cfg))
    out = fwd(params, src, trg)
    jax.block_until_ready(out)
    assert out.shape == (B, S_TRG, cfg["dec_voc_size"])
    assert bool(jnp.all(jnp.isfinite(out)))
    print("KERNEL_OK")
</pallas_src>

<mosaic_0001>
module attributes {stable_mosaic.version = 11 : i64} {
  func.func @_fused_proj_kernel(%arg0: i32, %arg1: memref<16x32xf32, #tpu.memory_space<vmem>>, %arg2: memref<32x32xbf16, #tpu.memory_space<vmem>>, %arg3: memref<32x32xbf16, #tpu.memory_space<vmem>>, %arg4: memref<32x32xbf16, #tpu.memory_space<vmem>>, %arg5: memref<1x32xf32, #tpu.memory_space<vmem>>, %arg6: memref<1x32xf32, #tpu.memory_space<vmem>>, %arg7: memref<1x32xf32, #tpu.memory_space<vmem>>, %arg8: memref<16x32xf32, #tpu.memory_space<vmem>>, %arg9: memref<16x32xf32, #tpu.memory_space<vmem>>, %arg10: memref<16x32xf32, #tpu.memory_space<vmem>>) attributes {dimension_semantics = [#tpu.dimension_semantics<parallel>], iteration_bounds = array<i64: 1>, scalar_prefetch = 0 : i64, scratch_operands = 0 : i64, tpu.core_type = #tpu.core_type<tc>, window_params = [{transform_indices = @transform_0, window_bounds = array<i64: 16, 32>}, {pipeline_mode = #tpu.pipeline_mode<synchronous>, transform_indices = @transform_1, window_bounds = array<i64: 32, 32>}, {pipeline_mode = #tpu.pipeline_mode<synchronous>, transform_indices = @transform_2, window_bounds = array<i64: 32, 32>}, {pipeline_mode = #tpu.pipeline_mode<synchronous>, transform_indices = @transform_3, window_bounds = array<i64: 32, 32>}, {pipeline_mode = #tpu.pipeline_mode<synchronous>, transform_indices = @transform_4, window_bounds = array<i64: 1, 32>}, {pipeline_mode = #tpu.pipeline_mode<synchronous>, transform_indices = @transform_5, window_bounds = array<i64: 1, 32>}, {pipeline_mode = #tpu.pipeline_mode<synchronous>, transform_indices = @transform_6, window_bounds = array<i64: 1, 32>}, {transform_indices = @transform_7, window_bounds = array<i64: 16, 32>}, {transform_indices = @transform_8, window_bounds = array<i64: 16, 32>}, {transform_indices = @transform_9, window_bounds = array<i64: 16, 32>}]} {
    %c0 = arith.constant 0 : index
    %c0_0 = arith.constant 0 : index
    %0 = vector.load %arg1[%c0, %c0_0] : memref<16x32xf32, #tpu.memory_space<vmem>>, vector<16x32xf32>
    %1 = arith.truncf %0 : vector<16x32xf32> to vector<16x32xbf16>
    %c0_1 = arith.constant 0 : index
    %c0_2 = arith.constant 0 : index
    %2 = vector.load %arg2[%c0_1, %c0_2] : memref<32x32xbf16, #tpu.memory_space<vmem>>, vector<32x32xbf16>
    %cst = arith.constant dense<0.000000e+00> : vector<16x32xf32>
    %3 = tpu.matmul %1, %2, %cst {dimension_numbers = #tpu.dot_dimension_numbers<[1], [0], [0], [1], [0, 0, 1, 1], [], []>} : vector<16x32xbf16>, vector<32x32xbf16>, vector<16x32xf32> -> vector<16x32xf32>
    %c0_3 = arith.constant 0 : index
    %c0_4 = arith.constant 0 : index
    %4 = vector.load %arg5[%c0_3, %c0_4] : memref<1x32xf32, #tpu.memory_space<vmem>>, vector<1x32xf32>
    %5 = vector.broadcast %4 : vector<1x32xf32> to vector<16x32xf32>
    %6 = arith.addf %3, %5 : vector<16x32xf32>
    %c0_5 = arith.constant 0 : index
    %c0_6 = arith.constant 0 : index
    %7 = vector.load %arg8[%c0_5, %c0_6] : memref<16x32xf32, #tpu.memory_space<vmem>>, vector<16x32xf32>
    tpu.vector_store %arg8[%c0_5, %c0_6], %6 {strides = array<i32>} : memref<16x32xf32, #tpu.memory_space<vmem>>, vector<16x32xf32>,
    %c0_7 = arith.constant 0 : index
    %c0_8 = arith.constant 0 : index
    %8 = vector.load %arg3[%c0_7, %c0_8] : memref<32x32xbf16, #tpu.memory_space<vmem>>, vector<32x32xbf16>
    %cst_9 = arith.constant dense<0.000000e+00> : vector<16x32xf32>
    %9 = tpu.matmul %1, %8, %cst_9 {dimension_numbers = #tpu.dot_dimension_numbers<[1], [0], [0], [1], [0, 0, 1, 1], [], []>} : vector<16x32xbf16>, vector<32x32xbf16>, vector<16x32xf32> -> vector<16x32xf32>
    %c0_10 = arith.constant 0 : index
    %c0_11 = arith.constant 0 : index
    %10 = vector.load %arg6[%c0_10, %c0_11] : memref<1x32xf32, #tpu.memory_space<vmem>>, vector<1x32xf32>
    %11 = vector.broadcast %10 : vector<1x32xf32> to vector<16x32xf32>
    %12 = arith.addf %9, %11 : vector<16x32xf32>
    %c0_12 = arith.constant 0 : index
    %c0_13 = arith.constant 0 : index
    %13 = vector.load %arg9[%c0_12, %c0_13] : memref<16x32xf32, #tpu.memory_space<vmem>>, vector<16x32xf32>
    tpu.vector_store %arg9[%c0_12, %c0_13], %12 {strides = array<i32>} : memref<16x32xf32, #tpu.memory_space<vmem>>, vector<16x32xf32>,
    %c0_14 = arith.constant 0 : index
    %c0_15 = arith.constant 0 : index
    %14 = vector.load %arg4[%c0_14, %c0_15] : memref<32x32xbf16, #tpu.memory_space<vmem>>, vector<32x32xbf16>
    %cst_16 = arith.constant dense<0.000000e+00> : vector<16x32xf32>
    %15 = tpu.matmul %1, %14, %cst_16 {dimension_numbers = #tpu.dot_dimension_numbers<[1], [0], [0], [1], [0, 0, 1, 1], [], []>} : vector<16x32xbf16>, vector<32x32xbf16>, vector<16x32xf32> -> vector<16x32xf32>
    %c0_17 = arith.constant 0 : index
    %c0_18 = arith.constant 0 : index
    %16 = vector.load %arg7[%c0_17, %c0_18] : memref<1x32xf32, #tpu.memory_space<vmem>>, vector<1x32xf32>
    %17 = vector.broadcast %16 : vector<1x32xf32> to vector<16x32xf32>
    %18 = arith.addf %15, %17 : vector<16x32xf32>
    %c0_19 = arith.constant 0 : index
    %c0_20 = arith.constant 0 : index
    %19 = vector.load %arg10[%c0_19, %c0_20] : memref<16x32xf32, #tpu.memory_space<vmem>>, vector<16x32xf32>
    tpu.vector_store %arg10[%c0_19, %c0_20], %18 {strides = array<i32>} : memref<16x32xf32, #tpu.memory_space<vmem>>, vector<16x32xf32>,
    return
  }
  func.func @transform_0(%arg0: i32) -> (i32, i32) {
    %c0_i32 = arith.constant 0 : i32
    %c0_i32_0 = arith.constant 0 : i32
    return %arg0, %c0_i32 : i32, i32
  }
  func.func @transform_1(%arg0: i32) -> (i32, i32) {
    %c0_i32 = arith.constant 0 : i32
    %c0_i32_0 = arith.constant 0 : i32
    %c0_i32_1 = arith.constant 0 : i32
    return %c0_i32, %c0_i32_0 : i32, i32
  }
  func.func @transform_2(%arg0: i32) -> (i32, i32) {
    %c0_i32 = arith.constant 0 : i32
    %c0_i32_0 = arith.constant 0 : i32
    %c0_i32_1 = arith.constant 0 : i32
    return %c0_i32, %c0_i32_0 : i32, i32
  }
  func.func @transform_3(%arg0: i32) -> (i32, i32) {
    %c0_i32 = arith.constant 0 : i32
    %c0_i32_0 = arith.constant 0 : i32
    %c0_i32_1 = arith.constant 0 : i32
    return %c0_i32, %c0_i32_0 : i32, i32
  }
  func.func @transform_4(%arg0: i32) -> (i32, i32) {
    %c0_i32 = arith.constant 0 : i32
    %c0_i32_0 = arith.constant 0 : i32
    %c0_i32_1 = arith.constant 0 : i32
    return %c0_i32, %c0_i32_0 : i32, i32
  }
  func.func @transform_5(%arg0: i32) -> (i32, i32) {
    %c0_i32 = arith.constant 0 : i32
    %c0_i32_0 = arith.constant 0 : i32
    %c0_i32_1 = arith.constant 0 : i32
    return %c0_i32, %c0_i32_0 : i32, i32
  }
  func.func @transform_6(%arg0: i32) -> (i32, i32) {
    %c0_i32 = arith.constant 0 : i32
    %c0_i32_0 = arith.constant 0 : i32
    %c0_i32_1 = arith.constant 0 : i32
    return %c0_i32, %c0_i32_0 : i32, i32
  }
  func.func @transform_7(%arg0: i32) -> (i32, i32) {
    %c0_i32 = arith.constant 0 : i32
    %c0_i32_0 = arith.constant 0 : i32
    return %arg0, %c0_i32 : i32, i32
  }
  func.func @transform_8(%arg0: i32) -> (i32, i32) {
    %c0_i32 = arith.constant 0 : i32
    %c0_i32_0 = arith.constant 0 : i32
    return %arg0, %c0_i32 : i32, i32
  }
  func.func @transform_9(%arg0: i32) -> (i32, i32) {
    %c0_i32 = arith.constant 0 : i32
    %c0_i32_0 = arith.constant 0 : i32
    return %arg0, %c0_i32 : i32, i32
  }
}

module attributes {stable_mosaic.version = 11 : i64} {
  func.func @_proj_add_ln_kernel(%arg0: i32, %arg1: memref<16x32xf32, #tpu.memory_space<vmem>>, %arg2: memref<32x32xbf16, #tpu.memory_space<vmem>>, %arg3: memref<1x32xf32, #tpu.memory_space<vmem>>, %arg4: memref<16x32xf32, #tpu.memory_space<vmem>>, %arg5: memref<1x32xf32, #tpu.memory_space<vmem>>, %arg6: memref<1x32xf32, #tpu.memory_space<vmem>>, %arg7: memref<16x32xf32, #tpu.memory_space<vmem>>) attributes {dimension_semantics = [#tpu.dimension_semantics<parallel>], iteration_bounds = array<i64: 1>, scalar_prefetch = 0 : i64, scratch_operands = 0 : i64, tpu.core_type = #tpu.core_type<tc>, window_params = [{transform_indices = @transform_0, window_bounds = array<i64: 16, 32>}, {pipeline_mode = #tpu.pipeline_mode<synchronous>, transform_indices = @transform_1, window_bounds = array<i64: 32, 32>}, {pipeline_mode = #tpu.pipeline_mode<synchronous>, transform_indices = @transform_2, window_bounds = array<i64: 1, 32>}, {transform_indices = @transform_3, window_bounds = array<i64: 16, 32>}, {pipeline_mode = #tpu.pipeline_mode<synchronous>, transform_indices = @transform_4, window_bounds = array<i64: 1, 32>}, {pipeline_mode = #tpu.pipeline_mode<synchronous>, transform_indices = @transform_5, window_bounds = array<i64: 1, 32>}, {transform_indices = @transform_6, window_bounds = array<i64: 16, 32>}]} {
    %c0 = arith.constant 0 : index
    %c0_0 = arith.constant 0 : index
    %0 = vector.load %arg1[%c0, %c0_0] : memref<16x32xf32, #tpu.memory_space<vmem>>, vector<16x32xf32>
    %1 = arith.truncf %0 : vector<16x32xf32> to vector<16x32xbf16>
    %c0_1 = arith.constant 0 : index
    %c0_2 = arith.constant 0 : index
    %2 = vector.load %arg2[%c0_1, %c0_2] : memref<32x32xbf16, #tpu.memory_space<vmem>>, vector<32x32xbf16>
    %cst = arith.constant dense<0.000000e+00> : vector<16x32xf32>
    %3 = tpu.matmul %1, %2, %cst {dimension_numbers = #tpu.dot_dimension_numbers<[1], [0], [0], [1], [0, 0, 1, 1], [], []>} : vector<16x32xbf16>, vector<32x32xbf16>, vector<16x32xf32> -> vector<16x32xf32>
    %c0_3 = arith.constant 0 : index
    %c0_4 = arith.constant 0 : index
    %4 = vector.load %arg3[%c0_3, %c0_4] : memref<1x32xf32, #tpu.memory_space<vmem>>, vector<1x32xf32>
    %5 = vector.broadcast %4 : vector<1x32xf32> to vector<16x32xf32>
    %6 = arith.addf %3, %5 : vector<16x32xf32>
    %c0_5 = arith.constant 0 : index
    %c0_6 = arith.constant 0 : index
    %7 = vector.load %arg4[%c0_5, %c0_6] : memref<16x32xf32, #tpu.memory_space<vmem>>, vector<16x32xf32>
    %8 = arith.addf %6, %7 : vector<16x32xf32>
    %cst_7 = arith.constant dense<0.000000e+00> : vector<16xf32>
    %9 = vector.multi_reduction <add>, %8, %cst_7 [1] : vector<16x32xf32> to vector<16xf32>
    %10 = vector.shape_cast %9 : vector<16xf32> to vector<16x1xf32>
    %cst_8 = arith.constant 3.200000e+01 : f32
    %11 = vector.broadcast %cst_8 : f32 to vector<16x1xf32>
    %12 = arith.divf %10, %11 : vector<16x1xf32>
    %13 = vector.broadcast %12 : vector<16x1xf32> to vector<16x32xf32>
    %14 = arith.subf %8, %13 : vector<16x32xf32>
    %15 = arith.mulf %14, %14 : vector<16x32xf32>
    %cst_9 = arith.constant dense<0.000000e+00> : vector<16xf32>
    %16 = vector.multi_reduction <add>, %15, %cst_9 [1] : vector<16x32xf32> to vector<16xf32>
    %17 = vector.shape_cast %16 : vector<16xf32> to vector<16x1xf32>
    %cst_10 = arith.constant 3.200000e+01 : f32
    %18 = vector.broadcast %cst_10 : f32 to vector<16x1xf32>
    %19 = arith.divf %17, %18 : vector<16x1xf32>
    %20 = vector.broadcast %12 : vector<16x1xf32> to vector<16x32xf32>
    %21 = arith.subf %8, %20 : vector<16x32xf32>
    %cst_11 = arith.constant 9.99999996E-13 : f32
    %22 = vector.broadcast %cst_11 : f32 to vector<16x1xf32>
    %23 = arith.addf %19, %22 : vector<16x1xf32>
    %24 = math.rsqrt %23 : vector<16x1xf32>
    %25 = vector.broadcast %24 : vector<16x1xf32> to vector<16x32xf32>
    %26 = arith.mulf %21, %25 : vector<16x32xf32>
    %c0_12 = arith.constant 0 : index
    %c0_13 = arith.constant 0 : index
    %27 = vector.load %arg5[%c0_12, %c0_13] : memref<1x32xf32, #tpu.memory_space<vmem>>, vector<1x32xf32>
    %28 = vector.broadcast %27 : vector<1x32xf32> to vector<16x32xf32>
    %29 = arith.mulf %28, %26 : vector<16x32xf32>
    %c0_14 = arith.constant 0 : index
    %c0_15 = arith.constant 0 : index
    %30 = vector.load %arg6[%c0_14, %c0_15] : memref<1x32xf32, #tpu.memory_space<vmem>>, vector<1x32xf32>
    %31 = vector.broadcast %30 : vector<1x32xf32> to vector<16x32xf32>
    %32 = arith.addf %29, %31 : vector<16x32xf32>
    %c0_16 = arith.constant 0 : index
    %c0_17 = arith.constant 0 : index
    %33 = vector.load %arg7[%c0_16, %c0_17] : memref<16x32xf32, #tpu.memory_space<vmem>>, vector<16x32xf32>
    tpu.vector_store %arg7[%c0_16, %c0_17], %32 {strides = array<i32>} : memref<16x32xf32, #tpu.memory_space<vmem>>, vector<16x32xf32>,
    return
  }
  func.func @transform_0(%arg0: i32) -> (i32, i32) {
    %c0_i32 = arith.constant 0 : i32
    %c0_i32_0 = arith.constant 0 : i32
    return %arg0, %c0_i32 : i32, i32
  }
  func.func @transform_1(%arg0: i32) -> (i32, i32) {
    %c0_i32 = arith.constant 0 : i32
    %c0_i32_0 = arith.constant 0 : i32
    %c0_i32_1 = arith.constant 0 : i32
    return %c0_i32, %c0_i32_0 : i32, i32
  }
  func.func @transform_2(%arg0: i32) -> (i32, i32) {
    %c0_i32 = arith.constant 0 : i32
    %c0_i32_0 = arith.constant 0 : i32
    %c0_i32_1 = arith.constant 0 : i32
    return %c0_i32, %c0_i32_0 : i32, i32
  }
  func.func @transform_3(%arg0: i32) -> (i32, i32) {
    %c0_i32 = arith.constant 0 : i32
    %c0_i32_0 = arith.constant 0 : i32
    return %arg0, %c0_i32 : i32, i32
  }
  func.func @transform_4(%arg0: i32) -> (i32, i32) {
    %c0_i32 = arith.constant 0 : i32
    %c0_i32_0 = arith.constant 0 : i32
    %c0_i32_1 = arith.constant 0 : i32
    return %c0_i32, %c0_i32_0 : i32, i32
  }
  func.func @transform_5(%arg0: i32) -> (i32, i32) {
    %c0_i32 = arith.constant 0 : i32
    %c0_i32_0 = arith.constant 0 : i32
    %c0_i32_1 = arith.constant 0 : i32
    return %c0_i32, %c0_i32_0 : i32, i32
  }
  func.func @transform_6(%arg0: i32) -> (i32, i32) {
    %c0_i32 = arith.constant 0 : i32
    %c0_i32_0 = arith.constant 0 : i32
    return %arg0, %c0_i32 : i32, i32
  }
}

module attributes {stable_mosaic.version = 11 : i64} {
  func.func @_mha_kernel(%arg0: i32, %arg1: memref<1x8x32xf32, #tpu.memory_space<vmem>>, %arg2: memref<1x8x32xf32, #tpu.memory_space<vmem>>, %arg3: memref<1x8x32xf32, #tpu.memory_space<vmem>>, %arg4: memref<1x8x8xi8, #tpu.memory_space<vmem>>, %arg5: memref<1x8x32xf32, #tpu.memory_space<vmem>>) attributes {dimension_semantics = [#tpu.dimension_semantics<parallel>], iteration_bounds = array<i64: 2>, scalar_prefetch = 0 : i64, scratch_operands = 0 : i64, tpu.core_type = #tpu.core_type<tc>, window_params = [{transform_indices = @transform_0, window_bounds = array<i64: 1, 8, 32>}, {transform_indices = @transform_1, window_bounds = array<i64: 1, 8, 32>}, {transform_indices = @transform_2, window_bounds = array<i64: 1, 8, 32>}, {transform_indices = @transform_3, window_bounds = array<i64: 1, 8, 8>}, {transform_indices = @transform_4, window_bounds = array<i64: 1, 8, 32>}]} {
    %c0 = arith.constant 0 : index
    %c0_0 = arith.constant 0 : index
    %c0_1 = arith.constant 0 : index
    %0 = vector.load %arg1[%c0, %c0_0, %c0_1] : memref<1x8x32xf32, #tpu.memory_space<vmem>>, vector<1x8x32xf32>
    %1 = vector.shape_cast %0 : vector<1x8x32xf32> to vector<8x32xf32>
    %2 = arith.truncf %1 : vector<8x32xf32> to vector<8x32xbf16>
    %c0_2 = arith.constant 0 : index
    %c0_3 = arith.constant 0 : index
    %c0_4 = arith.constant 0 : index
    %3 = vector.load %arg2[%c0_2, %c0_3, %c0_4] : memref<1x8x32xf32, #tpu.memory_space<vmem>>, vector<1x8x32xf32>
    %4 = vector.shape_cast %3 : vector<1x8x32xf32> to vector<8x32xf32>
    %5 = arith.truncf %4 : vector<8x32xf32> to vector<8x32xbf16>
    %c0_5 = arith.constant 0 : index
    %c0_6 = arith.constant 0 : index
    %c0_7 = arith.constant 0 : index
    %6 = vector.load %arg3[%c0_5, %c0_6, %c0_7] : memref<1x8x32xf32, #tpu.memory_space<vmem>>, vector<1x8x32xf32>
    %7 = vector.shape_cast %6 : vector<1x8x32xf32> to vector<8x32xf32>
    %8 = arith.truncf %7 : vector<8x32xf32> to vector<8x32xbf16>
    %c0_8 = arith.constant 0 : index
    %c0_9 = arith.constant 0 : index
    %c0_10 = arith.constant 0 : index
    %9 = vector.load %arg4[%c0_8, %c0_9, %c0_10] : memref<1x8x8xi8, #tpu.memory_space<vmem>>, vector<1x8x8xi8>
    %10 = vector.shape_cast %9 : vector<1x8x8xi8> to vector<8x8xi8>
    %11 = arith.extsi %10 : vector<8x8xi8> to vector<8x8xi32>
    %c0_i32 = arith.constant 0 : i32
    %12 = vector.broadcast %c0_i32 : i32 to vector<8x8xi32>
    %13 = arith.cmpi eq, %11, %12 : vector<8x8xi32>
    %14 = vector.extract_strided_slice %2 {offsets = [0, 0], sizes = [8, 8], strides = [1, 1]} : vector<8x32xbf16> to vector<8x8xbf16>
    %15 = vector.extract_strided_slice %5 {offsets = [0, 0], sizes = [8, 8], strides = [1, 1]} : vector<8x32xbf16> to vector<8x8xbf16>
    %16 = vector.extract_strided_slice %8 {offsets = [0, 0], sizes = [8, 8], strides = [1, 1]} : vector<8x32xbf16> to vector<8x8xbf16>
    %cst = arith.constant dense<0.000000e+00> : vector<8x8xf32>
    %17 = tpu.matmul %14, %15, %cst {dimension_numbers = #tpu.dot_dimension_numbers<[1], [1], [0], [0], [0, 0, 1, 0], [], []>} : vector<8x8xbf16>, vector<8x8xbf16>, vector<8x8xf32> -> vector<8x8xf32>
    %cst_11 = arith.constant 0.353553385 : f32
    %18 = vector.broadcast %cst_11 : f32 to vector<8x8xf32>
    %19 = arith.mulf %17, %18 : vector<8x8xf32>
    %cst_12 = arith.constant -1.000000e+04 : f32
    %20 = vector.broadcast %cst_12 : f32 to vector<8x8xf32>
    %21 = arith.select %13, %20, %19 : vector<8x8xi1>, vector<8x8xf32>
    %cst_13 = arith.constant dense<0xFF800000> : vector<8xf32>
    %22 = vector.multi_reduction <maximumf>, %21, %cst_13 [1] : vector<8x8xf32> to vector<8xf32>
    %23 = vector.shape_cast %22 : vector<8xf32> to vector<8x1xf32>
    %24 = vector.broadcast %23 : vector<8x1xf32> to vector<8x8xf32>
    %25 = arith.subf %21, %24 : vector<8x8xf32>
    %26 = math.exp %25 : vector<8x8xf32>
    %cst_14 = arith.constant dense<0.000000e+00> : vector<8xf32>
    %27 = vector.multi_reduction <add>, %26, %cst_14 [1] : vector<8x8xf32> to vector<8xf32>
    %28 = vector.shape_cast %27 : vector<8xf32> to vector<8x1xf32>
    %29 = tpu.reciprocal %28 {approx = true} : vector<8x1xf32> -> vector<8x1xf32>
    %30 = vector.broadcast %29 : vector<8x1xf32> to vector<8x8xf32>
    %31 = arith.mulf %26, %30 : vector<8x8xf32>
    %32 = arith.truncf %31 : vector<8x8xf32> to vector<8x8xbf16>
    %cst_15 = arith.constant dense<0.000000e+00> : vector<8x8xf32>
    %33 = tpu.matmul %32, %16, %cst_15 {dimension_numbers = #tpu.dot_dimension_numbers<[1], [0], [0], [1], [0, 0, 1, 1], [], []>} : vector<8x8xbf16>, vector<8x8xbf16>, vector<8x8xf32> -> vector<8x8xf32>
    %34 = vector.extract_strided_slice %2 {offsets = [0, 8], sizes = [8, 8], strides = [1, 1]} : vector<8x32xbf16> to vector<8x8xbf16>
    %35 = vector.extract_strided_slice %5 {offsets = [0, 8], sizes = [8, 8], strides = [1, 1]} : vector<8x32xbf16> to vector<8x8xbf16>
    %36 = vector.extract_strided_slice %8 {offsets = [0, 8], sizes = [8, 8], strides = [1, 1]} : vector<8x32xbf16> to vector<8x8xbf16>
    %cst_16 = arith.constant dense<0.000000e+00> : vector<8x8xf32>
    %37 = tpu.matmul %34, %35, %cst_16 {dimension_numbers = #tpu.dot_dimension_numbers<[1], [1], [0], [0], [0, 0, 1, 0], [], []>} : vector<8x8xbf16>, vector<8x8xbf16>, vector<8x8xf32> -> vector<8x8xf32>
    %cst_17 = arith.constant 0.353553385 : f32
    %38 = vector.broadcast %cst_17 : f32 to vector<8x8xf32>
    %39 = arith.mulf %37, %38 : vector<8x8xf32>
    %cst_18 = arith.constant -1.000000e+04 : f32
    %40 = vector.broadcast %cst_18 : f32 to vector<8x8xf32>
    %41 = arith.select %13, %40, %39 : vector<8x8xi1>, vector<8x8xf32>
    %cst_19 = arith.constant dense<0xFF800000> : vector<8xf32>
    %42 = vector.multi_reduction <maximumf>, %41, %cst_19 [1] : vector<8x8xf32> to vector<8xf32>
    %43 = vector.shape_cast %42 : vector<8xf32> to vector<8x1xf32>
    %44 = vector.broadcast %43 : vector<8x1xf32> to vector<8x8xf32>
    %45 = arith.subf %41, %44 : vector<8x8xf32>
    %46 = math.exp %45 : vector<8x8xf32>
    %cst_20 = arith.constant dense<0.000000e+00> : vector<8xf32>
    %47 = vector.multi_reduction <add>, %46, %cst_20 [1] : vector<8x8xf32> to vector<8xf32>
    %48 = vector.shape_cast %47 : vector<8xf32> to vector<8x1xf32>
    %49 = tpu.reciprocal %48 {approx = true} : vector<8x1xf32> -> vector<8x1xf32>
    %50 = vector.broadcast %49 : vector<8x1xf32> to vector<8x8xf32>
    %51 = arith.mulf %46, %50 : vector<8x8xf32>
    %52 = arith.truncf %51 : vector<8x8xf32> to vector<8x8xbf16>
    %cst_21 = arith.constant dense<0.000000e+00> : vector<8x8xf32>
    %53 = tpu.matmul %52, %36, %cst_21 {dimension_numbers = #tpu.dot_dimension_numbers<[1], [0], [0], [1], [0, 0, 1, 1], [], []>} : vector<8x8xbf16>, vector<8x8xbf16>, vector<8x8xf32> -> vector<8x8xf32>
    %54 = vector.extract_strided_slice %2 {offsets = [0, 16], sizes = [8, 8], strides = [1, 1]} : vector<8x32xbf16> to vector<8x8xbf16>
    %55 = vector.extract_strided_slice %5 {offsets = [0, 16], sizes = [8, 8], strides = [1, 1]} : vector<8x32xbf16> to vector<8x8xbf16>
    %56 = vector.extract_strided_slice %8 {offsets = [0, 16], sizes = [8, 8], strides = [1, 1]} : vector<8x32xbf16> to vector<8x8xbf16>
    %cst_22 = arith.constant dense<0.000000e+00> : vector<8x8xf32>
    %57 = tpu.matmul %54, %55, %cst_22 {dimension_numbers = #tpu.dot_dimension_numbers<[1], [1], [0], [0], [0, 0, 1, 0], [], []>} : vector<8x8xbf16>, vector<8x8xbf16>, vector<8x8xf32> -> vector<8x8xf32>
    %cst_23 = arith.constant 0.353553385 : f32
    %58 = vector.broadcast %cst_23 : f32 to vector<8x8xf32>
    %59 = arith.mulf %57, %58 : vector<8x8xf32>
    %cst_24 = arith.constant -1.000000e+04 : f32
    %60 = vector.broadcast %cst_24 : f32 to vector<8x8xf32>
    %61 = arith.select %13, %60, %59 : vector<8x8xi1>, vector<8x8xf32>
    %cst_25 = arith.constant dense<0xFF800000> : vector<8xf32>
    %62 = vector.multi_reduction <maximumf>, %61, %cst_25 [1] : vector<8x8xf32> to vector<8xf32>
    %63 = vector.shape_cast %62 : vector<8xf32> to vector<8x1xf32>
    %64 = vector.broadcast %63 : vector<8x1xf32> to vector<8x8xf32>
    %65 = arith.subf %61, %64 : vector<8x8xf32>
    %66 = math.exp %65 : vector<8x8xf32>
    %cst_26 = arith.constant dense<0.000000e+00> : vector<8xf32>
    %67 = vector.multi_reduction <add>, %66, %cst_26 [1] : vector<8x8xf32> to vector<8xf32>
    %68 = vector.shape_cast %67 : vector<8xf32> to vector<8x1xf32>
    %69 = tpu.reciprocal %68 {approx = true} : vector<8x1xf32> -> vector<8x1xf32>
    %70 = vector.broadcast %69 : vector<8x1xf32> to vector<8x8xf32>
    %71 = arith.mulf %66, %70 : vector<8x8xf32>
    %72 = arith.truncf %71 : vector<8x8xf32> to vector<8x8xbf16>
    %cst_27 = arith.constant dense<0.000000e+00> : vector<8x8xf32>
    %73 = tpu.matmul %72, %56, %cst_27 {dimension_numbers = #tpu.dot_dimension_numbers<[1], [0], [0], [1], [0, 0, 1, 1], [], []>} : vector<8x8xbf16>, vector<8x8xbf16>, vector<8x8xf32> -> vector<8x8xf32>
    %74 = vector.extract_strided_slice %2 {offsets = [0, 24], sizes = [8, 8], strides = [1, 1]} : vector<8x32xbf16> to vector<8x8xbf16>
    %75 = vector.extract_strided_slice %5 {offsets = [0, 24], sizes = [8, 8], strides = [1, 1]} : vector<8x32xbf16> to vector<8x8xbf16>
    %76 = vector.extract_strided_slice %8 {offsets = [0, 24], sizes = [8, 8], strides = [1, 1]} : vector<8x32xbf16> to vector<8x8xbf16>
    %cst_28 = arith.constant dense<0.000000e+00> : vector<8x8xf32>
    %77 = tpu.matmul %74, %75, %cst_28 {dimension_numbers = #tpu.dot_dimension_numbers<[1], [1], [0], [0], [0, 0, 1, 0], [], []>} : vector<8x8xbf16>, vector<8x8xbf16>, vector<8x8xf32> -> vector<8x8xf32>
    %cst_29 = arith.constant 0.353553385 : f32
    %78 = vector.broadcast %cst_29 : f32 to vector<8x8xf32>
    %79 = arith.mulf %77, %78 : vector<8x8xf32>
    %cst_30 = arith.constant -1.000000e+04 : f32
    %80 = vector.broadcast %cst_30 : f32 to vector<8x8xf32>
    %81 = arith.select %13, %80, %79 : vector<8x8xi1>, vector<8x8xf32>
    %cst_31 = arith.constant dense<0xFF800000> : vector<8xf32>
    %82 = vector.multi_reduction <maximumf>, %81, %cst_31 [1] : vector<8x8xf32> to vector<8xf32>
    %83 = vector.shape_cast %82 : vector<8xf32> to vector<8x1xf32>
    %84 = vector.broadcast %83 : vector<8x1xf32> to vector<8x8xf32>
    %85 = arith.subf %81, %84 : vector<8x8xf32>
    %86 = math.exp %85 : vector<8x8xf32>
    %cst_32 = arith.constant dense<0.000000e+00> : vector<8xf32>
    %87 = vector.multi_reduction <add>, %86, %cst_32 [1] : vector<8x8xf32> to vector<8xf32>
    %88 = vector.shape_cast %87 : vector<8xf32> to vector<8x1xf32>
    %89 = tpu.reciprocal %88 {approx = true} : vector<8x1xf32> -> vector<8x1xf32>
    %90 = vector.broadcast %89 : vector<8x1xf32> to vector<8x8xf32>
    %91 = arith.mulf %86, %90 : vector<8x8xf32>
    %92 = arith.truncf %91 : vector<8x8xf32> to vector<8x8xbf16>
    %cst_33 = arith.constant dense<0.000000e+00> : vector<8x8xf32>
    %93 = tpu.matmul %92, %76, %cst_33 {dimension_numbers = #tpu.dot_dimension_numbers<[1], [0], [0], [1], [0, 0, 1, 1], [], []>} : vector<8x8xbf16>, vector<8x8xbf16>, vector<8x8xf32> -> vector<8x8xf32>
    %94 = tpu.concatenate %33, %53, %73, %93 in 1 : vector<8x8xf32>, vector<8x8xf32>, vector<8x8xf32>, vector<8x8xf32> -> vector<8x32xf32>
    %c0_34 = arith.constant 0 : index
    %c0_35 = arith.constant 0 : index
    %c0_36 = arith.constant 0 : index
    %95 = vector.load %arg5[%c0_34, %c0_35, %c0_36] : memref<1x8x32xf32, #tpu.memory_space<vmem>>, vector<1x8x32xf32>
    %96 = vector.shape_cast %95 : vector<1x8x32xf32> to vector<8x32xf32>
    %97 = vector.shape_cast %94 : vector<8x32xf32> to vector<1x8x32xf32>
    tpu.vector_store %arg5[%c0_34, %c0_35, %c0_36], %97 {strides = array<i32>} : memref<1x8x32xf32, #tpu.memory_space<vmem>>, vector<1x8x32xf32>,
    return
  }
  func.func @transform_0(%arg0: i32) -> (i32, i32, i32) {
    %c0_i32 = arith.constant 0 : i32
    %c0_i32_0 = arith.constant 0 : i32
    %c0_i32_1 = arith.constant 0 : i32
    return %arg0, %c0_i32, %c0_i32_0 : i32, i32, i32
  }
  func.func @transform_1(%arg0: i32) -> (i32, i32, i32) {
    %c0_i32 = arith.constant 0 : i32
    %c0_i32_0 = arith.constant 0 : i32
    %c0_i32_1 = arith.constant 0 : i32
    return %arg0, %c0_i32, %c0_i32_0 : i32, i32, i32
  }
  func.func @transform_2(%arg0: i32) -> (i32, i32, i32) {
    %c0_i32 = arith.constant 0 : i32
    %c0_i32_0 = arith.constant 0 : i32
    %c0_i32_1 = arith.constant 0 : i32
    return %arg0, %c0_i32, %c0_i32_0 : i32, i32, i32
  }
  func.func @transform_3(%arg0: i32) -> (i32, i32, i32) {
    %c0_i32 = arith.constant 0 : i32
    %c0_i32_0 = arith.constant 0 : i32
    %c0_i32_1 = arith.constant 0 : i32
    return %arg0, %c0_i32, %c0_i32_0 : i32, i32, i32
  }
  func.func @transform_4(%arg0: i32) -> (i32, i32, i32) {
    %c0_i32 = arith.constant 0 : i32
    %c0_i32_0 = arith.constant 0 : i32
    %c0_i32_1 = arith.constant 0 : i32
    return %arg0, %c0_i32, %c0_i32_0 : i32, i32, i32
  }
}

module attributes {stable_mosaic.version = 11 : i64} {
  func.func @_fused_proj_kernel(%arg0: i32, %arg1: memref<16x32xf32, #tpu.memory_space<vmem>>, %arg2: memref<32x32xbf16, #tpu.memory_space<vmem>>, %arg3: memref<1x32xf32, #tpu.memory_space<vmem>>, %arg4: memref<16x32xf32, #tpu.memory_space<vmem>>) attributes {dimension_semantics = [#tpu.dimension_semantics<parallel>], iteration_bounds = array<i64: 1>, scalar_prefetch = 0 : i64, scratch_operands = 0 : i64, tpu.core_type = #tpu.core_type<tc>, window_params = [{transform_indices = @transform_0, window_bounds = array<i64: 16, 32>}, {pipeline_mode = #tpu.pipeline_mode<synchronous>, transform_indices = @transform_1, window_bounds = array<i64: 32, 32>}, {pipeline_mode = #tpu.pipeline_mode<synchronous>, transform_indices = @transform_2, window_bounds = array<i64: 1, 32>}, {transform_indices = @transform_3, window_bounds = array<i64: 16, 32>}]} {
    %c0 = arith.constant 0 : index
    %c0_0 = arith.constant 0 : index
    %0 = vector.load %arg1[%c0, %c0_0] : memref<16x32xf32, #tpu.memory_space<vmem>>, vector<16x32xf32>
    %1 = arith.truncf %0 : vector<16x32xf32> to vector<16x32xbf16>
    %c0_1 = arith.constant 0 : index
    %c0_2 = arith.constant 0 : index
    %2 = vector.load %arg2[%c0_1, %c0_2] : memref<32x32xbf16, #tpu.memory_space<vmem>>, vector<32x32xbf16>
    %cst = arith.constant dense<0.000000e+00> : vector<16x32xf32>
    %3 = tpu.matmul %1, %2, %cst {dimension_numbers = #tpu.dot_dimension_numbers<[1], [0], [0], [1], [0, 0, 1, 1], [], []>} : vector<16x32xbf16>, vector<32x32xbf16>, vector<16x32xf32> -> vector<16x32xf32>
    %c0_3 = arith.constant 0 : index
    %c0_4 = arith.constant 0 : index
    %4 = vector.load %arg3[%c0_3, %c0_4] : memref<1x32xf32, #tpu.memory_space<vmem>>, vector<1x32xf32>
    %5 = vector.broadcast %4 : vector<1x32xf32> to vector<16x32xf32>
    %6 = arith.addf %3, %5 : vector<16x32xf32>
    %c0_5 = arith.constant 0 : index
    %c0_6 = arith.constant 0 : index
    %7 = vector.load %arg4[%c0_5, %c0_6] : memref<16x32xf32, #tpu.memory_space<vmem>>, vector<16x32xf32>
    tpu.vector_store %arg4[%c0_5, %c0_6], %6 {strides = array<i32>} : memref<16x32xf32, #tpu.memory_space<vmem>>, vector<16x32xf32>,
    return
  }
  func.func @transform_0(%arg0: i32) -> (i32, i32) {
    %c0_i32 = arith.constant 0 : i32
    %c0_i32_0 = arith.constant 0 : i32
    return %arg0, %c0_i32 : i32, i32
  }
  func.func @transform_1(%arg0: i32) -> (i32, i32) {
    %c0_i32 = arith.constant 0 : i32
    %c0_i32_0 = arith.constant 0 : i32
    %c0_i32_1 = arith.constant 0 : i32
    return %c0_i32, %c0_i32_0 : i32, i32
  }
  func.func @transform_2(%arg0: i32) -> (i32, i32) {
    %c0_i32 = arith.constant 0 : i32
    %c0_i32_0 = arith.constant 0 : i32
    %c0_i32_1 = arith.constant 0 : i32
    return %c0_i32, %c0_i32_0 : i32, i32
  }
  func.func @transform_3(%arg0: i32) -> (i32, i32) {
    %c0_i32 = arith.constant 0 : i32
    %c0_i32_0 = arith.constant 0 : i32
    return %arg0, %c0_i32 : i32, i32
  }
}

module attributes {stable_mosaic.version = 11 : i64} {
  func.func @_linear_kernel(%arg0: i32, %arg1: i32, %arg2: i32, %arg3: memref<16x32xf32, #tpu.memory_space<vmem>>, %arg4: memref<32x50xbf16, #tpu.memory_space<vmem>>, %arg5: memref<1x50xf32, #tpu.memory_space<vmem>>, %arg6: memref<16x50xf32, #tpu.memory_space<vmem>>, %arg7: memref<16x50xf32, #tpu.memory_space<vmem>>) attributes {dimension_semantics = [#tpu.dimension_semantics<parallel>, #tpu.dimension_semantics<parallel>, #tpu.dimension_semantics<arbitrary>], iteration_bounds = array<i64: 1, 1, 1>, scalar_prefetch = 0 : i64, scratch_operands = 1 : i64, tpu.core_type = #tpu.core_type<tc>, window_params = [{transform_indices = @transform_0, window_bounds = array<i64: 16, 32>}, {transform_indices = @transform_1, window_bounds = array<i64: 32, 50>}, {transform_indices = @transform_2, window_bounds = array<i64: 1, 50>}, {transform_indices = @transform_3, window_bounds = array<i64: 16, 50>}]} {
    %c0_i32 = arith.constant 0 : i32
    %0 = arith.cmpi eq, %arg2, %c0_i32 : i32
    %1 = arith.extui %0 : i1 to i32
    %c0_i32_0 = arith.constant 0 : i32
    %2 = arith.cmpi ne, %1, %c0_i32_0 : i32
    scf.if %2 {
      %cst_10 = arith.constant 0.000000e+00 : f32
      %13 = vector.broadcast %cst_10 : f32 to vector<16x50xf32>
      %c0_11 = arith.constant 0 : index
      %c0_12 = arith.constant 0 : index
      %14 = vector.load %arg7[%c0_11, %c0_12] : memref<16x50xf32, #tpu.memory_space<vmem>>, vector<16x50xf32>
      tpu.vector_store %arg7[%c0_11, %c0_12], %13 {strides = array<i32>} : memref<16x50xf32, #tpu.memory_space<vmem>>, vector<16x50xf32>,
    } else {
    }
    %c0 = arith.constant 0 : index
    %c0_1 = arith.constant 0 : index
    %3 = vector.load %arg7[%c0, %c0_1] : memref<16x50xf32, #tpu.memory_space<vmem>>, vector<16x50xf32>
    %c0_2 = arith.constant 0 : index
    %c0_3 = arith.constant 0 : index
    %4 = vector.load %arg3[%c0_2, %c0_3] : memref<16x32xf32, #tpu.memory_space<vmem>>, vector<16x32xf32>
    %5 = arith.truncf %4 : vector<16x32xf32> to vector<16x32xbf16>
    %c0_4 = arith.constant 0 : index
    %c0_5 = arith.constant 0 : index
    %6 = vector.load %arg4[%c0_4, %c0_5] : memref<32x50xbf16, #tpu.memory_space<vmem>>, vector<32x50xbf16>
    %cst = arith.constant dense<0.000000e+00> : vector<16x50xf32>
    %7 = tpu.matmul %5, %6, %cst {dimension_numbers = #tpu.dot_dimension_numbers<[1], [0], [0], [1], [0, 0, 1, 1], [], []>} : vector<16x32xbf16>, vector<32x50xbf16>, vector<16x50xf32> -> vector<16x50xf32>
    %8 = arith.addf %3, %7 : vector<16x50xf32>
    %c0_6 = arith.constant 0 : index
    %c0_7 = arith.constant 0 : index
    %9 = vector.load %arg7[%c0_6, %c0_7] : memref<16x50xf32, #tpu.memory_space<vmem>>, vector<16x50xf32>
    tpu.vector_store %arg7[%c0_6, %c0_7], %8 {strides = array<i32>} : memref<16x50xf32, #tpu.memory_space<vmem>>, vector<16x50xf32>,
    %c0_i32_8 = arith.constant 0 : i32
    %10 = arith.cmpi eq, %arg2, %c0_i32_8 : i32
    %11 = arith.extui %10 : i1 to i32
    %c0_i32_9 = arith.constant 0 : i32
    %12 = arith.cmpi ne, %11, %c0_i32_9 : i32
    scf.if %12 {
      %c0_10 = arith.constant 0 : index
      %c0_11 = arith.constant 0 : index
      %13 = vector.load %arg7[%c0_10, %c0_11] : memref<16x50xf32, #tpu.memory_space<vmem>>, vector<16x50xf32>
      %c0_12 = arith.constant 0 : index
      %c0_13 = arith.constant 0 : index
      %14 = vector.load %arg5[%c0_12, %c0_13] : memref<1x50xf32, #tpu.memory_space<vmem>>, vector<1x50xf32>
      %15 = vector.broadcast %14 : vector<1x50xf32> to vector<16x50xf32>
      %16 = arith.addf %13, %15 : vector<16x50xf32>
      %c0_14 = arith.constant 0 : index
      %c0_15 = arith.constant 0 : index
      %17 = vector.load %arg6[%c0_14, %c0_15] : memref<16x50xf32, #tpu.memory_space<vmem>>, vector<16x50xf32>
      tpu.vector_store %arg6[%c0_14, %c0_15], %16 {strides = array<i32>} : memref<16x50xf32, #tpu.memory_space<vmem>>, vector<16x50xf32>,
    } else {
    }
    return
  }
  func.func @transform_0(%arg0: i32, %arg1: i32, %arg2: i32) -> (i32, i32) {
    %c0_i32 = arith.constant 0 : i32
    return %arg0, %arg2 : i32, i32
  }
  func.func @transform_1(%arg0: i32, %arg1: i32, %arg2: i32) -> (i32, i32) {
    %c0_i32 = arith.constant 0 : i32
    return %arg2, %arg1 : i32, i32
  }
  func.func @transform_2(%arg0: i32, %arg1: i32, %arg2: i32) -> (i32, i32) {
    %c0_i32 = arith.constant 0 : i32
    %c0_i32_0 = arith.constant 0 : i32
    return %c0_i32, %arg1 : i32, i32
  }
  func.func @transform_3(%arg0: i32, %arg1: i32, %arg2: i32) -> (i32, i32) {
    %c0_i32 = arith.constant 0 : i32
    return %arg0, %arg1 : i32, i32
  }
}

module attributes {stable_mosaic.version = 11 : i64} {
  func.func @_ffn_add_ln_kernel(%arg0: i32, %arg1: memref<16x32xf32, #tpu.memory_space<vmem>>, %arg2: memref<32x64xbf16, #tpu.memory_space<vmem>>, %arg3: memref<1x64xf32, #tpu.memory_space<vmem>>, %arg4: memref<64x32xbf16, #tpu.memory_space<vmem>>, %arg5: memref<1x32xf32, #tpu.memory_space<vmem>>, %arg6: memref<1x32xf32, #tpu.memory_space<vmem>>, %arg7: memref<1x32xf32, #tpu.memory_space<vmem>>, %arg8: memref<16x32xf32, #tpu.memory_space<vmem>>) attributes {dimension_semantics = [#tpu.dimension_semantics<parallel>], iteration_bounds = array<i64: 1>, scalar_prefetch = 0 : i64, scratch_operands = 0 : i64, tpu.core_type = #tpu.core_type<tc>, window_params = [{transform_indices = @transform_0, window_bounds = array<i64: 16, 32>}, {pipeline_mode = #tpu.pipeline_mode<synchronous>, transform_indices = @transform_1, window_bounds = array<i64: 32, 64>}, {pipeline_mode = #tpu.pipeline_mode<synchronous>, transform_indices = @transform_2, window_bounds = array<i64: 1, 64>}, {pipeline_mode = #tpu.pipeline_mode<synchronous>, transform_indices = @transform_3, window_bounds = array<i64: 64, 32>}, {pipeline_mode = #tpu.pipeline_mode<synchronous>, transform_indices = @transform_4, window_bounds = array<i64: 1, 32>}, {pipeline_mode = #tpu.pipeline_mode<synchronous>, transform_indices = @transform_5, window_bounds = array<i64: 1, 32>}, {pipeline_mode = #tpu.pipeline_mode<synchronous>, transform_indices = @transform_6, window_bounds = array<i64: 1, 32>}, {transform_indices = @transform_7, window_bounds = array<i64: 16, 32>}]} {
    %c0 = arith.constant 0 : index
    %c0_0 = arith.constant 0 : index
    %0 = vector.load %arg1[%c0, %c0_0] : memref<16x32xf32, #tpu.memory_space<vmem>>, vector<16x32xf32>
    %1 = arith.truncf %0 : vector<16x32xf32> to vector<16x32xbf16>
    %c0_1 = arith.constant 0 : index
    %c0_2 = arith.constant 0 : index
    %2 = vector.load %arg2[%c0_1, %c0_2] : memref<32x64xbf16, #tpu.memory_space<vmem>>, vector<32x64xbf16>
    %cst = arith.constant dense<0.000000e+00> : vector<16x64xf32>
    %3 = tpu.matmul %1, %2, %cst {dimension_numbers = #tpu.dot_dimension_numbers<[1], [0], [0], [1], [0, 0, 1, 1], [], []>} : vector<16x32xbf16>, vector<32x64xbf16>, vector<16x64xf32> -> vector<16x64xf32>
    %c0_3 = arith.constant 0 : index
    %c0_4 = arith.constant 0 : index
    %4 = vector.load %arg3[%c0_3, %c0_4] : memref<1x64xf32, #tpu.memory_space<vmem>>, vector<1x64xf32>
    %5 = vector.broadcast %4 : vector<1x64xf32> to vector<16x64xf32>
    %6 = arith.addf %3, %5 : vector<16x64xf32>
    %cst_5 = arith.constant 0.000000e+00 : f32
    %7 = vector.broadcast %cst_5 : f32 to vector<16x64xf32>
    %8 = arith.maximumf %6, %7 : vector<16x64xf32>
    %9 = arith.truncf %8 : vector<16x64xf32> to vector<16x64xbf16>
    %c0_6 = arith.constant 0 : index
    %c0_7 = arith.constant 0 : index
    %10 = vector.load %arg4[%c0_6, %c0_7] : memref<64x32xbf16, #tpu.memory_space<vmem>>, vector<64x32xbf16>
    %cst_8 = arith.constant dense<0.000000e+00> : vector<16x32xf32>
    %11 = tpu.matmul %9, %10, %cst_8 {dimension_numbers = #tpu.dot_dimension_numbers<[1], [0], [0], [1], [0, 0, 1, 1], [], []>} : vector<16x64xbf16>, vector<64x32xbf16>, vector<16x32xf32> -> vector<16x32xf32>
    %c0_9 = arith.constant 0 : index
    %c0_10 = arith.constant 0 : index
    %12 = vector.load %arg5[%c0_9, %c0_10] : memref<1x32xf32, #tpu.memory_space<vmem>>, vector<1x32xf32>
    %13 = vector.broadcast %12 : vector<1x32xf32> to vector<16x32xf32>
    %14 = arith.addf %11, %13 : vector<16x32xf32>
    %15 = arith.addf %14, %0 : vector<16x32xf32>
    %cst_11 = arith.constant dense<0.000000e+00> : vector<16xf32>
    %16 = vector.multi_reduction <add>, %15, %cst_11 [1] : vector<16x32xf32> to vector<16xf32>
    %17 = vector.shape_cast %16 : vector<16xf32> to vector<16x1xf32>
    %cst_12 = arith.constant 3.200000e+01 : f32
    %18 = vector.broadcast %cst_12 : f32 to vector<16x1xf32>
    %19 = arith.divf %17, %18 : vector<16x1xf32>
    %20 = vector.broadcast %19 : vector<16x1xf32> to vector<16x32xf32>
    %21 = arith.subf %15, %20 : vector<16x32xf32>
    %22 = arith.mulf %21, %21 : vector<16x32xf32>
    %cst_13 = arith.constant dense<0.000000e+00> : vector<16xf32>
    %23 = vector.multi_reduction <add>, %22, %cst_13 [1] : vector<16x32xf32> to vector<16xf32>
    %24 = vector.shape_cast %23 : vector<16xf32> to vector<16x1xf32>
    %cst_14 = arith.constant 3.200000e+01 : f32
    %25 = vector.broadcast %cst_14 : f32 to vector<16x1xf32>
    %26 = arith.divf %24, %25 : vector<16x1xf32>
    %27 = vector.broadcast %19 : vector<16x1xf32> to vector<16x32xf32>
    %28 = arith.subf %15, %27 : vector<16x32xf32>
    %cst_15 = arith.constant 9.99999996E-13 : f32
    %29 = vector.broadcast %cst_15 : f32 to vector<16x1xf32>
    %30 = arith.addf %26, %29 : vector<16x1xf32>
    %31 = math.rsqrt %30 : vector<16x1xf32>
    %32 = vector.broadcast %31 : vector<16x1xf32> to vector<16x32xf32>
    %33 = arith.mulf %28, %32 : vector<16x32xf32>
    %c0_16 = arith.constant 0 : index
    %c0_17 = arith.constant 0 : index
    %34 = vector.load %arg6[%c0_16, %c0_17] : memref<1x32xf32, #tpu.memory_space<vmem>>, vector<1x32xf32>
    %35 = vector.broadcast %34 : vector<1x32xf32> to vector<16x32xf32>
    %36 = arith.mulf %35, %33 : vector<16x32xf32>
    %c0_18 = arith.constant 0 : index
    %c0_19 = arith.constant 0 : index
    %37 = vector.load %arg7[%c0_18, %c0_19] : memref<1x32xf32, #tpu.memory_space<vmem>>, vector<1x32xf32>
    %38 = vector.broadcast %37 : vector<1x32xf32> to vector<16x32xf32>
    %39 = arith.addf %36, %38 : vector<16x32xf32>
    %c0_20 = arith.constant 0 : index
    %c0_21 = arith.constant 0 : index
    %40 = vector.load %arg8[%c0_20, %c0_21] : memref<16x32xf32, #tpu.memory_space<vmem>>, vector<16x32xf32>
    tpu.vector_store %arg8[%c0_20, %c0_21], %39 {strides = array<i32>} : memref<16x32xf32, #tpu.memory_space<vmem>>, vector<16x32xf32>,
    return
  }
  func.func @transform_0(%arg0: i32) -> (i32, i32) {
    %c0_i32 = arith.constant 0 : i32
    %c0_i32_0 = arith.constant 0 : i32
    return %arg0, %c0_i32 : i32, i32
  }
  func.func @transform_1(%arg0: i32) -> (i32, i32) {
    %c0_i32 = arith.constant 0 : i32
    %c0_i32_0 = arith.constant 0 : i32
    %c0_i32_1 = arith.constant 0 : i32
    return %c0_i32, %c0_i32_0 : i32, i32
  }
  func.func @transform_2(%arg0: i32) -> (i32, i32) {
    %c0_i32 = arith.constant 0 : i32
    %c0_i32_0 = arith.constant 0 : i32
    %c0_i32_1 = arith.constant 0 : i32
    return %c0_i32, %c0_i32_0 : i32, i32
  }
  func.func @transform_3(%arg0: i32) -> (i32, i32) {
    %c0_i32 = arith.constant 0 : i32
    %c0_i32_0 = arith.constant 0 : i32
    %c0_i32_1 = arith.constant 0 : i32
    return %c0_i32, %c0_i32_0 : i32, i32
  }
  func.func @transform_4(%arg0: i32) -> (i32, i32) {
    %c0_i32 = arith.constant 0 : i32
    %c0_i32_0 = arith.constant 0 : i32
    %c0_i32_1 = arith.constant 0 : i32
    return %c0_i32, %c0_i32_0 : i32, i32
  }
  func.func @transform_5(%arg0: i32) -> (i32, i32) {
    %c0_i32 = arith.constant 0 : i32
    %c0_i32_0 = arith.constant 0 : i32
    %c0_i32_1 = arith.constant 0 : i32
    return %c0_i32, %c0_i32_0 : i32, i32
  }
  func.func @transform_6(%arg0: i32) -> (i32, i32) {
    %c0_i32 = arith.constant 0 : i32
    %c0_i32_0 = arith.constant 0 : i32
    %c0_i32_1 = arith.constant 0 : i32
    return %c0_i32, %c0_i32_0 : i32, i32
  }
  func.func @transform_7(%arg0: i32) -> (i32, i32) {
    %c0_i32 = arith.constant 0 : i32
    %c0_i32_0 = arith.constant 0 : i32
    return %arg0, %c0_i32 : i32, i32
  }
}

module attributes {stable_mosaic.version = 11 : i64} {
  func.func @_fused_proj_kernel(%arg0: i32, %arg1: memref<16x32xf32, #tpu.memory_space<vmem>>, %arg2: memref<32x32xbf16, #tpu.memory_space<vmem>>, %arg3: memref<32x32xbf16, #tpu.memory_space<vmem>>, %arg4: memref<1x32xf32, #tpu.memory_space<vmem>>, %arg5: memref<1x32xf32, #tpu.memory_space<vmem>>, %arg6: memref<16x32xf32, #tpu.memory_space<vmem>>, %arg7: memref<16x32xf32, #tpu.memory_space<vmem>>) attributes {dimension_semantics = [#tpu.dimension_semantics<parallel>], iteration_bounds = array<i64: 1>, scalar_prefetch = 0 : i64, scratch_operands = 0 : i64, tpu.core_type = #tpu.core_type<tc>, window_params = [{transform_indices = @transform_0, window_bounds = array<i64: 16, 32>}, {pipeline_mode = #tpu.pipeline_mode<synchronous>, transform_indices = @transform_1, window_bounds = array<i64: 32, 32>}, {pipeline_mode = #tpu.pipeline_mode<synchronous>, transform_indices = @transform_2, window_bounds = array<i64: 32, 32>}, {pipeline_mode = #tpu.pipeline_mode<synchronous>, transform_indices = @transform_3, window_bounds = array<i64: 1, 32>}, {pipeline_mode = #tpu.pipeline_mode<synchronous>, transform_indices = @transform_4, window_bounds = array<i64: 1, 32>}, {transform_indices = @transform_5, window_bounds = array<i64: 16, 32>}, {transform_indices = @transform_6, window_bounds = array<i64: 16, 32>}]} {
    %c0 = arith.constant 0 : index
    %c0_0 = arith.constant 0 : index
    %0 = vector.load %arg1[%c0, %c0_0] : memref<16x32xf32, #tpu.memory_space<vmem>>, vector<16x32xf32>
    %1 = arith.truncf %0 : vector<16x32xf32> to vector<16x32xbf16>
    %c0_1 = arith.constant 0 : index
    %c0_2 = arith.constant 0 : index
    %2 = vector.load %arg2[%c0_1, %c0_2] : memref<32x32xbf16, #tpu.memory_space<vmem>>, vector<32x32xbf16>
    %cst = arith.constant dense<0.000000e+00> : vector<16x32xf32>
    %3 = tpu.matmul %1, %2, %cst {dimension_numbers = #tpu.dot_dimension_numbers<[1], [0], [0], [1], [0, 0, 1, 1], [], []>} : vector<16x32xbf16>, vector<32x32xbf16>, vector<16x32xf32> -> vector<16x32xf32>
    %c0_3 = arith.constant 0 : index
    %c0_4 = arith.constant 0 : index
    %4 = vector.load %arg4[%c0_3, %c0_4] : memref<1x32xf32, #tpu.memory_space<vmem>>, vector<1x32xf32>
    %5 = vector.broadcast %4 : vector<1x32xf32> to vector<16x32xf32>
    %6 = arith.addf %3, %5 : vector<16x32xf32>
    %c0_5 = arith.constant 0 : index
    %c0_6 = arith.constant 0 : index
    %7 = vector.load %arg6[%c0_5, %c0_6] : memref<16x32xf32, #tpu.memory_space<vmem>>, vector<16x32xf32>
    tpu.vector_store %arg6[%c0_5, %c0_6], %6 {strides = array<i32>} : memref<16x32xf32, #tpu.memory_space<vmem>>, vector<16x32xf32>,
    %c0_7 = arith.constant 0 : index
    %c0_8 = arith.constant 0 : index
    %8 = vector.load %arg3[%c0_7, %c0_8] : memref<32x32xbf16, #tpu.memory_space<vmem>>, vector<32x32xbf16>
    %cst_9 = arith.constant dense<0.000000e+00> : vector<16x32xf32>
    %9 = tpu.matmul %1, %8, %cst_9 {dimension_numbers = #tpu.dot_dimension_numbers<[1], [0], [0], [1], [0, 0, 1, 1], [], []>} : vector<16x32xbf16>, vector<32x32xbf16>, vector<16x32xf32> -> vector<16x32xf32>
    %c0_10 = arith.constant 0 : index
    %c0_11 = arith.constant 0 : index
    %10 = vector.load %arg5[%c0_10, %c0_11] : memref<1x32xf32, #tpu.memory_space<vmem>>, vector<1x32xf32>
    %11 = vector.broadcast %10 : vector<1x32xf32> to vector<16x32xf32>
    %12 = arith.addf %9, %11 : vector<16x32xf32>
    %c0_12 = arith.constant 0 : index
    %c0_13 = arith.constant 0 : index
    %13 = vector.load %arg7[%c0_12, %c0_13] : memref<16x32xf32, #tpu.memory_space<vmem>>, vector<16x32xf32>
    tpu.vector_store %arg7[%c0_12, %c0_13], %12 {strides = array<i32>} : memref<16x32xf32, #tpu.memory_space<vmem>>, vector<16x32xf32>,
    return
  }
  func.func @transform_0(%arg0: i32) -> (i32, i32) {
    %c0_i32 = arith.constant 0 : i32
    %c0_i32_0 = arith.constant 0 : i32
    return %arg0, %c0_i32 : i32, i32
  }
  func.func @transform_1(%arg0: i32) -> (i32, i32) {
    %c0_i32 = arith.constant 0 : i32
    %c0_i32_0 = arith.constant 0 : i32
    %c0_i32_1 = arith.constant 0 : i32
    return %c0_i32, %c0_i32_0 : i32, i32
  }
  func.func @transform_2(%arg0: i32) -> (i32, i32) {
    %c0_i32 = arith.constant 0 : i32
    %c0_i32_0 = arith.constant 0 : i32
    %c0_i32_1 = arith.constant 0 : i32
    return %c0_i32, %c0_i32_0 : i32, i32
  }
  func.func @transform_3(%arg0: i32) -> (i32, i32) {
    %c0_i32 = arith.constant 0 : i32
    %c0_i32_0 = arith.constant 0 : i32
    %c0_i32_1 = arith.constant 0 : i32
    return %c0_i32, %c0_i32_0 : i32, i32
  }
  func.func @transform_4(%arg0: i32) -> (i32, i32) {
    %c0_i32 = arith.constant 0 : i32
    %c0_i32_0 = arith.constant 0 : i32
    %c0_i32_1 = arith.constant 0 : i32
    return %c0_i32, %c0_i32_0 : i32, i32
  }
  func.func @transform_5(%arg0: i32) -> (i32, i32) {
    %c0_i32 = arith.constant 0 : i32
    %c0_i32_0 = arith.constant 0 : i32
    return %arg0, %c0_i32 : i32, i32
  }
  func.func @transform_6(%arg0: i32) -> (i32, i32) {
    %c0_i32 = arith.constant 0 : i32
    %c0_i32_0 = arith.constant 0 : i32
    return %arg0, %c0_i32 : i32, i32
  }
}

</mosaic_0001>

<llo_original>
// kernel: transformer_forward.36
$region0: #{transformer_forward.36}
  #allocation0 [shape = 'u32[]', space=smem, size = 0x4, offset = 0x4, fixed_abs, tag = 'smem constant byte address 0x4 - core index']
  #allocation1 [shape = 'u32[144,128]{1,0:T(1,128)}', space=vmem, size = 0x12000, scoped, tag = 'internal scratch']
  %s0 = inlined_call_operand.hbm [shape: f32[16,32], index: 0, kind: input, shape index: {}]
  %s1 = inlined_call_operand.hbm [shape: bf16[32,32], index: 1, kind: input, shape index: {}]
  %s2 = inlined_call_operand.hbm [shape: f32[1,32], index: 2, kind: input, shape index: {}]
  %s3 = inlined_call_operand.hbm [shape: f32[16,32], index: 3, kind: output, shape index: {}]
  %s4 = sld [smem:[#allocation0]]
  $region34: #{transformer_forward.36} parent=0
    _
  %s6 = ssub.s32 1, %s4
  %s7 = scalar_select 0, %s6, %s4
  $region1: #{transformer_forward.36} parent=0
    #allocation2 [shape = 'u8[8192]{0}', space=vmem, size = 0x2000, scoped, tag = 'input window, operand 0, single buffered']
    #allocation3 [shape = 's32[1]{0}', space=sflag, size = 0x4, scoped, tag = 'scoped memory for transformer_forward.36']
    #allocation4 [shape = 's32[1]{0}', space=sflag, size = 0x4, scoped, tag = 'scoped memory for transformer_forward.36']
    #allocation5 [shape = 'u8[8192]{0}', space=vmem, size = 0x2000, scoped, tag = 'input window, operand 1, single buffered']
    #allocation6 [shape = 's32[1]{0}', space=sflag, size = 0x4, scoped, tag = 'scoped memory for transformer_forward.36']
    #allocation7 [shape = 'u8[512]{0}', space=vmem, size = 0x400, scoped, tag = 'input window, operand 2, single buffered']
    #allocation8 [shape = 'u8[8192]{0}', space=vmem, size = 0x2000, scoped, tag = 'output window, operand 0, single buffered']
    %8 = vsyncpa [#allocation3], 0
    %9 = vsyncpa [#allocation6], 0
    %10 = vsyncpa [#allocation4], 0
    // Predicated region
    $region2: #{transformer_forward.36} parent=1 // pred_check
      _
    $region3: #{transformer_forward.36} parent=1 // pred_check_branch
      %12 = sbr.rel (0) target = $region5
    $region4: #{transformer_forward.36} parent=1 // pred_region
      %s14 = ssub.s32 256, 256
      %15 = vsyncadd [#allocation3], %s14
      %s16 = sshll.u32 [#allocation2], 4
      %s17 = int_to_ptr.vmem [resolvable:$true] %s16
      %22 = dma.hbm_to_vmem [thread:$0]  %s0, 256, %s17, [#allocation3], 128, 128, 8
    $region5: #{transformer_forward.36} parent=1 // pred_fallthru
      _
    // Predicated region
    $region6: #{transformer_forward.36} parent=1 // pred_check
      _
    $region7: #{transformer_forward.36} parent=1 // pred_check_branch
      %24 = sbr.rel (0) target = $region9
    $region8: #{transformer_forward.36} parent=1 // pred_region
      %s26 = ssub.s32 256, 256
      %27 = vsyncadd [#allocation6], %s26
      %s28 = sshll.u32 [#allocation5], 4
      %s29 = int_to_ptr.vmem [resolvable:$true] %s28
      %34 = dma.hbm_to_vmem [thread:$0]  %s1, 256, %s29, [#allocation6], 64, 64, 4
    $region9: #{transformer_forward.36} parent=1 // pred_fallthru
      _
    // Predicated region
    $region10: #{transformer_forward.36} parent=1 // pred_check
      _
    $region11: #{transformer_forward.36} parent=1 // pred_check_branch
      %36 = sbr.rel (0) target = $region13
    $region12: #{transformer_forward.36} parent=1 // pred_region
      %s38 = ssub.s32 16, 16
      %39 = vsyncadd [#allocation6], %s38
      %s41 = sshll.u32 [#allocation7], 4
      %s42 = int_to_ptr.vmem [resolvable:$true] %s41
      %44 = dma.hbm_to_vmem [thread:$0]  %s2, 16, %s42, [#allocation6]
    $region13: #{transformer_forward.36} parent=1 // pred_fallthru
      _
    // Predicated region
    $region14: #{transformer_forward.36} parent=1 // pred_check
      _
    $region15: #{transformer_forward.36} parent=1 // pred_check_branch
      %46 = sbr.rel (0) target = $region17
    $region16: #{transformer_forward.36} parent=1 // pred_region
      %47 = dma.done [#allocation3], 256
    $region17: #{transformer_forward.36} parent=1 // pred_fallthru
      _
    // Predicated region
    $region18: #{transformer_forward.36} parent=1 // pred_check
      _
    $region19: #{transformer_forward.36} parent=1 // pred_check_branch
      %49 = sbr.rel (0) target = $region21
    $region20: #{transformer_forward.36} parent=1 // pred_region
      %50 = dma.done [#allocation6], 256
    $region21: #{transformer_forward.36} parent=1 // pred_fallthru
      _
    // Predicated region
    $region22: #{transformer_forward.36} parent=1 // pred_check
      _
    $region23: #{transformer_forward.36} parent=1 // pred_check_branch
      %52 = sbr.rel (0) target = $region25
    $region24: #{transformer_forward.36} parent=1 // pred_region
      %53 = dma.done [#allocation6], 16
    $region25: #{transformer_forward.36} parent=1 // pred_fallthru
      _
    %v55 = vld [vmem:[#allocation2] sm:$0xff]
    %v56 = vld [vmem:[#allocation2 + $0x8] sm:$0xff]
    %v57 = vpack.c.bf16 %v56, %v55
    %v58 = vld [vmem:[#allocation5] sm:$0xf]
    %v59 = vld [vmem:[#allocation5 + $0x4] sm:$0xf]
    %v60 = vld [vmem:[#allocation5 + $0x8] sm:$0xf]
    %v61 = vld [vmem:[#allocation5 + $0xc] sm:$0xf]
    %v62 = vld [vmem:[#allocation7] sm:$0x1]
    %v64 = vlaneseq
    %v65 = vshrl.u32 %v64, 7
    %v66 = vsub.s32 0, %v65
    %v67 = vrot.slane %v62, %v66
    %v73 = vunpack.c.l.b16 %v58
    %v74 = vunpack.c.l.b16 %v59
    %v75 = vunpack.c.l.b16 %v60
    %v76 = vunpack.c.l.b16 %v61
    %v77 = vpack.c.b16 %v74, %v73
    %v78 = vpack.c.b16 %v76, %v75
    %vm81 = vcmask 261120
    %v83 = vsel %vm81, %v57, 0
    %85 = vmatprep.subr.bf16.mxu0 0
    %86 = vmatpush1.bf16.msra.mxu0 %v77
    %87 = vmatprep.subr.bf16.mxu0 0
    %88 = vmatpush1.bf16.msra.mxu0 %v78
    %89 = vmatprep.subr.bf16.mxu0 0
    %90 = vmatpush1.bf16.msra.mxu0 0
    %91 = vmatprep.subr.bf16.mxu0 0
    %92 = vmatpush1.bf16.msra.mxu0 0
    %93 = vmatprep.subr.bf16.mxu0 0
    %94 = vmatpush1.bf16.msra.mxu0 0
    %95 = vmatprep.subr.bf16.mxu0 0
    %96 = vmatpush1.bf16.msra.mxu0 0
    %97 = vmatprep.subr.bf16.mxu0 0
    %98 = vmatpush1.bf16.msra.mxu0 0
    %99 = vmatprep.subr.bf16.mxu0 0
    %100 = vmatpush1.bf16.msra.mxu0 0
    %101 = vmatprep.subr.bf16.mxu0 0
    %102 = vmatpush1.bf16.msra.mxu0 0
    %103 = vmatprep.subr.bf16.mxu0 0
    %104 = vmatpush1.bf16.msra.mxu0 0
    %105 = vmatprep.subr.bf16.mxu0 0
    %106 = vmatpush1.bf16.msra.mxu0 0
    %107 = vmatprep.subr.bf16.mxu0 0
    %108 = vmatpush1.bf16.msra.mxu0 0
    %109 = vmatprep.subr.bf16.mxu0 0
    %110 = vmatpush1.bf16.msra.mxu0 0
    %111 = vmatprep.subr.bf16.mxu0 0
    %112 = vmatpush1.bf16.msra.mxu0 0
    %113 = vmatprep.subr.bf16.mxu0 0
    %114 = vmatpush1.bf16.msra.mxu0 0
    %115 = vmatprep.subr.bf16.mxu0 0
    %116 = vmatpush1.bf16.msra.mxu0 0
    %117 = vmatprep.mubr.bf16.mxu0 0
    %118 = vmatmul.mubr.bf16.gmra.mrb[0].mxu0 %v83
    %v119 = vpop.f32.mrb[0].mxu0
    %v120 = vadd.f32 %v67, %v119
    %v121 = vpop.f32.mrb[0].mxu0
    %v122 = vpop.f32.mrb[0].mxu0
    %v123 = vadd.f32 %v67, %v122
    %v124 = vpop.f32.mrb[0].mxu0
    %125 = vdwg.mxu0
    %126 = vst.msk [vmem:[#allocation8] sm:$0xff] %vm81, %v120
    %127 = vst.msk [vmem:[#allocation8 + $0x8] sm:$0xff] %vm81, %v123
    // Predicated region
    $region26: #{transformer_forward.36} parent=1 // pred_check
      _
    $region27: #{transformer_forward.36} parent=1 // pred_check_branch
      %129 = sbr.rel (0) target = $region29
    $region28: #{transformer_forward.36} parent=1 // pred_region
      %s131 = ssub.s32 256, 256
      %132 = vsyncadd [#allocation4], %s131
      %s133 = sshll.u32 [#allocation8], 4
      %s134 = int_to_ptr.vmem [resolvable:$true] %s133
      %139 = dma.vmem_to_hbm [thread:$0]  %s134, 256, %s3, [#allocation4], 128, 128, 8
    $region29: #{transformer_forward.36} parent=1 // pred_fallthru
      _
    // Predicated region
    $region30: #{transformer_forward.36} parent=1 // pred_check
      _
    $region31: #{transformer_forward.36} parent=1 // pred_check_branch
      %141 = sbr.rel (0) target = $region33
    $region32: #{transformer_forward.36} parent=1 // pred_region
      %142 = dma.done [#allocation4], 256
    $region33: #{transformer_forward.36} parent=1 // pred_fallthru
      _
    %143 = vsyncpa [#allocation3], 1
    %144 = vsyncpa [#allocation6], 1
    %145 = vsyncpa [#allocation4], 1

// kernel: transformer_forward.35
$region0: #{transformer_forward.35}
  #allocation0 [shape = 'u32[]', space=smem, size = 0x4, offset = 0x4, fixed_abs, tag = 'smem constant byte address 0x4 - core index']
  #allocation1 [shape = 'u32[144,128]{1,0:T(1,128)}', space=vmem, size = 0x12000, scoped, tag = 'internal scratch']
  %s0 = inlined_call_operand.hbm [shape: f32[16,32], index: 0, kind: input, shape index: {}]
  %s1 = inlined_call_operand.hbm [shape: bf16[32,32], index: 1, kind: input, shape index: {}]
  %s2 = inlined_call_operand.hbm [shape: f32[1,32], index: 2, kind: input, shape index: {}]
  %s3 = inlined_call_operand.hbm [shape: f32[16,32], index: 3, kind: input, shape index: {}]
  %s4 = inlined_call_operand.hbm [shape: f32[1,32], index: 4, kind: input, shape index: {}]
  %s5 = inlined_call_operand.hbm [shape: f32[1,32], index: 5, kind: input, shape index: {}]
  %s6 = inlined_call_operand.hbm [shape: f32[16,32], index: 6, kind: output, shape index: {}]
  %s7 = sld [smem:[#allocation0]]
  $region58: #{transformer_forward.35} parent=0
    _
  %s9 = ssub.s32 1, %s7
  %s10 = scalar_select 0, %s9, %s7
  $region1: #{transformer_forward.35} parent=0
    #allocation2 [shape = 'u8[8192]{0}', space=vmem, size = 0x2000, scoped, tag = 'input window, operand 0, single buffered']
    #allocation3 [shape = 's32[1]{0}', space=sflag, size = 0x4, scoped, tag = 'scoped memory for transformer_forward.35']
    #allocation4 [shape = 's32[1]{0}', space=sflag, size = 0x4, scoped, tag = 'scoped memory for transformer_forward.35']
    #allocation5 [shape = 'u8[8192]{0}', space=vmem, size = 0x2000, scoped, tag = 'input window, operand 1, single buffered']
    #allocation6 [shape = 's32[1]{0}', space=sflag, size = 0x4, scoped, tag = 'scoped memory for transformer_forward.35']
    #allocation7 [shape = 'u8[512]{0}', space=vmem, size = 0x400, scoped, tag = 'input window, operand 2, single buffered']
    #allocation8 [shape = 'u8[8192]{0}', space=vmem, size = 0x2000, scoped, tag = 'input window, operand 3, single buffered']
    #allocation9 [shape = 's32[1]{0}', space=sflag, size = 0x4, scoped, tag = 'scoped memory for transformer_forward.35']
    #allocation10 [shape = 'u8[512]{0}', space=vmem, size = 0x400, scoped, tag = 'input window, operand 4, single buffered']
    #allocation11 [shape = 'u8[512]{0}', space=vmem, size = 0x400, scoped, tag = 'input window, operand 5, single buffered']
    #allocation12 [shape = 's32[1]{0}', space=sflag, size = 0x4, scoped, tag = 'scoped memory for transformer_forward.35']
    #allocation13 [shape = 'u8[8192]{0}', space=vmem, size = 0x2000, scoped, tag = 'output window, operand 0, single buffered']
    %11 = vsyncpa [#allocation3], 0
    %12 = vsyncpa [#allocation6], 0
    %13 = vsyncpa [#allocation9], 0
    %14 = vsyncpa [#allocation12], 0
    %15 = vsyncpa [#allocation4], 0
    // Predicated region
    $region2: #{transformer_forward.35} parent=1 // pred_check
      _
    $region3: #{transformer_forward.35} parent=1 // pred_check_branch
      %17 = sbr.rel (0) target = $region5
    $region4: #{transformer_forward.35} parent=1 // pred_region
      %s19 = ssub.s32 256, 256
      %20 = vsyncadd [#allocation3], %s19
      %s21 = sshll.u32 [#allocation2], 4
      %s22 = int_to_ptr.vmem [resolvable:$true] %s21
      %27 = dma.hbm_to_vmem [thread:$0]  %s0, 256, %s22, [#allocation3], 128, 128, 8
    $region5: #{transformer_forward.35} parent=1 // pred_fallthru
      _
    // Predicated region
    $region6: #{transformer_forward.35} parent=1 // pred_check
      _
    $region7: #{transformer_forward.35} parent=1 // pred_check_branch
      %29 = sbr.rel (0) target = $region9
    $region8: #{transformer_forward.35} parent=1 // pred_region
      %s31 = ssub.s32 256, 256
      %32 = vsyncadd [#allocation6], %s31
      %s33 = sshll.u32 [#allocation5], 4
      %s34 = int_to_ptr.vmem [resolvable:$true] %s33
      %39 = dma.hbm_to_vmem [thread:$0]  %s1, 256, %s34, [#allocation6], 64, 64, 4
    $region9: #{transformer_forward.35} parent=1 // pred_fallthru
      _
    // Predicated region
    $region10: #{transformer_forward.35} parent=1 // pred_check
      _
    $region11: #{transformer_forward.35} parent=1 // pred_check_branch
      %41 = sbr.rel (0) target = $region13
    $region12: #{transformer_forward.35} parent=1 // pred_region
      %s43 = ssub.s32 16, 16
      %44 = vsyncadd [#allocation6], %s43
      %s46 = sshll.u32 [#allocation7], 4
      %s47 = int_to_ptr.vmem [resolvable:$true] %s46
      %49 = dma.hbm_to_vmem [thread:$0]  %s2, 16, %s47, [#allocation6]
    $region13: #{transformer_forward.35} parent=1 // pred_fallthru
      _
    // Predicated region
    $region14: #{transformer_forward.35} parent=1 // pred_check
      _
    $region15: #{transformer_forward.35} parent=1 // pred_check_branch
      %51 = sbr.rel (0) target = $region17
    $region16: #{transformer_forward.35} parent=1 // pred_region
      %s53 = ssub.s32 256, 256
      %54 = vsyncadd [#allocation9], %s53
      %s55 = sshll.u32 [#allocation8], 4
      %s56 = int_to_ptr.vmem [resolvable:$true] %s55
      %61 = dma.hbm_to_vmem [thread:$0]  %s3, 256, %s56, [#allocation9], 128, 128, 8
    $region17: #{transformer_forward.35} parent=1 // pred_fallthru
      _
    // Predicated region
    $region18: #{transformer_forward.35} parent=1 // pred_check
      _
    $region19: #{transformer_forward.35} parent=1 // pred_check_branch
      %63 = sbr.rel (0) target = $region21
    $region20: #{transformer_forward.35} parent=1 // pred_region
      %s65 = ssub.s32 16, 16
      %66 = vsyncadd [#allocation9], %s65
      %s68 = sshll.u32 [#allocation10], 4
      %s69 = int_to_ptr.vmem [resolvable:$true] %s68
      %71 = dma.hbm_to_vmem [thread:$0]  %s4, 16, %s69, [#allocation9]
    $region21: #{transformer_forward.35} parent=1 // pred_fallthru
      _
    // Predicated region
    $region22: #{transformer_forward.35} parent=1 // pred_check
      _
    $region23: #{transformer_forward.35} parent=1 // pred_check_branch
      %73 = sbr.rel (0) target = $region25
    $region24: #{transformer_forward.35} parent=1 // pred_region
      %s75 = ssub.s32 16, 16
      %76 = vsyncadd [#allocation12], %s75
      %s78 = sshll.u32 [#allocation11], 4
      %s79 = int_to_ptr.vmem [resolvable:$true] %s78
      %81 = dma.hbm_to_vmem [thread:$0]  %s5, 16, %s79, [#allocation12]
    $region25: #{transformer_forward.35} parent=1 // pred_fallthru
      _
    // Predicated region
    $region26: #{transformer_forward.35} parent=1 // pred_check
      _
    $region27: #{transformer_forward.35} parent=1 // pred_check_branch
      %83 = sbr.rel (0) target = $region29
    $region28: #{transformer_forward.35} parent=1 // pred_region
      %84 = dma.done [#allocation3], 256
    $region29: #{transformer_forward.35} parent=1 // pred_fallthru
      _
    // Predicated region
    $region30: #{transformer_forward.35} parent=1 // pred_check
      _
    $region31: #{transformer_forward.35} parent=1 // pred_check_branch
      %86 = sbr.rel (0) target = $region33
    $region32: #{transformer_forward.35} parent=1 // pred_region
      %87 = dma.done [#allocation6], 256
    $region33: #{transformer_forward.35} parent=1 // pred_fallthru
      _
    // Predicated region
    $region34: #{transformer_forward.35} parent=1 // pred_check
      _
    $region35: #{transformer_forward.35} parent=1 // pred_check_branch
      %89 = sbr.rel (0) target = $region37
    $region36: #{transformer_forward.35} parent=1 // pred_region
      %90 = dma.done [#allocation6], 16
    $region37: #{transformer_forward.35} parent=1 // pred_fallthru
      _
    // Predicated region
    $region38: #{transformer_forward.35} parent=1 // pred_check
      _
    $region39: #{transformer_forward.35} parent=1 // pred_check_branch
      %92 = sbr.rel (0) target = $region41
    $region40: #{transformer_forward.35} parent=1 // pred_region
      %93 = dma.done [#allocation9], 256
    $region41: #{transformer_forward.35} parent=1 // pred_fallthru
      _
    // Predicated region
    $region42: #{transformer_forward.35} parent=1 // pred_check
      _
    $region43: #{transformer_forward.35} parent=1 // pred_check_branch
      %95 = sbr.rel (0) target = $region45
    $region44: #{transformer_forward.35} parent=1 // pred_region
      %96 = dma.done [#allocation9], 16
    $region45: #{transformer_forward.35} parent=1 // pred_fallthru
      _
    // Predicated region
    $region46: #{transformer_forward.35} parent=1 // pred_check
      _
    $region47: #{transformer_forward.35} parent=1 // pred_check_branch
      %98 = sbr.rel (0) target = $region49
    $region48: #{transformer_forward.35} parent=1 // pred_region
      %99 = dma.done [#allocation12], 16
    $region49: #{transformer_forward.35} parent=1 // pred_fallthru
      _
    %v101 = vld [vmem:[#allocation2] sm:$0xff]
    %v102 = vld [vmem:[#allocation2 + $0x8] sm:$0xff]
    %v103 = vpack.c.bf16 %v102, %v101
    %v104 = vld [vmem:[#allocation5] sm:$0xf]
    %v105 = vld [vmem:[#allocation5 + $0x4] sm:$0xf]
    %v106 = vld [vmem:[#allocation5 + $0x8] sm:$0xf]
    %v107 = vld [vmem:[#allocation5 + $0xc] sm:$0xf]
    %v108 = vld [vmem:[#allocation7] sm:$0x1]
    %v110 = vlaneseq
    %v111 = vshrl.u32 %v110, 7
    %v112 = vsub.s32 0, %v111
    %v113 = vrot.slane %v108, %v112
    %v119 = vunpack.c.l.b16 %v104
    %v120 = vunpack.c.l.b16 %v105
    %v121 = vunpack.c.l.b16 %v106
    %v122 = vunpack.c.l.b16 %v107
    %v123 = vpack.c.b16 %v120, %v119
    %v124 = vpack.c.b16 %v122, %v121
    %vm127 = vcmask 261120
    %v129 = vsel %vm127, %v103, 0
    %131 = vmatprep.subr.bf16.mxu0 0
    %132 = vmatpush1.bf16.msra.mxu0 %v123
    %133 = vmatprep.subr.bf16.mxu0 0
    %134 = vmatpush1.bf16.msra.mxu0 %v124
    %135 = vmatprep.subr.bf16.mxu0 0
    %136 = vmatpush1.bf16.msra.mxu0 0
    %137 = vmatprep.subr.bf16.mxu0 0
    %138 = vmatpush1.bf16.msra.mxu0 0
    %139 = vmatprep.subr.bf16.mxu0 0
    %140 = vmatpush1.bf16.msra.mxu0 0
    %141 = vmatprep.subr.bf16.mxu0 0
    %142 = vmatpush1.bf16.msra.mxu0 0
    %143 = vmatprep.subr.bf16.mxu0 0
    %144 = vmatpush1.bf16.msra.mxu0 0
    %145 = vmatprep.subr.bf16.mxu0 0
    %146 = vmatpush1.bf16.msra.mxu0 0
    %147 = vmatprep.subr.bf16.mxu0 0
    %148 = vmatpush1.bf16.msra.mxu0 0
    %149 = vmatprep.subr.bf16.mxu0 0
    %150 = vmatpush1.bf16.msra.mxu0 0
    %151 = vmatprep.subr.bf16.mxu0 0
    %152 = vmatpush1.bf16.msra.mxu0 0
    %153 = vmatprep.subr.bf16.mxu0 0
    %154 = vmatpush1.bf16.msra.mxu0 0
    %155 = vmatprep.subr.bf16.mxu0 0
    %156 = vmatpush1.bf16.msra.mxu0 0
    %157 = vmatprep.subr.bf16.mxu0 0
    %158 = vmatpush1.bf16.msra.mxu0 0
    %159 = vmatprep.subr.bf16.mxu0 0
    %160 = vmatpush1.bf16.msra.mxu0 0
    %161 = vmatprep.subr.bf16.mxu0 0
    %162 = vmatpush1.bf16.msra.mxu0 0
    %163 = vmatprep.mubr.bf16.mxu0 0
    %164 = vmatmul.mubr.bf16.gmra.mrb[0].mxu0 %v129
    %v165 = vpop.f32.mrb[0].mxu0
    %v166 = vadd.f32 %v113, %v165
    %v167 = vpop.f32.mrb[0].mxu0
    %v168 = vpop.f32.mrb[0].mxu0
    %v169 = vadd.f32 %v113, %v168
    %v170 = vpop.f32.mrb[0].mxu0
    %171 = vdwg.mxu0
    %v172 = vld [vmem:[#allocation8] sm:$0xff]
    %v173 = vld [vmem:[#allocation8 + $0x8] sm:$0xff]
    %v174 = vadd.f32 %v166, %v172
    %v175 = vadd.f32 %v169, %v173
    %v176 = vsel %vm127, %v174, 0.0
    %177 = vadd.xlane.f32.xlu0 %v176
    %v178 = vpop.xlane.xlu0 %177
    %v179 = vsel %vm127, %v175, 0.0
    %180 = vadd.xlane.f32.xlu0 %v179
    %v181 = vpop.xlane.xlu0 %180
    %v182 = vrcp.pop 32.0
    %v183 = vmul.f32 %v178, %v182
    %v184 = vmul.f32 %v181, %v182
    %v185 = vsub.f32 %v174, %v183
    %v186 = vsub.f32 %v175, %v184
    %v187 = vmul.f32 %v185, %v185
    %v188 = vmul.f32 %v186, %v186
    %v189 = vsel %vm127, %v187, 0.0
    %190 = vadd.xlane.f32.xlu0 %v189
    %v191 = vpop.xlane.xlu0 %190
    %v192 = vsel %vm127, %v188, 0.0
    %193 = vadd.xlane.f32.xlu0 %v192
    %v194 = vpop.xlane.xlu0 %193
    %v195 = vmul.f32 %v191, %v182
    %v196 = vmul.f32 %v194, %v182
    %v197 = vadd.f32 %v195, 1e-12
    %v198 = vadd.f32 %v196, 1e-12
    %v199 = vrsqrt.pop %v197
    %v200 = vrsqrt.pop %v198
    %v201 = vmul.f32 %v185, %v199
    %v202 = vmul.f32 %v186, %v200
    %v203 = vld [vmem:[#allocation10] sm:$0x1]
    %v205 = vlaneseq
    %v206 = vshrl.u32 %v205, 7
    %v207 = vsub.s32 0, %v206
    %v208 = vrot.slane %v203, %v207
    %v210 = vmul.f32 %v208, %v201
    %v211 = vmul.f32 %v208, %v202
    %v212 = vld [vmem:[#allocation11] sm:$0x1]
    %v214 = vlaneseq
    %v215 = vshrl.u32 %v214, 7
    %v216 = vsub.s32 0, %v215
    %v217 = vrot.slane %v212, %v216
    %v219 = vadd.f32 %v210, %v217
    %v220 = vadd.f32 %v211, %v217
    %221 = vst.msk [vmem:[#allocation13] sm:$0xff] %vm127, %v219
    %222 = vst.msk [vmem:[#allocation13 + $0x8] sm:$0xff] %vm127, %v220
    // Predicated region
    $region50: #{transformer_forward.35} parent=1 // pred_check
      _
    $region51: #{transformer_forward.35} parent=1 // pred_check_branch
      %224 = sbr.rel (0) target = $region53
    $region52: #{transformer_forward.35} parent=1 // pred_region
      %s226 = ssub.s32 256, 256
      %227 = vsyncadd [#allocation4], %s226
      %s228 = sshll.u32 [#allocation13], 4
      %s229 = int_to_ptr.vmem [resolvable:$true] %s228
      %234 = dma.vmem_to_hbm [thread:$0]  %s229, 256, %s6, [#allocation4], 128, 128, 8
    $region53: #{transformer_forward.35} parent=1 // pred_fallthru
      _
    // Predicated region
    $region54: #{transformer_forward.35} parent=1 // pred_check
      _
    $region55: #{transformer_forward.35} parent=1 // pred_check_branch
      %236 = sbr.rel (0) target = $region57
    $region56: #{transformer_forward.35} parent=1 // pred_region
      %237 = dma.done [#allocation4], 256
    $region57: #{transformer_forward.35} parent=1 // pred_fallthru
      _
    %238 = vsyncpa [#allocation3], 1
    %239 = vsyncpa [#allocation6], 1
    %240 = vsyncpa [#allocation9], 1
    %241 = vsyncpa [#allocation12], 1
    %242 = vsyncpa [#allocation4], 1

// kernel: transformer_forward.33
$region0: #{transformer_forward.33}
  #allocation0 [shape = 'u32[]', space=smem, size = 0x4, offset = 0x4, fixed_abs, tag = 'smem constant byte address 0x4 - core index']
  #allocation1 [shape = 'u32[144,128]{1,0:T(1,128)}', space=vmem, size = 0x12000, scoped, tag = 'internal scratch']
  %s0 = inlined_call_operand.hbm [shape: f32[16,32], index: 0, kind: input, shape index: {}]
  %s1 = inlined_call_operand.hbm [shape: bf16[32,32], index: 1, kind: input, shape index: {}]
  %s2 = inlined_call_operand.hbm [shape: bf16[32,32], index: 2, kind: input, shape index: {}]
  %s3 = inlined_call_operand.hbm [shape: bf16[32,32], index: 3, kind: input, shape index: {}]
  %s4 = inlined_call_operand.hbm [shape: f32[1,32], index: 4, kind: input, shape index: {}]
  %s5 = inlined_call_operand.hbm [shape: f32[1,32], index: 5, kind: input, shape index: {}]
  %s6 = inlined_call_operand.hbm [shape: f32[1,32], index: 6, kind: input, shape index: {}]
  %s7 = inlined_call_operand.hbm [shape: f32[16,32], index: 7, kind: output, shape index: {0}]
  %s8 = inlined_call_operand.hbm [shape: f32[16,32], index: 8, kind: output, shape index: {1}]
  %s9 = inlined_call_operand.hbm [shape: f32[16,32], index: 9, kind: output, shape index: {2}]
  %10 = xla_tuple %s7, %s8, %s9
  %s11 = sld [smem:[#allocation0]]
  $region82: #{transformer_forward.33} parent=0
    _
  %s13 = ssub.s32 1, %s11
  %s14 = scalar_select 0, %s13, %s11
  $region1: #{transformer_forward.33} parent=0
    #allocation2 [shape = 'u8[8192]{0}', space=vmem, size = 0x2000, scoped, tag = 'input window, operand 0, single buffered']
    #allocation3 [shape = 's32[1]{0}', space=sflag, size = 0x4, scoped, tag = 'scoped memory for transformer_forward.33']
    #allocation4 [shape = 's32[1]{0}', space=sflag, size = 0x4, scoped, tag = 'scoped memory for transformer_forward.33']
    #allocation5 [shape = 'u8[8192]{0}', space=vmem, size = 0x2000, scoped, tag = 'input window, operand 1, single buffered']
    #allocation6 [shape = 's32[1]{0}', space=sflag, size = 0x4, scoped, tag = 'scoped memory for transformer_forward.33']
    #allocation7 [shape = 'u8[8192]{0}', space=vmem, size = 0x2000, scoped, tag = 'input window, operand 2, single buffered']
    #allocation8 [shape = 'u8[8192]{0}', space=vmem, size = 0x2000, scoped, tag = 'input window, operand 3, single buffered']
    #allocation9 [shape = 's32[1]{0}', space=sflag, size = 0x4, scoped, tag = 'scoped memory for transformer_forward.33']
    #allocation10 [shape = 'u8[512]{0}', space=vmem, size = 0x400, scoped, tag = 'input window, operand 4, single buffered']
    #allocation11 [shape = 'u8[512]{0}', space=vmem, size = 0x400, scoped, tag = 'input window, operand 5, single buffered']
    #allocation12 [shape = 's32[1]{0}', space=sflag, size = 0x4, scoped, tag = 'scoped memory for transformer_forward.33']
    #allocation13 [shape = 'u8[512]{0}', space=vmem, size = 0x400, scoped, tag = 'input window, operand 6, single buffered']
    #allocation14 [shape = 'u8[8192]{0}', space=vmem, size = 0x2000, scoped, tag = 'output window, operand 0, single buffered']
    #allocation15 [shape = 'u8[8192]{0}', space=vmem, size = 0x2000, scoped, tag = 'output window, operand 1, single buffered']
    #allocation16 [shape = 's32[1]{0}', space=sflag, size = 0x4, scoped, tag = 'scoped memory for transformer_forward.33']
    #allocation17 [shape = 'u8[8192]{0}', space=vmem, size = 0x2000, scoped, tag = 'output window, operand 2, single buffered']
    %15 = vsyncpa [#allocation3], 0
    %16 = vsyncpa [#allocation6], 0
    %17 = vsyncpa [#allocation9], 0
    %18 = vsyncpa [#allocation12], 0
    %19 = vsyncpa [#allocation4], 0
    %20 = vsyncpa [#allocation16], 0
    // Predicated region
    $region2: #{transformer_forward.33} parent=1 // pred_check
      _
    $region3: #{transformer_forward.33} parent=1 // pred_check_branch
      %22 = sbr.rel (0) target = $region5
    $region4: #{transformer_forward.33} parent=1 // pred_region
      %s24 = ssub.s32 256, 256
      %25 = vsyncadd [#allocation3], %s24
      %s26 = sshll.u32 [#allocation2], 4
      %s27 = int_to_ptr.vmem [resolvable:$true] %s26
      %32 = dma.hbm_to_vmem [thread:$0]  %s0, 256, %s27, [#allocation3], 128, 128, 8
    $region5: #{transformer_forward.33} parent=1 // pred_fallthru
      _
    // Predicated region
    $region6: #{transformer_forward.33} parent=1 // pred_check
      _
    $region7: #{transformer_forward.33} parent=1 // pred_check_branch
      %34 = sbr.rel (0) target = $region9
    $region8: #{transformer_forward.33} parent=1 // pred_region
      %s36 = ssub.s32 256, 256
      %37 = vsyncadd [#allocation6], %s36
      %s38 = sshll.u32 [#allocation5], 4
      %s39 = int_to_ptr.vmem [resolvable:$true] %s38
      %44 = dma.hbm_to_vmem [thread:$0]  %s1, 256, %s39, [#allocation6], 64, 64, 4
    $region9: #{transformer_forward.33} parent=1 // pred_fallthru
      _
    // Predicated region
    $region10: #{transformer_forward.33} parent=1 // pred_check
      _
    $region11: #{transformer_forward.33} parent=1 // pred_check_branch
      %46 = sbr.rel (0) target = $region13
    $region12: #{transformer_forward.33} parent=1 // pred_region
      %s48 = ssub.s32 256, 256
      %49 = vsyncadd [#allocation6], %s48
      %s50 = sshll.u32 [#allocation7], 4
      %s51 = int_to_ptr.vmem [resolvable:$true] %s50
      %56 = dma.hbm_to_vmem [thread:$0]  %s2, 256, %s51, [#allocation6], 64, 64, 4
    $region13: #{transformer_forward.33} parent=1 // pred_fallthru
      _
    // Predicated region
    $region14: #{transformer_forward.33} parent=1 // pred_check
      _
    $region15: #{transformer_forward.33} parent=1 // pred_check_branch
      %58 = sbr.rel (0) target = $region17
    $region16: #{transformer_forward.33} parent=1 // pred_region
      %s60 = ssub.s32 256, 256
      %61 = vsyncadd [#allocation9], %s60
      %s62 = sshll.u32 [#allocation8], 4
      %s63 = int_to_ptr.vmem [resolvable:$true] %s62
      %68 = dma.hbm_to_vmem [thread:$0]  %s3, 256, %s63, [#allocation9], 64, 64, 4
    $region17: #{transformer_forward.33} parent=1 // pred_fallthru
      _
    // Predicated region
    $region18: #{transformer_forward.33} parent=1 // pred_check
      _
    $region19: #{transformer_forward.33} parent=1 // pred_check_branch
      %70 = sbr.rel (0) target = $region21
    $region20: #{transformer_forward.33} parent=1 // pred_region
      %s72 = ssub.s32 16, 16
      %73 = vsyncadd [#allocation9], %s72
      %s75 = sshll.u32 [#allocation10], 4
      %s76 = int_to_ptr.vmem [resolvable:$true] %s75
      %78 = dma.hbm_to_vmem [thread:$0]  %s4, 16, %s76, [#allocation9]
    $region21: #{transformer_forward.33} parent=1 // pred_fallthru
      _
    // Predicated region
    $region22: #{transformer_forward.33} parent=1 // pred_check
      _
    $region23: #{transformer_forward.33} parent=1 // pred_check_branch
      %80 = sbr.rel (0) target = $region25
    $region24: #{transformer_forward.33} parent=1 // pred_region
      %s82 = ssub.s32 16, 16
      %83 = vsyncadd [#allocation12], %s82
      %s85 = sshll.u32 [#allocation11], 4
      %s86 = int_to_ptr.vmem [resolvable:$true] %s85
      %88 = dma.hbm_to_vmem [thread:$0]  %s5, 16, %s86, [#allocation12]
    $region25: #{transformer_forward.33} parent=1 // pred_fallthru
      _
    // Predicated region
    $region26: #{transformer_forward.33} parent=1 // pred_check
      _
    $region27: #{transformer_forward.33} parent=1 // pred_check_branch
      %90 = sbr.rel (0) target = $region29
    $region28: #{transformer_forward.33} parent=1 // pred_region
      %s92 = ssub.s32 16, 16
      %93 = vsyncadd [#allocation12], %s92
      %s95 = sshll.u32 [#allocation13], 4
      %s96 = int_to_ptr.vmem [resolvable:$true] %s95
      %98 = dma.hbm_to_vmem [thread:$0]  %s6, 16, %s96, [#allocation12]
    $region29: #{transformer_forward.33} parent=1 // pred_fallthru
      _
    // Predicated region
    $region30: #{transformer_forward.33} parent=1 // pred_check
      _
    $region31: #{transformer_forward.33} parent=1 // pred_check_branch
      %100 = sbr.rel (0) target = $region33
    $region32: #{transformer_forward.33} parent=1 // pred_region
      %101 = dma.done [#allocation3], 256
    $region33: #{transformer_forward.33} parent=1 // pred_fallthru
      _
    // Predicated region
    $region34: #{transformer_forward.33} parent=1 // pred_check
      _
    $region35: #{transformer_forward.33} parent=1 // pred_check_branch
      %103 = sbr.rel (0) target = $region37
    $region36: #{transformer_forward.33} parent=1 // pred_region
      %104 = dma.done [#allocation6], 256
    $region37: #{transformer_forward.33} parent=1 // pred_fallthru
      _
    // Predicated region
    $region38: #{transformer_forward.33} parent=1 // pred_check
      _
    $region39: #{transformer_forward.33} parent=1 // pred_check_branch
      %106 = sbr.rel (0) target = $region41
    $region40: #{transformer_forward.33} parent=1 // pred_region
      %107 = dma.done [#allocation6], 256
    $region41: #{transformer_forward.33} parent=1 // pred_fallthru
      _
    // Predicated region
    $region42: #{transformer_forward.33} parent=1 // pred_check
      _
    $region43: #{transformer_forward.33} parent=1 // pred_check_branch
      %109 = sbr.rel (0) target = $region45
    $region44: #{transformer_forward.33} parent=1 // pred_region
      %110 = dma.done [#allocation9], 256
    $region45: #{transformer_forward.33} parent=1 // pred_fallthru
      _
    // Predicated region
    $region46: #{transformer_forward.33} parent=1 // pred_check
      _
    $region47: #{transformer_forward.33} parent=1 // pred_check_branch
      %112 = sbr.rel (0) target = $region49
    $region48: #{transformer_forward.33} parent=1 // pred_region
      %113 = dma.done [#allocation9], 16
    $region49: #{transformer_forward.33} parent=1 // pred_fallthru
      _
    // Predicated region
    $region50: #{transformer_forward.33} parent=1 // pred_check
      _
    $region51: #{transformer_forward.33} parent=1 // pred_check_branch
      %115 = sbr.rel (0) target = $region53
    $region52: #{transformer_forward.33} parent=1 // pred_region
      %116 = dma.done [#allocation12], 16
    $region53: #{transformer_forward.33} parent=1 // pred_fallthru
      _
    // Predicated region
    $region54: #{transformer_forward.33} parent=1 // pred_check
      _
    $region55: #{transformer_forward.33} parent=1 // pred_check_branch
      %118 = sbr.rel (0) target = $region57
    $region56: #{transformer_forward.33} parent=1 // pred_region
      %119 = dma.done [#allocation12], 16
    $region57: #{transformer_forward.33} parent=1 // pred_fallthru
      _
    %v121 = vld [vmem:[#allocation2] sm:$0xff]
    %v122 = vld [vmem:[#allocation2 + $0x8] sm:$0xff]
    %v123 = vpack.c.bf16 %v122, %v121
    %v124 = vld [vmem:[#allocation5] sm:$0xf]
    %v125 = vld [vmem:[#allocation5 + $0x4] sm:$0xf]
    %v126 = vld [vmem:[#allocation5 + $0x8] sm:$0xf]
    %v127 = vld [vmem:[#allocation5 + $0xc] sm:$0xf]
    %v128 = vld [vmem:[#allocation10] sm:$0x1]
    %v130 = vlaneseq
    %v131 = vshrl.u32 %v130, 7
    %v132 = vsub.s32 0, %v131
    %v133 = vrot.slane %v128, %v132
    %v139 = vunpack.c.l.b16 %v124
    %v140 = vunpack.c.l.b16 %v125
    %v141 = vunpack.c.l.b16 %v126
    %v142 = vunpack.c.l.b16 %v127
    %v143 = vpack.c.b16 %v140, %v139
    %v144 = vpack.c.b16 %v142, %v141
    %vm147 = vcmask 261120
    %v149 = vsel %vm147, %v123, 0
    %151 = vmatprep.subr.bf16.mxu0 0
    %152 = vmatpush1.bf16.msra.mxu0 %v143
    %153 = vmatprep.subr.bf16.mxu0 0
    %154 = vmatpush1.bf16.msra.mxu0 %v144
    %155 = vmatprep.subr.bf16.mxu0 0
    %156 = vmatpush1.bf16.msra.mxu0 0
    %157 = vmatprep.subr.bf16.mxu0 0
    %158 = vmatpush1.bf16.msra.mxu0 0
    %159 = vmatprep.subr.bf16.mxu0 0
    %160 = vmatpush1.bf16.msra.mxu0 0
    %161 = vmatprep.subr.bf16.mxu0 0
    %162 = vmatpush1.bf16.msra.mxu0 0
    %163 = vmatprep.subr.bf16.mxu0 0
    %164 = vmatpush1.bf16.msra.mxu0 0
    %165 = vmatprep.subr.bf16.mxu0 0
    %166 = vmatpush1.bf16.msra.mxu0 0
    %167 = vmatprep.subr.bf16.mxu0 0
    %168 = vmatpush1.bf16.msra.mxu0 0
    %169 = vmatprep.subr.bf16.mxu0 0
    %170 = vmatpush1.bf16.msra.mxu0 0
    %171 = vmatprep.subr.bf16.mxu0 0
    %172 = vmatpush1.bf16.msra.mxu0 0
    %173 = vmatprep.subr.bf16.mxu0 0
    %174 = vmatpush1.bf16.msra.mxu0 0
    %175 = vmatprep.subr.bf16.mxu0 0
    %176 = vmatpush1.bf16.msra.mxu0 0
    %177 = vmatprep.subr.bf16.mxu0 0
    %178 = vmatpush1.bf16.msra.mxu0 0
    %179 = vmatprep.subr.bf16.mxu0 0
    %180 = vmatpush1.bf16.msra.mxu0 0
    %181 = vmatprep.subr.bf16.mxu0 0
    %182 = vmatpush1.bf16.msra.mxu0 0
    %183 = vmatprep.mubr.bf16.mxu0 0
    %184 = vmatmul.mubr.bf16.gmra.mrb[0].mxu0 %v149
    %v185 = vpop.f32.mrb[0].mxu0
    %v186 = vadd.f32 %v133, %v185
    %v187 = vpop.f32.mrb[0].mxu0
    %v188 = vpop.f32.mrb[0].mxu0
    %v189 = vadd.f32 %v133, %v188
    %v190 = vpop.f32.mrb[0].mxu0
    %191 = vdwg.mxu0
    %192 = vst.msk [vmem:[#allocation14] sm:$0xff] %vm147, %v186
    %193 = vst.msk [vmem:[#allocation14 + $0x8] sm:$0xff] %vm147, %v189
    %v194 = vld [vmem:[#allocation7] sm:$0xf]
    %v195 = vld [vmem:[#allocation7 + $0x4] sm:$0xf]
    %v196 = vld [vmem:[#allocation7 + $0x8] sm:$0xf]
    %v197 = vld [vmem:[#allocation7 + $0xc] sm:$0xf]
    %v198 = vld [vmem:[#allocation11] sm:$0x1]
    %v200 = vlaneseq
    %v201 = vshrl.u32 %v200, 7
    %v202 = vsub.s32 0, %v201
    %v203 = vrot.slane %v198, %v202
    %v209 = vunpack.c.l.b16 %v194
    %v210 = vunpack.c.l.b16 %v195
    %v211 = vunpack.c.l.b16 %v196
    %v212 = vunpack.c.l.b16 %v197
    %v213 = vpack.c.b16 %v210, %v209
    %v214 = vpack.c.b16 %v212, %v211
    %217 = vmatprep.subr.bf16.mxu0 0
    %218 = vmatpush1.bf16.msra.mxu0 %v213
    %219 = vmatprep.subr.bf16.mxu0 0
    %220 = vmatpush1.bf16.msra.mxu0 %v214
    %221 = vmatprep.subr.bf16.mxu0 0
    %222 = vmatpush1.bf16.msra.mxu0 0
    %223 = vmatprep.subr.bf16.mxu0 0
    %224 = vmatpush1.bf16.msra.mxu0 0
    %225 = vmatprep.subr.bf16.mxu0 0
    %226 = vmatpush1.bf16.msra.mxu0 0
    %227 = vmatprep.subr.bf16.mxu0 0
    %228 = vmatpush1.bf16.msra.mxu0 0
    %229 = vmatprep.subr.bf16.mxu0 0
    %230 = vmatpush1.bf16.msra.mxu0 0
    %231 = vmatprep.subr.bf16.mxu0 0
    %232 = vmatpush1.bf16.msra.mxu0 0
    %233 = vmatprep.subr.bf16.mxu0 0
    %234 = vmatpush1.bf16.msra.mxu0 0
    %235 = vmatprep.subr.bf16.mxu0 0
    %236 = vmatpush1.bf16.msra.mxu0 0
    %237 = vmatprep.subr.bf16.mxu0 0
    %238 = vmatpush1.bf16.msra.mxu0 0
    %239 = vmatprep.subr.bf16.mxu0 0
    %240 = vmatpush1.bf16.msra.mxu0 0
    %241 = vmatprep.subr.bf16.mxu0 0
    %242 = vmatpush1.bf16.msra.mxu0 0
    %243 = vmatprep.subr.bf16.mxu0 0
    %244 = vmatpush1.bf16.msra.mxu0 0
    %245 = vmatprep.subr.bf16.mxu0 0
    %246 = vmatpush1.bf16.msra.mxu0 0
    %247 = vmatprep.subr.bf16.mxu0 0
    %248 = vmatpush1.bf16.msra.mxu0 0
    %249 = vmatprep.mubr.bf16.mxu0 0
    %250 = vmatmul.mubr.bf16.gmra.mrb[0].mxu0 %v149
    %v251 = vpop.f32.mrb[0].mxu0
    %v252 = vadd.f32 %v203, %v251
    %v253 = vpop.f32.mrb[0].mxu0
    %v254 = vpop.f32.mrb[0].mxu0
    %v255 = vadd.f32 %v203, %v254
    %v256 = vpop.f32.mrb[0].mxu0
    %257 = vdwg.mxu0
    %258 = vst.msk [vmem:[#allocation15] sm:$0xff] %vm147, %v252
    %259 = vst.msk [vmem:[#allocation15 + $0x8] sm:$0xff] %vm147, %v255
    %v260 = vld [vmem:[#allocation8] sm:$0xf]
    %v261 = vld [vmem:[#allocation8 + $0x4] sm:$0xf]
    %v262 = vld [vmem:[#allocation8 + $0x8] sm:$0xf]
    %v263 = vld [vmem:[#allocation8 + $0xc] sm:$0xf]
    %v264 = vld [vmem:[#allocation13] sm:$0x1]
    %v266 = vlaneseq
    %v267 = vshrl.u32 %v266, 7
    %v268 = vsub.s32 0, %v267
    %v269 = vrot.slane %v264, %v268
    %v275 = vunpack.c.l.b16 %v260
    %v276 = vunpack.c.l.b16 %v261
    %v277 = vunpack.c.l.b16 %v262
    %v278 = vunpack.c.l.b16 %v263
    %v279 = vpack.c.b16 %v276, %v275
    %v280 = vpack.c.b16 %v278, %v277
    %283 = vmatprep.subr.bf16.mxu0 0
    %284 = vmatpush1.bf16.msra.mxu0 %v279
    %285 = vmatprep.subr.bf16.mxu0 0
    %286 = vmatpush1.bf16.msra.mxu0 %v280
    %287 = vmatprep.subr.bf16.mxu0 0
    %288 = vmatpush1.bf16.msra.mxu0 0
    %289 = vmatprep.subr.bf16.mxu0 0
    %290 = vmatpush1.bf16.msra.mxu0 0
    %291 = vmatprep.subr.bf16.mxu0 0
    %292 = vmatpush1.bf16.msra.mxu0 0
    %293 = vmatprep.subr.bf16.mxu0 0
    %294 = vmatpush1.bf16.msra.mxu0 0
    %295 = vmatprep.subr.bf16.mxu0 0
    %296 = vmatpush1.bf16.msra.mxu0 0
    %297 = vmatprep.subr.bf16.mxu0 0
    %298 = vmatpush1.bf16.msra.mxu0 0
    %299 = vmatprep.subr.bf16.mxu0 0
    %300 = vmatpush1.bf16.msra.mxu0 0
    %301 = vmatprep.subr.bf16.mxu0 0
    %302 = vmatpush1.bf16.msra.mxu0 0
    %303 = vmatprep.subr.bf16.mxu0 0
    %304 = vmatpush1.bf16.msra.mxu0 0
    %305 = vmatprep.subr.bf16.mxu0 0
    %306 = vmatpush1.bf16.msra.mxu0 0
    %307 = vmatprep.subr.bf16.mxu0 0
    %308 = vmatpush1.bf16.msra.mxu0 0
    %309 = vmatprep.subr.bf16.mxu0 0
    %310 = vmatpush1.bf16.msra.mxu0 0
    %311 = vmatprep.subr.bf16.mxu0 0
    %312 = vmatpush1.bf16.msra.mxu0 0
    %313 = vmatprep.subr.bf16.mxu0 0
    %314 = vmatpush1.bf16.msra.mxu0 0
    %315 = vmatprep.mubr.bf16.mxu0 0
    %316 = vmatmul.mubr.bf16.gmra.mrb[0].mxu0 %v149
    %v317 = vpop.f32.mrb[0].mxu0
    %v318 = vadd.f32 %v269, %v317
    %v319 = vpop.f32.mrb[0].mxu0
    %v320 = vpop.f32.mrb[0].mxu0
    %v321 = vadd.f32 %v269, %v320
    %v322 = vpop.f32.mrb[0].mxu0
    %323 = vdwg.mxu0
    %324 = vst.msk [vmem:[#allocation17] sm:$0xff] %vm147, %v318
    %325 = vst.msk [vmem:[#allocation17 + $0x8] sm:$0xff] %vm147, %v321
    // Predicated region
    $region58: #{transformer_forward.33} parent=1 // pred_check
      _
    $region59: #{transformer_forward.33} parent=1 // pred_check_branch
      %327 = sbr.rel (0) target = $region61
    $region60: #{transformer_forward.33} parent=1 // pred_region
      %s329 = ssub.s32 256, 256
      %330 = vsyncadd [#allocation4], %s329
      %s331 = sshll.u32 [#allocation14], 4
      %s332 = int_to_ptr.vmem [resolvable:$true] %s331
      %337 = dma.vmem_to_hbm [thread:$0]  %s332, 256, %s7, [#allocation4], 128, 128, 8
    $region61: #{transformer_forward.33} parent=1 // pred_fallthru
      _
    // Predicated region
    $region62: #{transformer_forward.33} parent=1 // pred_check
      _
    $region63: #{transformer_forward.33} parent=1 // pred_check_branch
      %339 = sbr.rel (0) target = $region65
    $region64: #{transformer_forward.33} parent=1 // pred_region
      %s341 = ssub.s32 256, 256
      %342 = vsyncadd [#allocation16], %s341
      %s343 = sshll.u32 [#allocation15], 4
      %s344 = int_to_ptr.vmem [resolvable:$true] %s343
      %349 = dma.vmem_to_hbm [thread:$0]  %s344, 256, %s8, [#allocation16], 128, 128, 8
    $region65: #{transformer_forward.33} parent=1 // pred_fallthru
      _
    // Predicated region
    $region66: #{transformer_forward.33} parent=1 // pred_check
      _
    $region67: #{transformer_forward.33} parent=1 // pred_check_branch
      %351 = sbr.rel (0) target = $region69
    $region68: #{transformer_forward.33} parent=1 // pred_region
      %s353 = ssub.s32 256, 256
      %354 = vsyncadd [#allocation16], %s353
      %s355 = sshll.u32 [#allocation17], 4
      %s356 = int_to_ptr.vmem [resolvable:$true] %s355
      %361 = dma.vmem_to_hbm [thread:$0]  %s356, 256, %s9, [#allocation16], 128, 128, 8
    $region69: #{transformer_forward.33} parent=1 // pred_fallthru
      _
    // Predicated region
    $region70: #{transformer_forward.33} parent=1 // pred_check
      _
    $region71: #{transformer_forward.33} parent=1 // pred_check_branch
      %363 = sbr.rel (0) target = $region73
    $region72: #{transformer_forward.33} parent=1 // pred_region
      %364 = dma.done [#allocation4], 256
    $region73: #{transformer_forward.33} parent=1 // pred_fallthru
      _
    // Predicated region
    $region74: #{transformer_forward.33} parent=1 // pred_check
      _
    $region75: #{transformer_forward.33} parent=1 // pred_check_branch
      %366 = sbr.rel (0) target = $region77
    $region76: #{transformer_forward.33} parent=1 // pred_region
      %367 = dma.done [#allocation16], 256
    $region77: #{transformer_forward.33} parent=1 // pred_fallthru
      _
    // Predicated region
    $region78: #{transformer_forward.33} parent=1 // pred_check
      _
    $region79: #{transformer_forward.33} parent=1 // pred_check_branch
      %369 = sbr.rel (0) target = $region81
    $region80: #{transformer_forward.33} parent=1 // pred_region
      %370 = dma.done [#allocation16], 256
    $region81: #{transformer_forward.33} parent=1 // pred_fallthru
      _
    %371 = vsyncpa [#allocation3], 1
    %372 = vsyncpa [#allocation6], 1
    %373 = vsyncpa [#allocation9], 1
    %374 = vsyncpa [#allocation12], 1
    %375 = vsyncpa [#allocation4], 1
    %376 = vsyncpa [#allocation16], 1

// kernel: transformer_forward.34
$region0: #{transformer_forward.34}
  #allocation0 [shape = 'u32[]', space=smem, size = 0x4, offset = 0x4, fixed_abs, tag = 'smem constant byte address 0x4 - core index']
  #allocation1 [shape = 'u32[144,128]{1,0:T(1,128)}', space=vmem, size = 0x12000, scoped, tag = 'internal scratch']
  %s0 = inlined_call_operand.hbm [shape: f32[2,8,32], index: 0, kind: input, shape index: {}]
  %s1 = inlined_call_operand.hbm [shape: f32[2,8,32], index: 1, kind: input, shape index: {}]
  %s2 = inlined_call_operand.hbm [shape: f32[2,8,32], index: 2, kind: input, shape index: {}]
  %s3 = inlined_call_operand.hbm [shape: s8[2,8,8], index: 3, kind: input, shape index: {}]
  %s4 = inlined_call_operand.hbm [shape: f32[2,8,32], index: 4, kind: output, shape index: {}]
  %s5 = sld [smem:[#allocation0]]
  $region65: #{transformer_forward.34} parent=0
    _
  %s7 = ssub.s32 1, %s5
  %s8 = scalar_select 0, %s7, %s5
  $region1: #{transformer_forward.34} parent=0
    #allocation2 [shape = 'u8[8192]{0}', space=vmem, size = 0x2000, scoped, tag = 'input window, operand 0']
    #allocation3 [shape = 's32[2]{0}', space=sflag, size = 0x8, scoped, tag = 'scoped memory for transformer_forward.34']
    #allocation4 [shape = 's32[2]{0}', space=sflag, size = 0x8, scoped, tag = 'scoped memory for transformer_forward.34']
    #allocation5 [shape = 'u8[8192]{0}', space=vmem, size = 0x2000, scoped, tag = 'input window, operand 1']
    #allocation6 [shape = 's32[2]{0}', space=sflag, size = 0x8, scoped, tag = 'scoped memory for transformer_forward.34']
    #allocation7 [shape = 'u8[8192]{0}', space=vmem, size = 0x2000, scoped, tag = 'input window, operand 2']
    #allocation8 [shape = 'u8[2048]{0}', space=vmem, size = 0x800, scoped, tag = 'input window, operand 3']
    #allocation9 [shape = 's32[2]{0}', space=sflag, size = 0x8, scoped, tag = 'scoped memory for transformer_forward.34']
    #allocation10 [shape = 'u8[8192]{0}', space=vmem, size = 0x2000, scoped, tag = 'output window, operand 0']
    %9 = vsyncpa [#allocation3], 0
    %s10 = scalar_lea.sflag [#allocation3], 1
    %11 = vsyncpa %s10, 0
    %12 = vsyncpa [#allocation6], 0
    %s13 = scalar_lea.sflag [#allocation6], 1
    %14 = vsyncpa %s13, 0
    %15 = vsyncpa [#allocation9], 0
    %s16 = scalar_lea.sflag [#allocation9], 1
    %17 = vsyncpa %s16, 0
    %18 = vsyncpa [#allocation4], 0
    %s19 = scalar_lea.sflag [#allocation4], 1
    %20 = vsyncpa %s19, 0
    loop: start=0, step=1, limit=4
    $region2: #{transformer_forward.34} parent=1 // loop_pre_header
      _
    $region3: #{transformer_forward.34} parent=1 // loop_header
      %s22 = sphi 0, %s26
      %p23 = scmp.ge.s32.totalorder %s22, 4
      %s32 = sphi 0, %s34
      %s35 = sphi 0, %s32
      %s36 = sphi 0, %s35
      %s52 = sphi 0, %s36
      %s58 = sphi 0, %s60
      %s61 = sphi 0, %s58
      %s62 = sphi 0, %s61
      %s78 = sphi 0, %s62
      %s84 = sphi 0, %s86
      %s87 = sphi 0, %s84
      %s88 = sphi 0, %s87
      %s104 = sphi 0, %s88
      %s110 = sphi 0, %s112
      %s113 = sphi 0, %s110
      %s114 = sphi 0, %s113
      %s130 = sphi 0, %s114
      %s136 = sphi 0, %s138
      %s139 = sphi 0, %s136
      %s140 = sphi 0, %s139
      %s156 = sphi 0, %s140
    $region4: #{transformer_forward.34} parent=1 // loop_header_branch
      %25 = sbr.rel (%p23) target = $region8
    $region5: #{transformer_forward.34} parent=1 // loop_body
      %s27 = ssub.s32 %s22, 1
      %s28 = ssub.s32 %s22, 2
      %s29 = sadd.s32 %s22, 1
      %s30 = ssub.s32 %s22, %s29
      %p31 = scmp.eq.s32.totalorder %s30, 0
      %s33 = sadd.s32 %s32, 1
      %s34 = scalar_select %p31, %s32, %s33
      %p37 = pneg %p31
      %p38 = scmp.eq.s32.totalorder %s22, 1
      %p39 = por %p37, %p38
      %p40 = scmp.ne.s32.totalorder %s32, %s35
      %p41 = scmp.eq.s32.totalorder %s22, 0
      %p42 = por %p40, %p41
      %p43 = scmp.ne.s32.totalorder %s32, %s35
      %p44 = scmp.eq.s32.totalorder %s27, 1
      %p45 = por %p43, %p44
      %p46 = scmp.ne.s32.totalorder %s35, %s36
      %p47 = scmp.eq.s32.totalorder %s27, 0
      %p48 = por %p46, %p47
      %p49 = scmp.ne.s32.totalorder %s35, %s36
      %p50 = scmp.eq.s32.totalorder %s28, 1
      %p51 = por %p49, %p50
      %p53 = scmp.ne.s32.totalorder %s36, %s52
      %p54 = scmp.eq.s32.totalorder %s28, 0
      %p55 = por %p53, %p54
      %s56 = ssub.s32 %s22, %s29
      %p57 = scmp.eq.s32.totalorder %s56, 0
      %s59 = sadd.s32 %s58, 1
      %s60 = scalar_select %p57, %s58, %s59
      %p63 = pneg %p57
      %p64 = scmp.eq.s32.totalorder %s22, 1
      %p65 = por %p63, %p64
      %p66 = scmp.ne.s32.totalorder %s58, %s61
      %p67 = scmp.eq.s32.totalorder %s22, 0
      %p68 = por %p66, %p67
      %p69 = scmp.ne.s32.totalorder %s58, %s61
      %p70 = scmp.eq.s32.totalorder %s27, 1
      %p71 = por %p69, %p70
      %p72 = scmp.ne.s32.totalorder %s61, %s62
      %p73 = scmp.eq.s32.totalorder %s27, 0
      %p74 = por %p72, %p73
      %p75 = scmp.ne.s32.totalorder %s61, %s62
      %p76 = scmp.eq.s32.totalorder %s28, 1
      %p77 = por %p75, %p76
      %p79 = scmp.ne.s32.totalorder %s62, %s78
      %p80 = scmp.eq.s32.totalorder %s28, 0
      %p81 = por %p79, %p80
      %s82 = ssub.s32 %s22, %s29
      %p83 = scmp.eq.s32.totalorder %s82, 0
      %s85 = sadd.s32 %s84, 1
      %s86 = scalar_select %p83, %s84, %s85
      %p89 = pneg %p83
      %p90 = scmp.eq.s32.totalorder %s22, 1
      %p91 = por %p89, %p90
      %p92 = scmp.ne.s32.totalorder %s84, %s87
      %p93 = scmp.eq.s32.totalorder %s22, 0
      %p94 = por %p92, %p93
      %p95 = scmp.ne.s32.totalorder %s84, %s87
      %p96 = scmp.eq.s32.totalorder %s27, 1
      %p97 = por %p95, %p96
      %p98 = scmp.ne.s32.totalorder %s87, %s88
      %p99 = scmp.eq.s32.totalorder %s27, 0
      %p100 = por %p98, %p99
      %p101 = scmp.ne.s32.totalorder %s87, %s88
      %p102 = scmp.eq.s32.totalorder %s28, 1
      %p103 = por %p101, %p102
      %p105 = scmp.ne.s32.totalorder %s88, %s104
      %p106 = scmp.eq.s32.totalorder %s28, 0
      %p107 = por %p105, %p106
      %s108 = ssub.s32 %s22, %s29
      %p109 = scmp.eq.s32.totalorder %s108, 0
      %s111 = sadd.s32 %s110, 1
      %s112 = scalar_select %p109, %s110, %s111
      %p115 = pneg %p109
      %p116 = scmp.eq.s32.totalorder %s22, 1
      %p117 = por %p115, %p116
      %p118 = scmp.ne.s32.totalorder %s110, %s113
      %p119 = scmp.eq.s32.totalorder %s22, 0
      %p120 = por %p118, %p119
      %p121 = scmp.ne.s32.totalorder %s110, %s113
      %p122 = scmp.eq.s32.totalorder %s27, 1
      %p123 = por %p121, %p122
      %p124 = scmp.ne.s32.totalorder %s113, %s114
      %p125 = scmp.eq.s32.totalorder %s27, 0
      %p126 = por %p124, %p125
      %p127 = scmp.ne.s32.totalorder %s113, %s114
      %p128 = scmp.eq.s32.totalorder %s28, 1
      %p129 = por %p127, %p128
      %p131 = scmp.ne.s32.totalorder %s114, %s130
      %p132 = scmp.eq.s32.totalorder %s28, 0
      %p133 = por %p131, %p132
      %s134 = ssub.s32 %s22, %s29
      %p135 = scmp.eq.s32.totalorder %s134, 0
      %s137 = sadd.s32 %s136, 1
      %s138 = scalar_select %p135, %s136, %s137
      %p141 = pneg %p135
      %p142 = scmp.eq.s32.totalorder %s22, 1
      %p143 = por %p141, %p142
      %p144 = scmp.ne.s32.totalorder %s136, %s139
      %p145 = scmp.eq.s32.totalorder %s22, 0
      %p146 = por %p144, %p145
      %p147 = scmp.ne.s32.totalorder %s136, %s139
      %p148 = scmp.eq.s32.totalorder %s27, 1
      %p149 = por %p147, %p148
      %p150 = scmp.ne.s32.totalorder %s139, %s140
      %p151 = scmp.eq.s32.totalorder %s27, 0
      %p152 = por %p150, %p151
      %p153 = scmp.ne.s32.totalorder %s139, %s140
      %p154 = scmp.eq.s32.totalorder %s28, 1
      %p155 = por %p153, %p154
      %p157 = scmp.ne.s32.totalorder %s140, %s156
      %p158 = scmp.eq.s32.totalorder %s28, 0
      %p159 = por %p157, %p158
      %p160 = scmp.le.s32.totalorder 1, %s22
      %p161 = scmp.lt.s32.totalorder %s22, 3
      %p162 = pnand %p160, %p161
      %p163 = pneg %p162
      // Predicated region
      $region9: #{transformer_forward.34} parent=5 // pred_check
        _
      $region10: #{transformer_forward.34} parent=5 // pred_check_branch
        %165 = sbr.rel (%p162) target = $region12
      $region11: #{transformer_forward.34} parent=5 // pred_region
        %s166 = ssub.s32 %s22, 1
      $region12: #{transformer_forward.34} parent=5 // pred_fallthru
        _
      %p167 = scmp.lt.s32.totalorder %s22, 2
      // Predicated region
      $region13: #{transformer_forward.34} parent=5 // pred_check
        %p168 = pneg %p167
      $region14: #{transformer_forward.34} parent=5 // pred_check_branch
        %170 = sbr.rel (%p168) target = $region16
      $region15: #{transformer_forward.34} parent=5 // pred_region
        // Predicated region
        $region17: #{transformer_forward.34} parent=15 // pred_check
          %p171 = pneg %p42
        $region18: #{transformer_forward.34} parent=15 // pred_check_branch
          %173 = sbr.rel (%p171) target = $region20
        $region19: #{transformer_forward.34} parent=15 // pred_region
          %s174 = sand.u32 %s32, 1
          %s175 = scalar_lea.sflag [#allocation3], %s174
          %s176 = sand.u32 %s32, 1
          %s177 = smul.addr %s176, 8
          %s178 = scalar_lea.vmem [#allocation2], %s177
          %s180 = ssub.s32 128, 128
          %181 = vsyncadd %s175, %s180
          %s182 = smul.addr %s22, 128
          %s183 = scalar_lea.hbm %s0, %s182
          %s185 = sshll.u32 %s178, 4
          %s186 = int_to_ptr.vmem [resolvable:$true] %s185
          %188 = dma.hbm_to_vmem [thread:$0]  %s183, 128, %s186, %s175
        $region20: #{transformer_forward.34} parent=15 // pred_fallthru
          _
        // Predicated region
        $region21: #{transformer_forward.34} parent=15 // pred_check
          %p189 = pneg %p68
        $region22: #{transformer_forward.34} parent=15 // pred_check_branch
          %191 = sbr.rel (%p189) target = $region24
        $region23: #{transformer_forward.34} parent=15 // pred_region
          %s192 = sand.u32 %s22, 1
          %s193 = scalar_lea.sflag [#allocation6], %s192
          %s194 = sand.u32 %s58, 1
          %s195 = smul.addr %s194, 8
          %s196 = scalar_lea.vmem [#allocation5], %s195
          %s198 = ssub.s32 128, 128
          %199 = vsyncadd %s193, %s198
          %s200 = smul.addr %s22, 128
          %s201 = scalar_lea.hbm %s1, %s200
          %s203 = sshll.u32 %s196, 4
          %s204 = int_to_ptr.vmem [resolvable:$true] %s203
          %206 = dma.hbm_to_vmem [thread:$0]  %s201, 128, %s204, %s193
        $region24: #{transformer_forward.34} parent=15 // pred_fallthru
          _
        // Predicated region
        $region25: #{transformer_forward.34} parent=15 // pred_check
          %p207 = pneg %p94
        $region26: #{transformer_forward.34} parent=15 // pred_check_branch
          %209 = sbr.rel (%p207) target = $region28
        $region27: #{transformer_forward.34} parent=15 // pred_region
          %s210 = sand.u32 %s22, 1
          %s211 = scalar_lea.sflag [#allocation6], %s210
          %s212 = sand.u32 %s84, 1
          %s213 = smul.addr %s212, 8
          %s214 = scalar_lea.vmem [#allocation7], %s213
          %s216 = ssub.s32 128, 128
          %217 = vsyncadd %s211, %s216
          %s218 = smul.addr %s22, 128
          %s219 = scalar_lea.hbm %s2, %s218
          %s221 = sshll.u32 %s214, 4
          %s222 = int_to_ptr.vmem [resolvable:$true] %s221
          %224 = dma.hbm_to_vmem [thread:$0]  %s219, 128, %s222, %s211
        $region28: #{transformer_forward.34} parent=15 // pred_fallthru
          _
        // Predicated region
        $region29: #{transformer_forward.34} parent=15 // pred_check
          %p225 = pneg %p120
        $region30: #{transformer_forward.34} parent=15 // pred_check_branch
          %227 = sbr.rel (%p225) target = $region32
        $region31: #{transformer_forward.34} parent=15 // pred_region
          %s228 = sand.u32 %s110, 1
          %s229 = scalar_lea.sflag [#allocation9], %s228
          %s230 = sand.u32 %s110, 1
          %s231 = smul.addr %s230, 2
          %s232 = scalar_lea.vmem [#allocation8], %s231
          %s234 = ssub.s32 32, 32
          %235 = vsyncadd %s229, %s234
          %s236 = smul.addr %s22, 32
          %s237 = scalar_lea.hbm %s3, %s236
          %s239 = sshll.u32 %s232, 4
          %s240 = int_to_ptr.vmem [resolvable:$true] %s239
          %242 = dma.hbm_to_vmem [thread:$0]  %s237, 32, %s240, %s229
        $region32: #{transformer_forward.34} parent=15 // pred_fallthru
          _
      $region16: #{transformer_forward.34} parent=5 // pred_fallthru
        _
      %p243 = scmp.le.s32.totalorder 1, %s22
      %p244 = scmp.lt.s32.totalorder %s22, 3
      %p245 = pnand %p243, %p244
      %p246 = pneg %p245
      // Predicated region
      $region33: #{transformer_forward.34} parent=5 // pred_check
        _
      $region34: #{transformer_forward.34} parent=5 // pred_check_branch
        %248 = sbr.rel (%p245) target = $region36
      $region35: #{transformer_forward.34} parent=5 // pred_region
        %s249 = ssub.s32 %s22, 1
        %s250 = sand.u32 %s35, 1
        %s251 = scalar_lea.sflag [#allocation3], %s250
        %s252 = sand.u32 %s35, 1
        %s253 = smul.addr %s252, 8
        %s254 = scalar_lea.vmem [#allocation2], %s253
        // Predicated region
        $region37: #{transformer_forward.34} parent=35 // pred_check
          %p255 = pneg %p48
        $region38: #{transformer_forward.34} parent=35 // pred_check_branch
          %257 = sbr.rel (%p255) target = $region40
        $region39: #{transformer_forward.34} parent=35 // pred_region
          %258 = dma.done %s251, 128
        $region40: #{transformer_forward.34} parent=35 // pred_fallthru
          _
        %s259 = sand.u32 %s27, 1
        %s260 = scalar_lea.sflag [#allocation6], %s259
        %s261 = sand.u32 %s61, 1
        %s262 = smul.addr %s261, 8
        %s263 = scalar_lea.vmem [#allocation5], %s262
        // Predicated region
        $region41: #{transformer_forward.34} parent=35 // pred_check
          %p264 = pneg %p74
        $region42: #{transformer_forward.34} parent=35 // pred_check_branch
          %266 = sbr.rel (%p264) target = $region44
        $region43: #{transformer_forward.34} parent=35 // pred_region
          %267 = dma.done %s260, 128
        $region44: #{transformer_forward.34} parent=35 // pred_fallthru
          _
        %s268 = sand.u32 %s27, 1
        %s269 = scalar_lea.sflag [#allocation6], %s268
        %s270 = sand.u32 %s87, 1
        %s271 = smul.addr %s270, 8
        %s272 = scalar_lea.vmem [#allocation7], %s271
        // Predicated region
        $region45: #{transformer_forward.34} parent=35 // pred_check
          %p273 = pneg %p100
        $region46: #{transformer_forward.34} parent=35 // pred_check_branch
          %275 = sbr.rel (%p273) target = $region48
        $region47: #{transformer_forward.34} parent=35 // pred_region
          %276 = dma.done %s269, 128
        $region48: #{transformer_forward.34} parent=35 // pred_fallthru
          _
        %s277 = sand.u32 %s113, 1
        %s278 = scalar_lea.sflag [#allocation9], %s277
        %s279 = sand.u32 %s113, 1
        %s280 = smul.addr %s279, 2
        %s281 = scalar_lea.vmem [#allocation8], %s280
        // Predicated region
        $region49: #{transformer_forward.34} parent=35 // pred_check
          %p282 = pneg %p126
        $region50: #{transformer_forward.34} parent=35 // pred_check_branch
          %284 = sbr.rel (%p282) target = $region52
        $region51: #{transformer_forward.34} parent=35 // pred_region
          %285 = dma.done %s278, 32
        $region52: #{transformer_forward.34} parent=35 // pred_fallthru
          _
        %s286 = sand.u32 %s35, 1
        %s287 = scalar_lea.sflag [#allocation3], %s286
        %s288 = sand.u32 %s35, 1
        %s289 = smul.addr %s288, 8
        %s290 = scalar_lea.vmem [#allocation2], %s289
        %p291 = pneg %p48
        %p292 = pneg %p45
        %s293 = sand.u32 %s27, 1
        %s294 = scalar_lea.sflag [#allocation6], %s293
        %s295 = sand.u32 %s61, 1
        %s296 = smul.addr %s295, 8
        %s297 = scalar_lea.vmem [#allocation5], %s296
        %p298 = pneg %p74
        %p299 = pneg %p71
        %s300 = sand.u32 %s27, 1
        %s301 = scalar_lea.sflag [#allocation6], %s300
        %s302 = sand.u32 %s87, 1
        %s303 = smul.addr %s302, 8
        %s304 = scalar_lea.vmem [#allocation7], %s303
        %p305 = pneg %p100
        %p306 = pneg %p97
        %s307 = sand.u32 %s113, 1
        %s308 = scalar_lea.sflag [#allocation9], %s307
        %s309 = sand.u32 %s113, 1
        %s310 = smul.addr %s309, 2
        %s311 = scalar_lea.vmem [#allocation8], %s310
        %p312 = pneg %p126
        %p313 = pneg %p123
        %p314 = pneg %p152
        %p315 = pneg %p149
        %s316 = sand.u32 %s139, 1
        %s317 = scalar_lea.sflag [#allocation4], %s316
        %s318 = sand.u32 %s139, 1
        %s319 = smul.addr %s318, 8
        %s320 = scalar_lea.vmem [#allocation10], %s319
        %v322 = vld [vmem:[%s254] sm:$0xff]
        %v323 = vpack.c.bf16 %v322, %v322
        %v324 = vld [vmem:[%s263] sm:$0xff]
        %v325 = vpack.c.bf16 %v324, %v324
        %v326 = vld [vmem:[%s272] sm:$0xff]
        %v327 = vpack.c.bf16 %v326, %v326
        %v328 = vld [vmem:[%s281] sm:$0x3]
        %v329 = vunpack.c.0.s8 %v328
        %vm330 = vcmp.eq.s32.totalorder %v329, 0
        %vm331 = vcmask 64512
        %v333 = vsel %vm331, %v323, 0
        %v336 = vsel %vm331, %v325, 0
        %338 = vmatprep.subr.bf16.mxu0 0
        %339 = vmatpush1.bf16.xpose.msra.mxu0 %v336
        %340 = vmatprep.subr.bf16.mxu0 0
        %341 = vmatpush1.bf16.xpose.msra.mxu0 0
        %342 = vmatprep.subr.bf16.mxu0 0
        %343 = vmatpush1.bf16.xpose.msra.mxu0 0
        %344 = vmatprep.subr.bf16.mxu0 0
        %345 = vmatpush1.bf16.xpose.msra.mxu0 0
        %346 = vmatprep.subr.bf16.mxu0 0
        %347 = vmatpush1.bf16.xpose.msra.mxu0 0
        %348 = vmatprep.subr.bf16.mxu0 0
        %349 = vmatpush1.bf16.xpose.msra.mxu0 0
        %350 = vmatprep.subr.bf16.mxu0 0
        %351 = vmatpush1.bf16.xpose.msra.mxu0 0
        %352 = vmatprep.subr.bf16.mxu0 0
        %353 = vmatpush1.bf16.xpose.msra.mxu0 0
        %354 = vmatprep.subr.bf16.mxu0 0
        %355 = vmatpush1.bf16.xpose.msra.mxu0 0
        %356 = vmatprep.subr.bf16.mxu0 0
        %357 = vmatpush1.bf16.xpose.msra.mxu0 0
        %358 = vmatprep.subr.bf16.mxu0 0
        %359 = vmatpush1.bf16.xpose.msra.mxu0 0
        %360 = vmatprep.subr.bf16.mxu0 0
        %361 = vmatpush1.bf16.xpose.msra.mxu0 0
        %362 = vmatprep.subr.bf16.mxu0 0
        %363 = vmatpush1.bf16.xpose.msra.mxu0 0
        %364 = vmatprep.subr.bf16.mxu0 0
        %365 = vmatpush1.bf16.xpose.msra.mxu0 0
        %366 = vmatprep.subr.bf16.mxu0 0
        %367 = vmatpush1.bf16.xpose.msra.mxu0 0
        %368 = vmatprep.subr.bf16.mxu0 0
        %369 = vmatpush1.bf16.xpose.msra.mxu0 0
        %370 = vmatprep.mubr.bf16.mxu0 0
        %371 = vmatmul.mubr.bf16.gmra.mrb[0].mxu0 %v333
        %v372 = vpop.f32.mrb[0].mxu0
        %v373 = vadd.f32 0.0, %v372
        %v374 = vpop.f32.mrb[0].mxu0
        %v375 = vpop.f32.mrb[0].mxu0
        %v376 = vpop.f32.mrb[0].mxu0
        %377 = vdwg.mxu0
        %v378 = vmul.f32 %v373, 0.35355338
        %v379 = vsel %vm330, -10000.0, %v378
        %v380 = vsel %vm331, %v379, -inf
        %381 = vmax.xlane.f32.xlu0 %v380
        %v382 = vpop.xlane.xlu0 %381
        %v383 = vsub.f32 %v379, %v382
        %v384 = vmul.f32 %v383, 1.442695
        %v385 = vpow.pop %v384
        %v386 = vsel %vm331, %v385, 0.0
        %387 = vadd.xlane.f32.xlu0 %v386
        %v388 = vpop.xlane.xlu0 %387
        %v389 = vrcp.pop %v388
        %v390 = vmul.f32 %v385, %v389
        %v391 = vpack.c.bf16 %v390, %v390
        %v393 = vsel %vm331, %v391, 0
        %vm395 = vcmask 1043456
        %v397 = vsel %vm395, %v327, 0
        %399 = vmatprep.subr.bf16.mxu0 0
        %400 = vmatpush1.bf16.msra.mxu0 %v397
        %401 = vmatprep.subr.bf16.mxu0 0
        %402 = vmatpush1.bf16.msra.mxu0 0
        %403 = vmatprep.subr.bf16.mxu0 0
        %404 = vmatpush1.bf16.msra.mxu0 0
        %405 = vmatprep.subr.bf16.mxu0 0
        %406 = vmatpush1.bf16.msra.mxu0 0
        %407 = vmatprep.subr.bf16.mxu0 0
        %408 = vmatpush1.bf16.msra.mxu0 0
        %409 = vmatprep.subr.bf16.mxu0 0
        %410 = vmatpush1.bf16.msra.mxu0 0
        %411 = vmatprep.subr.bf16.mxu0 0
        %412 = vmatpush1.bf16.msra.mxu0 0
        %413 = vmatprep.subr.bf16.mxu0 0
        %414 = vmatpush1.bf16.msra.mxu0 0
        %415 = vmatprep.subr.bf16.mxu0 0
        %416 = vmatpush1.bf16.msra.mxu0 0
        %417 = vmatprep.subr.bf16.mxu0 0
        %418 = vmatpush1.bf16.msra.mxu0 0
        %419 = vmatprep.subr.bf16.mxu0 0
        %420 = vmatpush1.bf16.msra.mxu0 0
        %421 = vmatprep.subr.bf16.mxu0 0
        %422 = vmatpush1.bf16.msra.mxu0 0
        %423 = vmatprep.subr.bf16.mxu0 0
        %424 = vmatpush1.bf16.msra.mxu0 0
        %425 = vmatprep.subr.bf16.mxu0 0
        %426 = vmatpush1.bf16.msra.mxu0 0
        %427 = vmatprep.subr.bf16.mxu0 0
        %428 = vmatpush1.bf16.msra.mxu0 0
        %429 = vmatprep.subr.bf16.mxu0 0
        %430 = vmatpush1.bf16.msra.mxu0 0
        %431 = vmatprep.mubr.bf16.mxu0 0
        %432 = vmatmul.mubr.bf16.gmra.mrb[0].mxu0 %v393
        %v433 = vpop.f32.mrb[0].mxu0
        %v434 = vadd.f32 0.0, %v433
        %v435 = vpop.f32.mrb[0].mxu0
        %v436 = vpop.f32.mrb[0].mxu0
        %v437 = vpop.f32.mrb[0].mxu0
        %438 = vdwg.mxu0
        %440 = vrot.lane.b32.xlu0 %v323, 120
        %v441 = vpop.permute.xlu0 %440
        %443 = vrot.lane.b32.xlu0 %v325, 120
        %v444 = vpop.permute.xlu0 %443
        %v446 = vsel %vm331, %v441, 0
        %v449 = vsel %vm331, %v444, 0
        %451 = vmatprep.subr.bf16.mxu0 0
        %452 = vmatpush1.bf16.xpose.msra.mxu0 %v449
        %453 = vmatprep.subr.bf16.mxu0 0
        %454 = vmatpush1.bf16.xpose.msra.mxu0 0
        %455 = vmatprep.subr.bf16.mxu0 0
        %456 = vmatpush1.bf16.xpose.msra.mxu0 0
        %457 = vmatprep.subr.bf16.mxu0 0
        %458 = vmatpush1.bf16.xpose.msra.mxu0 0
        %459 = vmatprep.subr.bf16.mxu0 0
        %460 = vmatpush1.bf16.xpose.msra.mxu0 0
        %461 = vmatprep.subr.bf16.mxu0 0
        %462 = vmatpush1.bf16.xpose.msra.mxu0 0
        %463 = vmatprep.subr.bf16.mxu0 0
        %464 = vmatpush1.bf16.xpose.msra.mxu0 0
        %465 = vmatprep.subr.bf16.mxu0 0
        %466 = vmatpush1.bf16.xpose.msra.mxu0 0
        %467 = vmatprep.subr.bf16.mxu0 0
        %468 = vmatpush1.bf16.xpose.msra.mxu0 0
        %469 = vmatprep.subr.bf16.mxu0 0
        %470 = vmatpush1.bf16.xpose.msra.mxu0 0
        %471 = vmatprep.subr.bf16.mxu0 0
        %472 = vmatpush1.bf16.xpose.msra.mxu0 0
        %473 = vmatprep.subr.bf16.mxu0 0
        %474 = vmatpush1.bf16.xpose.msra.mxu0 0
        %475 = vmatprep.subr.bf16.mxu0 0
        %476 = vmatpush1.bf16.xpose.msra.mxu0 0
        %477 = vmatprep.subr.bf16.mxu0 0
        %478 = vmatpush1.bf16.xpose.msra.mxu0 0
        %479 = vmatprep.subr.bf16.mxu0 0
        %480 = vmatpush1.bf16.xpose.msra.mxu0 0
        %481 = vmatprep.subr.bf16.mxu0 0
        %482 = vmatpush1.bf16.xpose.msra.mxu0 0
        %483 = vmatprep.mubr.bf16.mxu0 0
        %484 = vmatmul.mubr.bf16.gmra.mrb[0].mxu0 %v446
        %v485 = vpop.f32.mrb[0].mxu0
        %v486 = vadd.f32 0.0, %v485
        %v487 = vpop.f32.mrb[0].mxu0
        %v488 = vpop.f32.mrb[0].mxu0
        %v489 = vpop.f32.mrb[0].mxu0
        %490 = vdwg.mxu0
        %v491 = vmul.f32 %v486, 0.35355338
        %v492 = vsel %vm330, -10000.0, %v491
        %v493 = vsel %vm331, %v492, -inf
        %494 = vmax.xlane.f32.xlu0 %v493
        %v495 = vpop.xlane.xlu0 %494
        %v496 = vsub.f32 %v492, %v495
        %v497 = vmul.f32 %v496, 1.442695
        %v498 = vpow.pop %v497
        %v499 = vsel %vm331, %v498, 0.0
        %500 = vadd.xlane.f32.xlu0 %v499
        %v501 = vpop.xlane.xlu0 %500
        %v502 = vrcp.pop %v501
        %v503 = vmul.f32 %v498, %v502
        %v504 = vpack.c.bf16 %v503, %v503
        %506 = vrot.lane.b32.xlu0 %v327, 120
        %v507 = vpop.permute.xlu0 %506
        %v509 = vsel %vm331, %v504, 0
        %v512 = vsel %vm395, %v507, 0
        %514 = vmatprep.subr.bf16.mxu0 0
        %515 = vmatpush1.bf16.msra.mxu0 %v512
        %516 = vmatprep.subr.bf16.mxu0 0
        %517 = vmatpush1.bf16.msra.mxu0 0
        %518 = vmatprep.subr.bf16.mxu0 0
        %519 = vmatpush1.bf16.msra.mxu0 0
        %520 = vmatprep.subr.bf16.mxu0 0
        %521 = vmatpush1.bf16.msra.mxu0 0
        %522 = vmatprep.subr.bf16.mxu0 0
        %523 = vmatpush1.bf16.msra.mxu0 0
        %524 = vmatprep.subr.bf16.mxu0 0
        %525 = vmatpush1.bf16.msra.mxu0 0
        %526 = vmatprep.subr.bf16.mxu0 0
        %527 = vmatpush1.bf16.msra.mxu0 0
        %528 = vmatprep.subr.bf16.mxu0 0
        %529 = vmatpush1.bf16.msra.mxu0 0
        %530 = vmatprep.subr.bf16.mxu0 0
        %531 = vmatpush1.bf16.msra.mxu0 0
        %532 = vmatprep.subr.bf16.mxu0 0
        %533 = vmatpush1.bf16.msra.mxu0 0
        %534 = vmatprep.subr.bf16.mxu0 0
        %535 = vmatpush1.bf16.msra.mxu0 0
        %536 = vmatprep.subr.bf16.mxu0 0
        %537 = vmatpush1.bf16.msra.mxu0 0
        %538 = vmatprep.subr.bf16.mxu0 0
        %539 = vmatpush1.bf16.msra.mxu0 0
        %540 = vmatprep.subr.bf16.mxu0 0
        %541 = vmatpush1.bf16.msra.mxu0 0
        %542 = vmatprep.subr.bf16.mxu0 0
        %543 = vmatpush1.bf16.msra.mxu0 0
        %544 = vmatprep.subr.bf16.mxu0 0
        %545 = vmatpush1.bf16.msra.mxu0 0
        %546 = vmatprep.mubr.bf16.mxu0 0
        %547 = vmatmul.mubr.bf16.gmra.mrb[0].mxu0 %v509
        %v548 = vpop.f32.mrb[0].mxu0
        %v549 = vadd.f32 0.0, %v548
        %v550 = vpop.f32.mrb[0].mxu0
        %v551 = vpop.f32.mrb[0].mxu0
        %v552 = vpop.f32.mrb[0].mxu0
        %553 = vdwg.mxu0
        %554 = vrot.lane.b32.xlu0 %v323, 112
        %v555 = vpop.permute.xlu0 %554
        %556 = vrot.lane.b32.xlu0 %v325, 112
        %v557 = vpop.permute.xlu0 %556
        %v559 = vsel %vm331, %v555, 0
        %v562 = vsel %vm331, %v557, 0
        %564 = vmatprep.subr.bf16.mxu0 0
        %565 = vmatpush1.bf16.xpose.msra.mxu0 %v562
        %566 = vmatprep.subr.bf16.mxu0 0
        %567 = vmatpush1.bf16.xpose.msra.mxu0 0
        %568 = vmatprep.subr.bf16.mxu0 0
        %569 = vmatpush1.bf16.xpose.msra.mxu0 0
        %570 = vmatprep.subr.bf16.mxu0 0
        %571 = vmatpush1.bf16.xpose.msra.mxu0 0
        %572 = vmatprep.subr.bf16.mxu0 0
        %573 = vmatpush1.bf16.xpose.msra.mxu0 0
        %574 = vmatprep.subr.bf16.mxu0 0
        %575 = vmatpush1.bf16.xpose.msra.mxu0 0
        %576 = vmatprep.subr.bf16.mxu0 0
        %577 = vmatpush1.bf16.xpose.msra.mxu0 0
        %578 = vmatprep.subr.bf16.mxu0 0
        %579 = vmatpush1.bf16.xpose.msra.mxu0 0
        %580 = vmatprep.subr.bf16.mxu0 0
        %581 = vmatpush1.bf16.xpose.msra.mxu0 0
        %582 = vmatprep.subr.bf16.mxu0 0
        %583 = vmatpush1.bf16.xpose.msra.mxu0 0
        %584 = vmatprep.subr.bf16.mxu0 0
        %585 = vmatpush1.bf16.xpose.msra.mxu0 0
        %586 = vmatprep.subr.bf16.mxu0 0
        %587 = vmatpush1.bf16.xpose.msra.mxu0 0
        %588 = vmatprep.subr.bf16.mxu0 0
        %589 = vmatpush1.bf16.xpose.msra.mxu0 0
        %590 = vmatprep.subr.bf16.mxu0 0
        %591 = vmatpush1.bf16.xpose.msra.mxu0 0
        %592 = vmatprep.subr.bf16.mxu0 0
        %593 = vmatpush1.bf16.xpose.msra.mxu0 0
        %594 = vmatprep.subr.bf16.mxu0 0
        %595 = vmatpush1.bf16.xpose.msra.mxu0 0
        %596 = vmatprep.mubr.bf16.mxu0 0
        %597 = vmatmul.mubr.bf16.gmra.mrb[0].mxu0 %v559
        %v598 = vpop.f32.mrb[0].mxu0
        %v599 = vadd.f32 0.0, %v598
        %v600 = vpop.f32.mrb[0].mxu0
        %v601 = vpop.f32.mrb[0].mxu0
        %v602 = vpop.f32.mrb[0].mxu0
        %603 = vdwg.mxu0
        %v604 = vmul.f32 %v599, 0.35355338
        %v605 = vsel %vm330, -10000.0, %v604
        %v606 = vsel %vm331, %v605, -inf
        %607 = vmax.xlane.f32.xlu0 %v606
        %v608 = vpop.xlane.xlu0 %607
        %v609 = vsub.f32 %v605, %v608
        %v610 = vmul.f32 %v609, 1.442695
        %v611 = vpow.pop %v610
        %v612 = vsel %vm331, %v611, 0.0
        %613 = vadd.xlane.f32.xlu0 %v612
        %v614 = vpop.xlane.xlu0 %613
        %v615 = vrcp.pop %v614
        %v616 = vmul.f32 %v611, %v615
        %v617 = vpack.c.bf16 %v616, %v616
        %618 = vrot.lane.b32.xlu0 %v327, 112
        %v619 = vpop.permute.xlu0 %618
        %v621 = vsel %vm331, %v617, 0
        %v624 = vsel %vm395, %v619, 0
        %626 = vmatprep.subr.bf16.mxu0 0
        %627 = vmatpush1.bf16.msra.mxu0 %v624
        %628 = vmatprep.subr.bf16.mxu0 0
        %629 = vmatpush1.bf16.msra.mxu0 0
        %630 = vmatprep.subr.bf16.mxu0 0
        %631 = vmatpush1.bf16.msra.mxu0 0
        %632 = vmatprep.subr.bf16.mxu0 0
        %633 = vmatpush1.bf16.msra.mxu0 0
        %634 = vmatprep.subr.bf16.mxu0 0
        %635 = vmatpush1.bf16.msra.mxu0 0
        %636 = vmatprep.subr.bf16.mxu0 0
        %637 = vmatpush1.bf16.msra.mxu0 0
        %638 = vmatprep.subr.bf16.mxu0 0
        %639 = vmatpush1.bf16.msra.mxu0 0
        %640 = vmatprep.subr.bf16.mxu0 0
        %641 = vmatpush1.bf16.msra.mxu0 0
        %642 = vmatprep.subr.bf16.mxu0 0
        %643 = vmatpush1.bf16.msra.mxu0 0
        %644 = vmatprep.subr.bf16.mxu0 0
        %645 = vmatpush1.bf16.msra.mxu0 0
        %646 = vmatprep.subr.bf16.mxu0 0
        %647 = vmatpush1.bf16.msra.mxu0 0
        %648 = vmatprep.subr.bf16.mxu0 0
        %649 = vmatpush1.bf16.msra.mxu0 0
        %650 = vmatprep.subr.bf16.mxu0 0
        %651 = vmatpush1.bf16.msra.mxu0 0
        %652 = vmatprep.subr.bf16.mxu0 0
        %653 = vmatpush1.bf16.msra.mxu0 0
        %654 = vmatprep.subr.bf16.mxu0 0
        %655 = vmatpush1.bf16.msra.mxu0 0
        %656 = vmatprep.subr.bf16.mxu0 0
        %657 = vmatpush1.bf16.msra.mxu0 0
        %658 = vmatprep.mubr.bf16.mxu0 0
        %659 = vmatmul.mubr.bf16.gmra.mrb[0].mxu0 %v621
        %v660 = vpop.f32.mrb[0].mxu0
        %v661 = vadd.f32 0.0, %v660
        %v662 = vpop.f32.mrb[0].mxu0
        %v663 = vpop.f32.mrb[0].mxu0
        %v664 = vpop.f32.mrb[0].mxu0
        %665 = vdwg.mxu0
        %666 = vrot.lane.b32.xlu0 %v323, 104
        %v667 = vpop.permute.xlu0 %666
        %668 = vrot.lane.b32.xlu0 %v325, 104
        %v669 = vpop.permute.xlu0 %668
        %v671 = vsel %vm331, %v667, 0
        %v674 = vsel %vm331, %v669, 0
        %676 = vmatprep.subr.bf16.mxu0 0
        %677 = vmatpush1.bf16.xpose.msra.mxu0 %v674
        %678 = vmatprep.subr.bf16.mxu0 0
        %679 = vmatpush1.bf16.xpose.msra.mxu0 0
        %680 = vmatprep.subr.bf16.mxu0 0
        %681 = vmatpush1.bf16.xpose.msra.mxu0 0
        %682 = vmatprep.subr.bf16.mxu0 0
        %683 = vmatpush1.bf16.xpose.msra.mxu0 0
        %684 = vmatprep.subr.bf16.mxu0 0
        %685 = vmatpush1.bf16.xpose.msra.mxu0 0
        %686 = vmatprep.subr.bf16.mxu0 0
        %687 = vmatpush1.bf16.xpose.msra.mxu0 0
        %688 = vmatprep.subr.bf16.mxu0 0
        %689 = vmatpush1.bf16.xpose.msra.mxu0 0
        %690 = vmatprep.subr.bf16.mxu0 0
        %691 = vmatpush1.bf16.xpose.msra.mxu0 0
        %692 = vmatprep.subr.bf16.mxu0 0
        %693 = vmatpush1.bf16.xpose.msra.mxu0 0
        %694 = vmatprep.subr.bf16.mxu0 0
        %695 = vmatpush1.bf16.xpose.msra.mxu0 0
        %696 = vmatprep.subr.bf16.mxu0 0
        %697 = vmatpush1.bf16.xpose.msra.mxu0 0
        %698 = vmatprep.subr.bf16.mxu0 0
        %699 = vmatpush1.bf16.xpose.msra.mxu0 0
        %700 = vmatprep.subr.bf16.mxu0 0
        %701 = vmatpush1.bf16.xpose.msra.mxu0 0
        %702 = vmatprep.subr.bf16.mxu0 0
        %703 = vmatpush1.bf16.xpose.msra.mxu0 0
        %704 = vmatprep.subr.bf16.mxu0 0
        %705 = vmatpush1.bf16.xpose.msra.mxu0 0
        %706 = vmatprep.subr.bf16.mxu0 0
        %707 = vmatpush1.bf16.xpose.msra.mxu0 0
        %708 = vmatprep.mubr.bf16.mxu0 0
        %709 = vmatmul.mubr.bf16.gmra.mrb[0].mxu0 %v671
        %v710 = vpop.f32.mrb[0].mxu0
        %v711 = vadd.f32 0.0, %v710
        %v712 = vpop.f32.mrb[0].mxu0
        %v713 = vpop.f32.mrb[0].mxu0
        %v714 = vpop.f32.mrb[0].mxu0
        %715 = vdwg.mxu0
        %v716 = vmul.f32 %v711, 0.35355338
        %v717 = vsel %vm330, -10000.0, %v716
        %v718 = vsel %vm331, %v717, -inf
        %719 = vmax.xlane.f32.xlu0 %v718
        %v720 = vpop.xlane.xlu0 %719
        %v721 = vsub.f32 %v717, %v720
        %v722 = vmul.f32 %v721, 1.442695
        %v723 = vpow.pop %v722
        %v724 = vsel %vm331, %v723, 0.0
        %725 = vadd.xlane.f32.xlu0 %v724
        %v726 = vpop.xlane.xlu0 %725
        %v727 = vrcp.pop %v726
        %v728 = vmul.f32 %v723, %v727
        %v729 = vpack.c.bf16 %v728, %v728
        %730 = vrot.lane.b32.xlu0 %v327, 104
        %v731 = vpop.permute.xlu0 %730
        %v733 = vsel %vm331, %v729, 0
        %v736 = vsel %vm395, %v731, 0
        %738 = vmatprep.subr.bf16.mxu0 0
        %739 = vmatpush1.bf16.msra.mxu0 %v736
        %740 = vmatprep.subr.bf16.mxu0 0
        %741 = vmatpush1.bf16.msra.mxu0 0
        %742 = vmatprep.subr.bf16.mxu0 0
        %743 = vmatpush1.bf16.msra.mxu0 0
        %744 = vmatprep.subr.bf16.mxu0 0
        %745 = vmatpush1.bf16.msra.mxu0 0
        %746 = vmatprep.subr.bf16.mxu0 0
        %747 = vmatpush1.bf16.msra.mxu0 0
        %748 = vmatprep.subr.bf16.mxu0 0
        %749 = vmatpush1.bf16.msra.mxu0 0
        %750 = vmatprep.subr.bf16.mxu0 0
        %751 = vmatpush1.bf16.msra.mxu0 0
        %752 = vmatprep.subr.bf16.mxu0 0
        %753 = vmatpush1.bf16.msra.mxu0 0
        %754 = vmatprep.subr.bf16.mxu0 0
        %755 = vmatpush1.bf16.msra.mxu0 0
        %756 = vmatprep.subr.bf16.mxu0 0
        %757 = vmatpush1.bf16.msra.mxu0 0
        %758 = vmatprep.subr.bf16.mxu0 0
        %759 = vmatpush1.bf16.msra.mxu0 0
        %760 = vmatprep.subr.bf16.mxu0 0
        %761 = vmatpush1.bf16.msra.mxu0 0
        %762 = vmatprep.subr.bf16.mxu0 0
        %763 = vmatpush1.bf16.msra.mxu0 0
        %764 = vmatprep.subr.bf16.mxu0 0
        %765 = vmatpush1.bf16.msra.mxu0 0
        %766 = vmatprep.subr.bf16.mxu0 0
        %767 = vmatpush1.bf16.msra.mxu0 0
        %768 = vmatprep.subr.bf16.mxu0 0
        %769 = vmatpush1.bf16.msra.mxu0 0
        %770 = vmatprep.mubr.bf16.mxu0 0
        %771 = vmatmul.mubr.bf16.gmra.mrb[0].mxu0 %v733
        %v772 = vpop.f32.mrb[0].mxu0
        %v773 = vadd.f32 0.0, %v772
        %v774 = vpop.f32.mrb[0].mxu0
        %v775 = vpop.f32.mrb[0].mxu0
        %v776 = vpop.f32.mrb[0].mxu0
        %777 = vdwg.mxu0
        %779 = vrot.lane.b32.xlu0 %v549, 8
        %v780 = vpop.permute.xlu0 %779
        %783 = vrot.lane.b32.xlu0 %v661, 16
        %v784 = vpop.permute.xlu0 %783
        %787 = vrot.lane.b32.xlu0 %v773, 24
        %v788 = vpop.permute.xlu0 %787
        %v790 = vsel %vm331, %v434, %v780
        %vm791 = vcmask 130048
        %v792 = vsel %vm791, %v790, %v784
        %vm793 = vcmask 195584
        %v794 = vsel %vm793, %v792, %v788
        %vm795 = vcmask 261120
        %796 = vst.msk [vmem:[%s320] sm:$0xff] %vm795, %v794
        %s797 = sand.u32 %s139, 1
        %s798 = scalar_lea.sflag [#allocation4], %s797
        %s799 = sand.u32 %s139, 1
        %s800 = smul.addr %s799, 8
        %s801 = scalar_lea.vmem [#allocation10], %s800
        // Predicated region
        $region53: #{transformer_forward.34} parent=35 // pred_check
          %p802 = pneg %p149
        $region54: #{transformer_forward.34} parent=35 // pred_check_branch
          %804 = sbr.rel (%p802) target = $region56
        $region55: #{transformer_forward.34} parent=35 // pred_region
          %s806 = ssub.s32 128, 128
          %807 = vsyncadd %s798, %s806
          %s808 = smul.addr %s27, 128
          %s809 = scalar_lea.hbm %s4, %s808
          %s811 = sshll.u32 %s801, 4
          %s812 = int_to_ptr.vmem [resolvable:$true] %s811
          %814 = dma.vmem_to_hbm [thread:$0]  %s812, 128, %s809, %s798
        $region56: #{transformer_forward.34} parent=35 // pred_fallthru
          _
      $region36: #{transformer_forward.34} parent=5 // pred_fallthru
        _
      %p815 = scmp.le.s32.totalorder 2, %s22
      // Predicated region
      $region57: #{transformer_forward.34} parent=5 // pred_check
        %p816 = pneg %p815
      $region58: #{transformer_forward.34} parent=5 // pred_check_branch
        %818 = sbr.rel (%p816) target = $region60
      $region59: #{transformer_forward.34} parent=5 // pred_region
        %s819 = ssub.s32 %s22, 2
        // Predicated region
        $region61: #{transformer_forward.34} parent=59 // pred_check
          %p820 = pneg %p155
        $region62: #{transformer_forward.34} parent=59 // pred_check_branch
          %822 = sbr.rel (%p820) target = $region64
        $region63: #{transformer_forward.34} parent=59 // pred_region
          %s823 = sand.u32 %s140, 1
          %s824 = scalar_lea.sflag [#allocation4], %s823
          %s825 = sand.u32 %s140, 1
          %s826 = smul.addr %s825, 8
          %s827 = scalar_lea.vmem [#allocation10], %s826
          %828 = dma.done %s824, 128
        $region64: #{transformer_forward.34} parent=59 // pred_fallthru
          _
      $region60: #{transformer_forward.34} parent=5 // pred_fallthru
        _
    $region6: #{transformer_forward.34} parent=1 // loop_footer
      %s26 = sadd.s32 1, %s22
    $region7: #{transformer_forward.34} parent=1 // loop_footer_branch
      %21 = sbr.rel target = $region3
    $region8: #{transformer_forward.34} parent=1 // loop_exit
      _
    %829 = vsyncpa [#allocation3], 1
    %s830 = scalar_lea.sflag [#allocation3], 1
    %831 = vsyncpa %s830, 1
    %832 = vsyncpa [#allocation6], 1
    %s833 = scalar_lea.sflag [#allocation6], 1
    %834 = vsyncpa %s833, 1
    %835 = vsyncpa [#allocation9], 1
    %s836 = scalar_lea.sflag [#allocation9], 1
    %837 = vsyncpa %s836, 1
    %838 = vsyncpa [#allocation4], 1
    %s839 = scalar_lea.sflag [#allocation4], 1
    %840 = vsyncpa %s839, 1

// kernel: transformer_forward.49
$region0: #{transformer_forward.49}
  #allocation0 [shape = 'u32[]', space=smem, size = 0x4, offset = 0x4, fixed_abs, tag = 'smem constant byte address 0x4 - core index']
  #allocation1 [shape = 'u32[144,128]{1,0:T(1,128)}', space=vmem, size = 0x12000, scoped, tag = 'internal scratch']
  #allocation2 [shape = 'f32[16,50]{1,0:T(8,128)}', space=vmem, size = 0x2000, scoped, tag = 'scratch operand']
  %s0 = inlined_call_operand.hbm [shape: f32[16,32], index: 0, kind: input, shape index: {}]
  %s1 = inlined_call_operand.hbm [shape: bf16[32,50], index: 1, kind: input, shape index: {}]
  %s2 = inlined_call_operand.hbm [shape: f32[1,50], index: 2, kind: input, shape index: {}]
  %s3 = inlined_call_operand.hbm [shape: f32[16,50], index: 3, kind: output, shape index: {}]
  %s4 = sld [smem:[#allocation0]]
  $region42: #{transformer_forward.49} parent=0
    _
  %s6 = ssub.s32 1, %s4
  %s7 = scalar_select 0, %s6, %s4
  $region1: #{transformer_forward.49} parent=0
    #allocation3 [shape = 'u8[8192]{0}', space=vmem, size = 0x2000, scoped, tag = 'input window, operand 0, single buffered']
    #allocation4 [shape = 's32[1]{0}', space=sflag, size = 0x4, scoped, tag = 'scoped memory for transformer_forward.49']
    #allocation5 [shape = 's32[1]{0}', space=sflag, size = 0x4, scoped, tag = 'scoped memory for transformer_forward.49']
    #allocation6 [shape = 'u8[8192]{0}', space=vmem, size = 0x2000, scoped, tag = 'input window, operand 1, single buffered']
    #allocation7 [shape = 's32[1]{0}', space=sflag, size = 0x4, scoped, tag = 'scoped memory for transformer_forward.49']
    #allocation8 [shape = 'u8[512]{0}', space=vmem, size = 0x400, scoped, tag = 'input window, operand 2, single buffered']
    #allocation9 [shape = 'u8[8192]{0}', space=vmem, size = 0x2000, scoped, tag = 'output window, operand 0, single buffered']
    %8 = vsyncpa [#allocation4], 0
    %9 = vsyncpa [#allocation7], 0
    %10 = vsyncpa [#allocation5], 0
    // Predicated region
    $region2: #{transformer_forward.49} parent=1 // pred_check
      _
    $region3: #{transformer_forward.49} parent=1 // pred_check_branch
      %12 = sbr.rel (0) target = $region5
    $region4: #{transformer_forward.49} parent=1 // pred_region
      %s14 = ssub.s32 256, 256
      %15 = vsyncadd [#allocation4], %s14
      %s16 = sshll.u32 [#allocation3], 4
      %s17 = int_to_ptr.vmem [resolvable:$true] %s16
      %22 = dma.hbm_to_vmem [thread:$0]  %s0, 256, %s17, [#allocation4], 128, 128, 8
    $region5: #{transformer_forward.49} parent=1 // pred_fallthru
      _
    // Predicated region
    $region6: #{transformer_forward.49} parent=1 // pred_check
      _
    $region7: #{transformer_forward.49} parent=1 // pred_check_branch
      %24 = sbr.rel (0) target = $region9
    $region8: #{transformer_forward.49} parent=1 // pred_region
      %s26 = ssub.s32 256, 256
      %27 = vsyncadd [#allocation7], %s26
      %s28 = sshll.u32 [#allocation6], 4
      %s29 = int_to_ptr.vmem [resolvable:$true] %s28
      %34 = dma.hbm_to_vmem [thread:$0]  %s1, 256, %s29, [#allocation7], 64, 64, 4
    $region9: #{transformer_forward.49} parent=1 // pred_fallthru
      _
    // Predicated region
    $region10: #{transformer_forward.49} parent=1 // pred_check
      _
    $region11: #{transformer_forward.49} parent=1 // pred_check_branch
      %36 = sbr.rel (0) target = $region13
    $region12: #{transformer_forward.49} parent=1 // pred_region
      %s38 = ssub.s32 16, 16
      %39 = vsyncadd [#allocation7], %s38
      %s41 = sshll.u32 [#allocation8], 4
      %s42 = int_to_ptr.vmem [resolvable:$true] %s41
      %44 = dma.hbm_to_vmem [thread:$0]  %s2, 16, %s42, [#allocation7]
    $region13: #{transformer_forward.49} parent=1 // pred_fallthru
      _
    // Predicated region
    $region14: #{transformer_forward.49} parent=1 // pred_check
      _
    $region15: #{transformer_forward.49} parent=1 // pred_check_branch
      %46 = sbr.rel (0) target = $region17
    $region16: #{transformer_forward.49} parent=1 // pred_region
      %47 = dma.done [#allocation4], 256
    $region17: #{transformer_forward.49} parent=1 // pred_fallthru
      _
    // Predicated region
    $region18: #{transformer_forward.49} parent=1 // pred_check
      _
    $region19: #{transformer_forward.49} parent=1 // pred_check_branch
      %49 = sbr.rel (0) target = $region21
    $region20: #{transformer_forward.49} parent=1 // pred_region
      %50 = dma.done [#allocation7], 256
    $region21: #{transformer_forward.49} parent=1 // pred_fallthru
      _
    // Predicated region
    $region22: #{transformer_forward.49} parent=1 // pred_check
      _
    $region23: #{transformer_forward.49} parent=1 // pred_check_branch
      %52 = sbr.rel (0) target = $region25
    $region24: #{transformer_forward.49} parent=1 // pred_region
      %53 = dma.done [#allocation7], 16
    $region25: #{transformer_forward.49} parent=1 // pred_fallthru
      _
    %p55 = scmp.eq.s32.totalorder 0, 0
    // Predicated region
    $region26: #{transformer_forward.49} parent=1 // pred_check
      %p56 = pneg %p55
    $region27: #{transformer_forward.49} parent=1 // pred_check_branch
      %58 = sbr.rel (%p56) target = $region29
    $region28: #{transformer_forward.49} parent=1 // pred_region
      %vm59 = vcmask 408576
      %60 = vst.msk [vmem:[#allocation2] sm:$0xff] %vm59, 0.0
      %61 = vst.msk [vmem:[#allocation2 + $0x8] sm:$0xff] %vm59, 0.0
    $region29: #{transformer_forward.49} parent=1 // pred_fallthru
      _
    %v62 = vld [vmem:[#allocation2] sm:$0xff]
    %v63 = vld [vmem:[#allocation2 + $0x8] sm:$0xff]
    %v64 = vld [vmem:[#allocation3] sm:$0xff]
    %v65 = vld [vmem:[#allocation3 + $0x8] sm:$0xff]
    %v66 = vpack.c.bf16 %v65, %v64
    %v67 = vld [vmem:[#allocation6] sm:$0xf]
    %v68 = vld [vmem:[#allocation6 + $0x4] sm:$0xf]
    %v69 = vld [vmem:[#allocation6 + $0x8] sm:$0xf]
    %v70 = vld [vmem:[#allocation6 + $0xc] sm:$0xf]
    %v75 = vunpack.c.l.b16 %v67
    %v76 = vunpack.c.l.b16 %v68
    %v77 = vunpack.c.l.b16 %v69
    %v78 = vunpack.c.l.b16 %v70
    %v79 = vpack.c.b16 %v76, %v75
    %v80 = vpack.c.b16 %v78, %v77
    %vm83 = vcmask 261120
    %v85 = vsel %vm83, %v66, 0
    %87 = vmatprep.subr.bf16.mxu0 0
    %88 = vmatpush1.bf16.msra.mxu0 %v79
    %89 = vmatprep.subr.bf16.mxu0 0
    %90 = vmatpush1.bf16.msra.mxu0 %v80
    %91 = vmatprep.subr.bf16.mxu0 0
    %92 = vmatpush1.bf16.msra.mxu0 0
    %93 = vmatprep.subr.bf16.mxu0 0
    %94 = vmatpush1.bf16.msra.mxu0 0
    %95 = vmatprep.subr.bf16.mxu0 0
    %96 = vmatpush1.bf16.msra.mxu0 0
    %97 = vmatprep.subr.bf16.mxu0 0
    %98 = vmatpush1.bf16.msra.mxu0 0
    %99 = vmatprep.subr.bf16.mxu0 0
    %100 = vmatpush1.bf16.msra.mxu0 0
    %101 = vmatprep.subr.bf16.mxu0 0
    %102 = vmatpush1.bf16.msra.mxu0 0
    %103 = vmatprep.subr.bf16.mxu0 0
    %104 = vmatpush1.bf16.msra.mxu0 0
    %105 = vmatprep.subr.bf16.mxu0 0
    %106 = vmatpush1.bf16.msra.mxu0 0
    %107 = vmatprep.subr.bf16.mxu0 0
    %108 = vmatpush1.bf16.msra.mxu0 0
    %109 = vmatprep.subr.bf16.mxu0 0
    %110 = vmatpush1.bf16.msra.mxu0 0
    %111 = vmatprep.subr.bf16.mxu0 0
    %112 = vmatpush1.bf16.msra.mxu0 0
    %113 = vmatprep.subr.bf16.mxu0 0
    %114 = vmatpush1.bf16.msra.mxu0 0
    %115 = vmatprep.subr.bf16.mxu0 0
    %116 = vmatpush1.bf16.msra.mxu0 0
    %117 = vmatprep.subr.bf16.mxu0 0
    %118 = vmatpush1.bf16.msra.mxu0 0
    %119 = vmatprep.mubr.bf16.mxu0 0
    %120 = vmatmul.mubr.bf16.gmra.mrb[0].mxu0 %v85
    %v121 = vpop.f32.mrb[0].mxu0
    %v122 = vadd.f32 0.0, %v121
    %v123 = vpop.f32.mrb[0].mxu0
    %v124 = vpop.f32.mrb[0].mxu0
    %v125 = vadd.f32 0.0, %v124
    %v126 = vpop.f32.mrb[0].mxu0
    %127 = vdwg.mxu0
    %v128 = vadd.f32 %v62, %v122
    %v129 = vadd.f32 %v63, %v125
    %vm130 = vcmask 408576
    %131 = vst.msk [vmem:[#allocation2] sm:$0xff] %vm130, %v128
    %132 = vst.msk [vmem:[#allocation2 + $0x8] sm:$0xff] %vm130, %v129
    // Predicated region
    $region30: #{transformer_forward.49} parent=1 // pred_check
      %p133 = pneg %p55
    $region31: #{transformer_forward.49} parent=1 // pred_check_branch
      %135 = sbr.rel (%p133) target = $region33
    $region32: #{transformer_forward.49} parent=1 // pred_region
      %v136 = vld [vmem:[#allocation2] sm:$0xff]
      %v137 = vld [vmem:[#allocation2 + $0x8] sm:$0xff]
      %v138 = vld [vmem:[#allocation8] sm:$0x1]
      %v140 = vlaneseq
      %v141 = vshrl.u32 %v140, 7
      %v142 = vsub.s32 0, %v141
      %v143 = vrot.slane %v138, %v142
      %v145 = vadd.f32 %v136, %v143
      %v146 = vadd.f32 %v137, %v143
      %147 = vst.msk [vmem:[#allocation9] sm:$0xff] %vm130, %v145
      %148 = vst.msk [vmem:[#allocation9 + $0x8] sm:$0xff] %vm130, %v146
    $region33: #{transformer_forward.49} parent=1 // pred_fallthru
      _
    // Predicated region
    $region34: #{transformer_forward.49} parent=1 // pred_check
      _
    $region35: #{transformer_forward.49} parent=1 // pred_check_branch
      %150 = sbr.rel (0) target = $region37
    $region36: #{transformer_forward.49} parent=1 // pred_region
      %s152 = ssub.s32 256, 256
      %153 = vsyncadd [#allocation5], %s152
      %s154 = sshll.u32 [#allocation9], 4
      %s155 = int_to_ptr.vmem [resolvable:$true] %s154
      %160 = dma.vmem_to_hbm [thread:$0]  %s155, 256, %s3, [#allocation5], 128, 128, 8
    $region37: #{transformer_forward.49} parent=1 // pred_fallthru
      _
    // Predicated region
    $region38: #{transformer_forward.49} parent=1 // pred_check
      _
    $region39: #{transformer_forward.49} parent=1 // pred_check_branch
      %162 = sbr.rel (0) target = $region41
    $region40: #{transformer_forward.49} parent=1 // pred_region
      %163 = dma.done [#allocation5], 256
    $region41: #{transformer_forward.49} parent=1 // pred_fallthru
      _
    %164 = vsyncpa [#allocation4], 1
    %165 = vsyncpa [#allocation7], 1
    %166 = vsyncpa [#allocation5], 1

// kernel: transformer_forward.37
$region0: #{transformer_forward.37}
  #allocation0 [shape = 'u32[]', space=smem, size = 0x4, offset = 0x4, fixed_abs, tag = 'smem constant byte address 0x4 - core index']
  #allocation1 [shape = 'u32[144,128]{1,0:T(1,128)}', space=vmem, size = 0x12000, scoped, tag = 'internal scratch']
  %s0 = inlined_call_operand.hbm [shape: f32[16,32], index: 0, kind: input, shape index: {}]
  %s1 = inlined_call_operand.hbm [shape: bf16[32,32], index: 1, kind: input, shape index: {}]
  %s2 = inlined_call_operand.hbm [shape: bf16[32,32], index: 2, kind: input, shape index: {}]
  %s3 = inlined_call_operand.hbm [shape: f32[1,32], index: 3, kind: input, shape index: {}]
  %s4 = inlined_call_operand.hbm [shape: f32[1,32], index: 4, kind: input, shape index: {}]
  %s5 = inlined_call_operand.hbm [shape: f32[16,32], index: 5, kind: output, shape index: {0}]
  %s6 = inlined_call_operand.hbm [shape: f32[16,32], index: 6, kind: output, shape index: {1}]
  %7 = xla_tuple %s5, %s6
  %s8 = sld [smem:[#allocation0]]
  $region58: #{transformer_forward.37} parent=0
    _
  %s10 = ssub.s32 1, %s8
  %s11 = scalar_select 0, %s10, %s8
  $region1: #{transformer_forward.37} parent=0
    #allocation2 [shape = 'u8[8192]{0}', space=vmem, size = 0x2000, scoped, tag = 'input window, operand 0, single buffered']
    #allocation3 [shape = 's32[1]{0}', space=sflag, size = 0x4, scoped, tag = 'scoped memory for transformer_forward.37']
    #allocation4 [shape = 's32[1]{0}', space=sflag, size = 0x4, scoped, tag = 'scoped memory for transformer_forward.37']
    #allocation5 [shape = 'u8[8192]{0}', space=vmem, size = 0x2000, scoped, tag = 'input window, operand 1, single buffered']
    #allocation6 [shape = 's32[1]{0}', space=sflag, size = 0x4, scoped, tag = 'scoped memory for transformer_forward.37']
    #allocation7 [shape = 'u8[8192]{0}', space=vmem, size = 0x2000, scoped, tag = 'input window, operand 2, single buffered']
    #allocation8 [shape = 'u8[512]{0}', space=vmem, size = 0x400, scoped, tag = 'input window, operand 3, single buffered']
    #allocation9 [shape = 's32[1]{0}', space=sflag, size = 0x4, scoped, tag = 'scoped memory for transformer_forward.37']
    #allocation10 [shape = 'u8[512]{0}', space=vmem, size = 0x400, scoped, tag = 'input window, operand 4, single buffered']
    #allocation11 [shape = 'u8[8192]{0}', space=vmem, size = 0x2000, scoped, tag = 'output window, operand 0, single buffered']
    #allocation12 [shape = 'u8[8192]{0}', space=vmem, size = 0x2000, scoped, tag = 'output window, operand 1, single buffered']
    #allocation13 [shape = 's32[1]{0}', space=sflag, size = 0x4, scoped, tag = 'scoped memory for transformer_forward.37']
    %12 = vsyncpa [#allocation3], 0
    %13 = vsyncpa [#allocation6], 0
    %14 = vsyncpa [#allocation9], 0
    %15 = vsyncpa [#allocation4], 0
    %16 = vsyncpa [#allocation13], 0
    // Predicated region
    $region2: #{transformer_forward.37} parent=1 // pred_check
      _
    $region3: #{transformer_forward.37} parent=1 // pred_check_branch
      %18 = sbr.rel (0) target = $region5
    $region4: #{transformer_forward.37} parent=1 // pred_region
      %s20 = ssub.s32 256, 256
      %21 = vsyncadd [#allocation3], %s20
      %s22 = sshll.u32 [#allocation2], 4
      %s23 = int_to_ptr.vmem [resolvable:$true] %s22
      %28 = dma.hbm_to_vmem [thread:$0]  %s0, 256, %s23, [#allocation3], 128, 128, 8
    $region5: #{transformer_forward.37} parent=1 // pred_fallthru
      _
    // Predicated region
    $region6: #{transformer_forward.37} parent=1 // pred_check
      _
    $region7: #{transformer_forward.37} parent=1 // pred_check_branch
      %30 = sbr.rel (0) target = $region9
    $region8: #{transformer_forward.37} parent=1 // pred_region
      %s32 = ssub.s32 256, 256
      %33 = vsyncadd [#allocation6], %s32
      %s34 = sshll.u32 [#allocation5], 4
      %s35 = int_to_ptr.vmem [resolvable:$true] %s34
      %40 = dma.hbm_to_vmem [thread:$0]  %s1, 256, %s35, [#allocation6], 64, 64, 4
    $region9: #{transformer_forward.37} parent=1 // pred_fallthru
      _
    // Predicated region
    $region10: #{transformer_forward.37} parent=1 // pred_check
      _
    $region11: #{transformer_forward.37} parent=1 // pred_check_branch
      %42 = sbr.rel (0) target = $region13
    $region12: #{transformer_forward.37} parent=1 // pred_region
      %s44 = ssub.s32 256, 256
      %45 = vsyncadd [#allocation6], %s44
      %s46 = sshll.u32 [#allocation7], 4
      %s47 = int_to_ptr.vmem [resolvable:$true] %s46
      %52 = dma.hbm_to_vmem [thread:$0]  %s2, 256, %s47, [#allocation6], 64, 64, 4
    $region13: #{transformer_forward.37} parent=1 // pred_fallthru
      _
    // Predicated region
    $region14: #{transformer_forward.37} parent=1 // pred_check
      _
    $region15: #{transformer_forward.37} parent=1 // pred_check_branch
      %54 = sbr.rel (0) target = $region17
    $region16: #{transformer_forward.37} parent=1 // pred_region
      %s56 = ssub.s32 16, 16
      %57 = vsyncadd [#allocation9], %s56
      %s59 = sshll.u32 [#allocation8], 4
      %s60 = int_to_ptr.vmem [resolvable:$true] %s59
      %62 = dma.hbm_to_vmem [thread:$0]  %s3, 16, %s60, [#allocation9]
    $region17: #{transformer_forward.37} parent=1 // pred_fallthru
      _
    // Predicated region
    $region18: #{transformer_forward.37} parent=1 // pred_check
      _
    $region19: #{transformer_forward.37} parent=1 // pred_check_branch
      %64 = sbr.rel (0) target = $region21
    $region20: #{transformer_forward.37} parent=1 // pred_region
      %s66 = ssub.s32 16, 16
      %67 = vsyncadd [#allocation9], %s66
      %s69 = sshll.u32 [#allocation10], 4
      %s70 = int_to_ptr.vmem [resolvable:$true] %s69
      %72 = dma.hbm_to_vmem [thread:$0]  %s4, 16, %s70, [#allocation9]
    $region21: #{transformer_forward.37} parent=1 // pred_fallthru
      _
    // Predicated region
    $region22: #{transformer_forward.37} parent=1 // pred_check
      _
    $region23: #{transformer_forward.37} parent=1 // pred_check_branch
      %74 = sbr.rel (0) target = $region25
    $region24: #{transformer_forward.37} parent=1 // pred_region
      %75 = dma.done [#allocation3], 256
    $region25: #{transformer_forward.37} parent=1 // pred_fallthru
      _
    // Predicated region
    $region26: #{transformer_forward.37} parent=1 // pred_check
      _
    $region27: #{transformer_forward.37} parent=1 // pred_check_branch
      %77 = sbr.rel (0) target = $region29
    $region28: #{transformer_forward.37} parent=1 // pred_region
      %78 = dma.done [#allocation6], 256
    $region29: #{transformer_forward.37} parent=1 // pred_fallthru
      _
    // Predicated region
    $region30: #{transformer_forward.37} parent=1 // pred_check
      _
    $region31: #{transformer_forward.37} parent=1 // pred_check_branch
      %80 = sbr.rel (0) target = $region33
    $region32: #{transformer_forward.37} parent=1 // pred_region
      %81 = dma.done [#allocation6], 256
    $region33: #{transformer_forward.37} parent=1 // pred_fallthru
      _
    // Predicated region
    $region34: #{transformer_forward.37} parent=1 // pred_check
      _
    $region35: #{transformer_forward.37} parent=1 // pred_check_branch
      %83 = sbr.rel (0) target = $region37
    $region36: #{transformer_forward.37} parent=1 // pred_region
      %84 = dma.done [#allocation9], 16
    $region37: #{transformer_forward.37} parent=1 // pred_fallthru
      _
    // Predicated region
    $region38: #{transformer_forward.37} parent=1 // pred_check
      _
    $region39: #{transformer_forward.37} parent=1 // pred_check_branch
      %86 = sbr.rel (0) target = $region41
    $region40: #{transformer_forward.37} parent=1 // pred_region
      %87 = dma.done [#allocation9], 16
    $region41: #{transformer_forward.37} parent=1 // pred_fallthru
      _
    %v89 = vld [vmem:[#allocation2] sm:$0xff]
    %v90 = vld [vmem:[#allocation2 + $0x8] sm:$0xff]
    %v91 = vpack.c.bf16 %v90, %v89
    %v92 = vld [vmem:[#allocation5] sm:$0xf]
    %v93 = vld [vmem:[#allocation5 + $0x4] sm:$0xf]
    %v94 = vld [vmem:[#allocation5 + $0x8] sm:$0xf]
    %v95 = vld [vmem:[#allocation5 + $0xc] sm:$0xf]
    %v96 = vld [vmem:[#allocation8] sm:$0x1]
    %v98 = vlaneseq
    %v99 = vshrl.u32 %v98, 7
    %v100 = vsub.s32 0, %v99
    %v101 = vrot.slane %v96, %v100
    %v107 = vunpack.c.l.b16 %v92
    %v108 = vunpack.c.l.b16 %v93
    %v109 = vunpack.c.l.b16 %v94
    %v110 = vunpack.c.l.b16 %v95
    %v111 = vpack.c.b16 %v108, %v107
    %v112 = vpack.c.b16 %v110, %v109
    %vm115 = vcmask 261120
    %v117 = vsel %vm115, %v91, 0
    %119 = vmatprep.subr.bf16.mxu0 0
    %120 = vmatpush1.bf16.msra.mxu0 %v111
    %121 = vmatprep.subr.bf16.mxu0 0
    %122 = vmatpush1.bf16.msra.mxu0 %v112
    %123 = vmatprep.subr.bf16.mxu0 0
    %124 = vmatpush1.bf16.msra.mxu0 0
    %125 = vmatprep.subr.bf16.mxu0 0
    %126 = vmatpush1.bf16.msra.mxu0 0
    %127 = vmatprep.subr.bf16.mxu0 0
    %128 = vmatpush1.bf16.msra.mxu0 0
    %129 = vmatprep.subr.bf16.mxu0 0
    %130 = vmatpush1.bf16.msra.mxu0 0
    %131 = vmatprep.subr.bf16.mxu0 0
    %132 = vmatpush1.bf16.msra.mxu0 0
    %133 = vmatprep.subr.bf16.mxu0 0
    %134 = vmatpush1.bf16.msra.mxu0 0
    %135 = vmatprep.subr.bf16.mxu0 0
    %136 = vmatpush1.bf16.msra.mxu0 0
    %137 = vmatprep.subr.bf16.mxu0 0
    %138 = vmatpush1.bf16.msra.mxu0 0
    %139 = vmatprep.subr.bf16.mxu0 0
    %140 = vmatpush1.bf16.msra.mxu0 0
    %141 = vmatprep.subr.bf16.mxu0 0
    %142 = vmatpush1.bf16.msra.mxu0 0
    %143 = vmatprep.subr.bf16.mxu0 0
    %144 = vmatpush1.bf16.msra.mxu0 0
    %145 = vmatprep.subr.bf16.mxu0 0
    %146 = vmatpush1.bf16.msra.mxu0 0
    %147 = vmatprep.subr.bf16.mxu0 0
    %148 = vmatpush1.bf16.msra.mxu0 0
    %149 = vmatprep.subr.bf16.mxu0 0
    %150 = vmatpush1.bf16.msra.mxu0 0
    %151 = vmatprep.mubr.bf16.mxu0 0
    %152 = vmatmul.mubr.bf16.gmra.mrb[0].mxu0 %v117
    %v153 = vpop.f32.mrb[0].mxu0
    %v154 = vadd.f32 %v101, %v153
    %v155 = vpop.f32.mrb[0].mxu0
    %v156 = vpop.f32.mrb[0].mxu0
    %v157 = vadd.f32 %v101, %v156
    %v158 = vpop.f32.mrb[0].mxu0
    %159 = vdwg.mxu0
    %160 = vst.msk [vmem:[#allocation11] sm:$0xff] %vm115, %v154
    %161 = vst.msk [vmem:[#allocation11 + $0x8] sm:$0xff] %vm115, %v157
    %v162 = vld [vmem:[#allocation7] sm:$0xf]
    %v163 = vld [vmem:[#allocation7 + $0x4] sm:$0xf]
    %v164 = vld [vmem:[#allocation7 + $0x8] sm:$0xf]
    %v165 = vld [vmem:[#allocation7 + $0xc] sm:$0xf]
    %v166 = vld [vmem:[#allocation10] sm:$0x1]
    %v168 = vlaneseq
    %v169 = vshrl.u32 %v168, 7
    %v170 = vsub.s32 0, %v169
    %v171 = vrot.slane %v166, %v170
    %v177 = vunpack.c.l.b16 %v162
    %v178 = vunpack.c.l.b16 %v163
    %v179 = vunpack.c.l.b16 %v164
    %v180 = vunpack.c.l.b16 %v165
    %v181 = vpack.c.b16 %v178, %v177
    %v182 = vpack.c.b16 %v180, %v179
    %185 = vmatprep.subr.bf16.mxu0 0
    %186 = vmatpush1.bf16.msra.mxu0 %v181
    %187 = vmatprep.subr.bf16.mxu0 0
    %188 = vmatpush1.bf16.msra.mxu0 %v182
    %189 = vmatprep.subr.bf16.mxu0 0
    %190 = vmatpush1.bf16.msra.mxu0 0
    %191 = vmatprep.subr.bf16.mxu0 0
    %192 = vmatpush1.bf16.msra.mxu0 0
    %193 = vmatprep.subr.bf16.mxu0 0
    %194 = vmatpush1.bf16.msra.mxu0 0
    %195 = vmatprep.subr.bf16.mxu0 0
    %196 = vmatpush1.bf16.msra.mxu0 0
    %197 = vmatprep.subr.bf16.mxu0 0
    %198 = vmatpush1.bf16.msra.mxu0 0
    %199 = vmatprep.subr.bf16.mxu0 0
    %200 = vmatpush1.bf16.msra.mxu0 0
    %201 = vmatprep.subr.bf16.mxu0 0
    %202 = vmatpush1.bf16.msra.mxu0 0
    %203 = vmatprep.subr.bf16.mxu0 0
    %204 = vmatpush1.bf16.msra.mxu0 0
    %205 = vmatprep.subr.bf16.mxu0 0
    %206 = vmatpush1.bf16.msra.mxu0 0
    %207 = vmatprep.subr.bf16.mxu0 0
    %208 = vmatpush1.bf16.msra.mxu0 0
    %209 = vmatprep.subr.bf16.mxu0 0
    %210 = vmatpush1.bf16.msra.mxu0 0
    %211 = vmatprep.subr.bf16.mxu0 0
    %212 = vmatpush1.bf16.msra.mxu0 0
    %213 = vmatprep.subr.bf16.mxu0 0
    %214 = vmatpush1.bf16.msra.mxu0 0
    %215 = vmatprep.subr.bf16.mxu0 0
    %216 = vmatpush1.bf16.msra.mxu0 0
    %217 = vmatprep.mubr.bf16.mxu0 0
    %218 = vmatmul.mubr.bf16.gmra.mrb[0].mxu0 %v117
    %v219 = vpop.f32.mrb[0].mxu0
    %v220 = vadd.f32 %v171, %v219
    %v221 = vpop.f32.mrb[0].mxu0
    %v222 = vpop.f32.mrb[0].mxu0
    %v223 = vadd.f32 %v171, %v222
    %v224 = vpop.f32.mrb[0].mxu0
    %225 = vdwg.mxu0
    %226 = vst.msk [vmem:[#allocation12] sm:$0xff] %vm115, %v220
    %227 = vst.msk [vmem:[#allocation12 + $0x8] sm:$0xff] %vm115, %v223
    // Predicated region
    $region42: #{transformer_forward.37} parent=1 // pred_check
      _
    $region43: #{transformer_forward.37} parent=1 // pred_check_branch
      %229 = sbr.rel (0) target = $region45
    $region44: #{transformer_forward.37} parent=1 // pred_region
      %s231 = ssub.s32 256, 256
      %232 = vsyncadd [#allocation4], %s231
      %s233 = sshll.u32 [#allocation11], 4
      %s234 = int_to_ptr.vmem [resolvable:$true] %s233
      %239 = dma.vmem_to_hbm [thread:$0]  %s234, 256, %s5, [#allocation4], 128, 128, 8
    $region45: #{transformer_forward.37} parent=1 // pred_fallthru
      _
    // Predicated region
    $region46: #{transformer_forward.37} parent=1 // pred_check
      _
    $region47: #{transformer_forward.37} parent=1 // pred_check_branch
      %241 = sbr.rel (0) target = $region49
    $region48: #{transformer_forward.37} parent=1 // pred_region
      %s243 = ssub.s32 256, 256
      %244 = vsyncadd [#allocation13], %s243
      %s245 = sshll.u32 [#allocation12], 4
      %s246 = int_to_ptr.vmem [resolvable:$true] %s245
      %251 = dma.vmem_to_hbm [thread:$0]  %s246, 256, %s6, [#allocation13], 128, 128, 8
    $region49: #{transformer_forward.37} parent=1 // pred_fallthru
      _
    // Predicated region
    $region50: #{transformer_forward.37} parent=1 // pred_check
      _
    $region51: #{transformer_forward.37} parent=1 // pred_check_branch
      %253 = sbr.rel (0) target = $region53
    $region52: #{transformer_forward.37} parent=1 // pred_region
      %254 = dma.done [#allocation4], 256
    $region53: #{transformer_forward.37} parent=1 // pred_fallthru
      _
    // Predicated region
    $region54: #{transformer_forward.37} parent=1 // pred_check
      _
    $region55: #{transformer_forward.37} parent=1 // pred_check_branch
      %256 = sbr.rel (0) target = $region57
    $region56: #{transformer_forward.37} parent=1 // pred_region
      %257 = dma.done [#allocation13], 256
    $region57: #{transformer_forward.37} parent=1 // pred_fallthru
      _
    %258 = vsyncpa [#allocation3], 1
    %259 = vsyncpa [#allocation6], 1
    %260 = vsyncpa [#allocation9], 1
    %261 = vsyncpa [#allocation4], 1
    %262 = vsyncpa [#allocation13], 1

// kernel: transformer_forward.28
$region0: #{transformer_forward.28}
  #allocation0 [shape = 'u32[]', space=smem, size = 0x4, offset = 0x4, fixed_abs, tag = 'smem constant byte address 0x4 - core index']
  #allocation1 [shape = 'u32[144,128]{1,0:T(1,128)}', space=vmem, size = 0x12000, scoped, tag = 'internal scratch']
  %s0 = inlined_call_operand.hbm [shape: f32[16,32], index: 0, kind: input, shape index: {}]
  %s1 = inlined_call_operand.hbm [shape: bf16[32,64], index: 1, kind: input, shape index: {}]
  %s2 = inlined_call_operand.hbm [shape: f32[1,64], index: 2, kind: input, shape index: {}]
  %s3 = inlined_call_operand.hbm [shape: bf16[64,32], index: 3, kind: input, shape index: {}]
  %s4 = inlined_call_operand.hbm [shape: f32[1,32], index: 4, kind: input, shape index: {}]
  %s5 = inlined_call_operand.hbm [shape: f32[1,32], index: 5, kind: input, shape index: {}]
  %s6 = inlined_call_operand.hbm [shape: f32[1,32], index: 6, kind: input, shape index: {}]
  %s7 = inlined_call_operand.hbm [shape: f32[16,32], index: 7, kind: output, shape index: {}]
  %s8 = sld [smem:[#allocation0]]
  $region66: #{transformer_forward.28} parent=0
    _
  %s10 = ssub.s32 1, %s8
  %s11 = scalar_select 0, %s10, %s8
  $region1: #{transformer_forward.28} parent=0
    #allocation2 [shape = 'u8[8192]{0}', space=vmem, size = 0x2000, scoped, tag = 'input window, operand 0, single buffered']
    #allocation3 [shape = 's32[1]{0}', space=sflag, size = 0x4, scoped, tag = 'scoped memory for transformer_forward.28']
    #allocation4 [shape = 's32[1]{0}', space=sflag, size = 0x4, scoped, tag = 'scoped memory for transformer_forward.28']
    #allocation5 [shape = 'u8[8192]{0}', space=vmem, size = 0x2000, scoped, tag = 'input window, operand 1, single buffered']
    #allocation6 [shape = 's32[1]{0}', space=sflag, size = 0x4, scoped, tag = 'scoped memory for transformer_forward.28']
    #allocation7 [shape = 'u8[512]{0}', space=vmem, size = 0x400, scoped, tag = 'input window, operand 2, single buffered']
    #allocation8 [shape = 'u8[16384]{0}', space=vmem, size = 0x4000, scoped, tag = 'input window, operand 3, single buffered']
    #allocation9 [shape = 's32[1]{0}', space=sflag, size = 0x4, scoped, tag = 'scoped memory for transformer_forward.28']
    #allocation10 [shape = 'u8[512]{0}', space=vmem, size = 0x400, scoped, tag = 'input window, operand 4, single buffered']
    #allocation11 [shape = 'u8[512]{0}', space=vmem, size = 0x400, scoped, tag = 'input window, operand 5, single buffered']
    #allocation12 [shape = 's32[1]{0}', space=sflag, size = 0x4, scoped, tag = 'scoped memory for transformer_forward.28']
    #allocation13 [shape = 'u8[512]{0}', space=vmem, size = 0x400, scoped, tag = 'input window, operand 6, single buffered']
    #allocation14 [shape = 'u8[8192]{0}', space=vmem, size = 0x2000, scoped, tag = 'output window, operand 0, single buffered']
    %12 = vsyncpa [#allocation3], 0
    %13 = vsyncpa [#allocation6], 0
    %14 = vsyncpa [#allocation9], 0
    %15 = vsyncpa [#allocation12], 0
    %16 = vsyncpa [#allocation4], 0
    // Predicated region
    $region2: #{transformer_forward.28} parent=1 // pred_check
      _
    $region3: #{transformer_forward.28} parent=1 // pred_check_branch
      %18 = sbr.rel (0) target = $region5
    $region4: #{transformer_forward.28} parent=1 // pred_region
      %s20 = ssub.s32 256, 256
      %21 = vsyncadd [#allocation3], %s20
      %s22 = sshll.u32 [#allocation2], 4
      %s23 = int_to_ptr.vmem [resolvable:$true] %s22
      %28 = dma.hbm_to_vmem [thread:$0]  %s0, 256, %s23, [#allocation3], 128, 128, 8
    $region5: #{transformer_forward.28} parent=1 // pred_fallthru
      _
    // Predicated region
    $region6: #{transformer_forward.28} parent=1 // pred_check
      _
    $region7: #{transformer_forward.28} parent=1 // pred_check_branch
      %30 = sbr.rel (0) target = $region9
    $region8: #{transformer_forward.28} parent=1 // pred_region
      %s32 = ssub.s32 256, 256
      %33 = vsyncadd [#allocation6], %s32
      %s34 = sshll.u32 [#allocation5], 4
      %s35 = int_to_ptr.vmem [resolvable:$true] %s34
      %40 = dma.hbm_to_vmem [thread:$0]  %s1, 256, %s35, [#allocation6], 64, 64, 4
    $region9: #{transformer_forward.28} parent=1 // pred_fallthru
      _
    // Predicated region
    $region10: #{transformer_forward.28} parent=1 // pred_check
      _
    $region11: #{transformer_forward.28} parent=1 // pred_check_branch
      %42 = sbr.rel (0) target = $region13
    $region12: #{transformer_forward.28} parent=1 // pred_region
      %s44 = ssub.s32 16, 16
      %45 = vsyncadd [#allocation6], %s44
      %s47 = sshll.u32 [#allocation7], 4
      %s48 = int_to_ptr.vmem [resolvable:$true] %s47
      %50 = dma.hbm_to_vmem [thread:$0]  %s2, 16, %s48, [#allocation6]
    $region13: #{transformer_forward.28} parent=1 // pred_fallthru
      _
    // Predicated region
    $region14: #{transformer_forward.28} parent=1 // pred_check
      _
    $region15: #{transformer_forward.28} parent=1 // pred_check_branch
      %52 = sbr.rel (0) target = $region17
    $region16: #{transformer_forward.28} parent=1 // pred_region
      %s54 = ssub.s32 512, 512
      %55 = vsyncadd [#allocation9], %s54
      %s56 = sshll.u32 [#allocation8], 4
      %s57 = int_to_ptr.vmem [resolvable:$true] %s56
      %62 = dma.hbm_to_vmem [thread:$0]  %s3, 512, %s57, [#allocation9], 64, 64, 4
    $region17: #{transformer_forward.28} parent=1 // pred_fallthru
      _
    // Predicated region
    $region18: #{transformer_forward.28} parent=1 // pred_check
      _
    $region19: #{transformer_forward.28} parent=1 // pred_check_branch
      %64 = sbr.rel (0) target = $region21
    $region20: #{transformer_forward.28} parent=1 // pred_region
      %s66 = ssub.s32 16, 16
      %67 = vsyncadd [#allocation9], %s66
      %s69 = sshll.u32 [#allocation10], 4
      %s70 = int_to_ptr.vmem [resolvable:$true] %s69
      %72 = dma.hbm_to_vmem [thread:$0]  %s4, 16, %s70, [#allocation9]
    $region21: #{transformer_forward.28} parent=1 // pred_fallthru
      _
    // Predicated region
    $region22: #{transformer_forward.28} parent=1 // pred_check
      _
    $region23: #{transformer_forward.28} parent=1 // pred_check_branch
      %74 = sbr.rel (0) target = $region25
    $region24: #{transformer_forward.28} parent=1 // pred_region
      %s76 = ssub.s32 16, 16
      %77 = vsyncadd [#allocation12], %s76
      %s79 = sshll.u32 [#allocation11], 4
      %s80 = int_to_ptr.vmem [resolvable:$true] %s79
      %82 = dma.hbm_to_vmem [thread:$0]  %s5, 16, %s80, [#allocation12]
    $region25: #{transformer_forward.28} parent=1 // pred_fallthru
      _
    // Predicated region
    $region26: #{transformer_forward.28} parent=1 // pred_check
      _
    $region27: #{transformer_forward.28} parent=1 // pred_check_branch
      %84 = sbr.rel (0) target = $region29
    $region28: #{transformer_forward.28} parent=1 // pred_region
      %s86 = ssub.s32 16, 16
      %87 = vsyncadd [#allocation12], %s86
      %s89 = sshll.u32 [#allocation13], 4
      %s90 = int_to_ptr.vmem [resolvable:$true] %s89
      %92 = dma.hbm_to_vmem [thread:$0]  %s6, 16, %s90, [#allocation12]
    $region29: #{transformer_forward.28} parent=1 // pred_fallthru
      _
    // Predicated region
    $region30: #{transformer_forward.28} parent=1 // pred_check
      _
    $region31: #{transformer_forward.28} parent=1 // pred_check_branch
      %94 = sbr.rel (0) target = $region33
    $region32: #{transformer_forward.28} parent=1 // pred_region
      %95 = dma.done [#allocation3], 256
    $region33: #{transformer_forward.28} parent=1 // pred_fallthru
      _
    // Predicated region
    $region34: #{transformer_forward.28} parent=1 // pred_check
      _
    $region35: #{transformer_forward.28} parent=1 // pred_check_branch
      %97 = sbr.rel (0) target = $region37
    $region36: #{transformer_forward.28} parent=1 // pred_region
      %98 = dma.done [#allocation6], 256
    $region37: #{transformer_forward.28} parent=1 // pred_fallthru
      _
    // Predicated region
    $region38: #{transformer_forward.28} parent=1 // pred_check
      _
    $region39: #{transformer_forward.28} parent=1 // pred_check_branch
      %100 = sbr.rel (0) target = $region41
    $region40: #{transformer_forward.28} parent=1 // pred_region
      %101 = dma.done [#allocation6], 16
    $region41: #{transformer_forward.28} parent=1 // pred_fallthru
      _
    // Predicated region
    $region42: #{transformer_forward.28} parent=1 // pred_check
      _
    $region43: #{transformer_forward.28} parent=1 // pred_check_branch
      %103 = sbr.rel (0) target = $region45
    $region44: #{transformer_forward.28} parent=1 // pred_region
      %104 = dma.done [#allocation9], 512
    $region45: #{transformer_forward.28} parent=1 // pred_fallthru
      _
    // Predicated region
    $region46: #{transformer_forward.28} parent=1 // pred_check
      _
    $region47: #{transformer_forward.28} parent=1 // pred_check_branch
      %106 = sbr.rel (0) target = $region49
    $region48: #{transformer_forward.28} parent=1 // pred_region
      %107 = dma.done [#allocation9], 16
    $region49: #{transformer_forward.28} parent=1 // pred_fallthru
      _
    // Predicated region
    $region50: #{transformer_forward.28} parent=1 // pred_check
      _
    $region51: #{transformer_forward.28} parent=1 // pred_check_branch
      %109 = sbr.rel (0) target = $region53
    $region52: #{transformer_forward.28} parent=1 // pred_region
      %110 = dma.done [#allocation12], 16
    $region53: #{transformer_forward.28} parent=1 // pred_fallthru
      _
    // Predicated region
    $region54: #{transformer_forward.28} parent=1 // pred_check
      _
    $region55: #{transformer_forward.28} parent=1 // pred_check_branch
      %112 = sbr.rel (0) target = $region57
    $region56: #{transformer_forward.28} parent=1 // pred_region
      %113 = dma.done [#allocation12], 16
    $region57: #{transformer_forward.28} parent=1 // pred_fallthru
      _
    %v115 = vld [vmem:[#allocation2] sm:$0xff]
    %v116 = vld [vmem:[#allocation2 + $0x8] sm:$0xff]
    %v117 = vpack.c.bf16 %v116, %v115
    %v118 = vld [vmem:[#allocation5] sm:$0xf]
    %v119 = vld [vmem:[#allocation5 + $0x4] sm:$0xf]
    %v120 = vld [vmem:[#allocation5 + $0x8] sm:$0xf]
    %v121 = vld [vmem:[#allocation5 + $0xc] sm:$0xf]
    %v122 = vld [vmem:[#allocation7] sm:$0x1]
    %v124 = vlaneseq
    %v125 = vshrl.u32 %v124, 7
    %v126 = vsub.s32 0, %v125
    %v127 = vrot.slane %v122, %v126
    %v133 = vunpack.c.l.b16 %v118
    %v134 = vunpack.c.l.b16 %v119
    %v135 = vunpack.c.l.b16 %v120
    %v136 = vunpack.c.l.b16 %v121
    %v137 = vpack.c.b16 %v134, %v133
    %v138 = vpack.c.b16 %v136, %v135
    %vm141 = vcmask 261120
    %v143 = vsel %vm141, %v117, 0
    %145 = vmatprep.subr.bf16.mxu0 0
    %146 = vmatpush1.bf16.msra.mxu0 %v137
    %147 = vmatprep.subr.bf16.mxu0 0
    %148 = vmatpush1.bf16.msra.mxu0 %v138
    %149 = vmatprep.subr.bf16.mxu0 0
    %150 = vmatpush1.bf16.msra.mxu0 0
    %151 = vmatprep.subr.bf16.mxu0 0
    %152 = vmatpush1.bf16.msra.mxu0 0
    %153 = vmatprep.subr.bf16.mxu0 0
    %154 = vmatpush1.bf16.msra.mxu0 0
    %155 = vmatprep.subr.bf16.mxu0 0
    %156 = vmatpush1.bf16.msra.mxu0 0
    %157 = vmatprep.subr.bf16.mxu0 0
    %158 = vmatpush1.bf16.msra.mxu0 0
    %159 = vmatprep.subr.bf16.mxu0 0
    %160 = vmatpush1.bf16.msra.mxu0 0
    %161 = vmatprep.subr.bf16.mxu0 0
    %162 = vmatpush1.bf16.msra.mxu0 0
    %163 = vmatprep.subr.bf16.mxu0 0
    %164 = vmatpush1.bf16.msra.mxu0 0
    %165 = vmatprep.subr.bf16.mxu0 0
    %166 = vmatpush1.bf16.msra.mxu0 0
    %167 = vmatprep.subr.bf16.mxu0 0
    %168 = vmatpush1.bf16.msra.mxu0 0
    %169 = vmatprep.subr.bf16.mxu0 0
    %170 = vmatpush1.bf16.msra.mxu0 0
    %171 = vmatprep.subr.bf16.mxu0 0
    %172 = vmatpush1.bf16.msra.mxu0 0
    %173 = vmatprep.subr.bf16.mxu0 0
    %174 = vmatpush1.bf16.msra.mxu0 0
    %175 = vmatprep.subr.bf16.mxu0 0
    %176 = vmatpush1.bf16.msra.mxu0 0
    %177 = vmatprep.mubr.bf16.mxu0 0
    %178 = vmatmul.mubr.bf16.gmra.mrb[0].mxu0 %v143
    %v179 = vpop.f32.mrb[0].mxu0
    %v180 = vadd.f32 %v127, %v179
    %v181 = vpop.f32.mrb[0].mxu0
    %v182 = vpop.f32.mrb[0].mxu0
    %v183 = vadd.f32 %v127, %v182
    %v184 = vpop.f32.mrb[0].mxu0
    %185 = vdwg.mxu0
    %v186 = vmax.f32 %v180, 0.0
    %v187 = vmax.f32 %v183, 0.0
    %v188 = vpack.c.bf16 %v187, %v186
    %v189 = vld [vmem:[#allocation8] sm:$0xf]
    %v190 = vld [vmem:[#allocation8 + $0x4] sm:$0xf]
    %v191 = vld [vmem:[#allocation8 + $0x8] sm:$0xf]
    %v192 = vld [vmem:[#allocation8 + $0xc] sm:$0xf]
    %v193 = vld [vmem:[#allocation8 + $0x10] sm:$0xf]
    %v194 = vld [vmem:[#allocation8 + $0x14] sm:$0xf]
    %v195 = vld [vmem:[#allocation8 + $0x18] sm:$0xf]
    %v196 = vld [vmem:[#allocation8 + $0x1c] sm:$0xf]
    %v197 = vld [vmem:[#allocation10] sm:$0x1]
    %v199 = vlaneseq
    %v200 = vshrl.u32 %v199, 7
    %v201 = vsub.s32 0, %v200
    %v202 = vrot.slane %v197, %v201
    %v212 = vunpack.c.l.b16 %v189
    %v213 = vunpack.c.l.b16 %v190
    %v214 = vunpack.c.l.b16 %v191
    %v215 = vunpack.c.l.b16 %v192
    %v216 = vunpack.c.l.b16 %v193
    %v217 = vunpack.c.l.b16 %v194
    %v218 = vunpack.c.l.b16 %v195
    %v219 = vunpack.c.l.b16 %v196
    %v220 = vpack.c.b16 %v213, %v212
    %v221 = vpack.c.b16 %v215, %v214
    %v222 = vpack.c.b16 %v217, %v216
    %v223 = vpack.c.b16 %v219, %v218
    %vm228 = vcmask 523264
    %v230 = vsel %vm228, %v188, 0
    %232 = vmatprep.subr.bf16.mxu0 0
    %233 = vmatpush1.bf16.msra.mxu0 %v220
    %234 = vmatprep.subr.bf16.mxu0 0
    %235 = vmatpush1.bf16.msra.mxu0 %v221
    %236 = vmatprep.subr.bf16.mxu0 0
    %237 = vmatpush1.bf16.msra.mxu0 %v222
    %238 = vmatprep.subr.bf16.mxu0 0
    %239 = vmatpush1.bf16.msra.mxu0 %v223
    %240 = vmatprep.subr.bf16.mxu0 0
    %241 = vmatpush1.bf16.msra.mxu0 0
    %242 = vmatprep.subr.bf16.mxu0 0
    %243 = vmatpush1.bf16.msra.mxu0 0
    %244 = vmatprep.subr.bf16.mxu0 0
    %245 = vmatpush1.bf16.msra.mxu0 0
    %246 = vmatprep.subr.bf16.mxu0 0
    %247 = vmatpush1.bf16.msra.mxu0 0
    %248 = vmatprep.subr.bf16.mxu0 0
    %249 = vmatpush1.bf16.msra.mxu0 0
    %250 = vmatprep.subr.bf16.mxu0 0
    %251 = vmatpush1.bf16.msra.mxu0 0
    %252 = vmatprep.subr.bf16.mxu0 0
    %253 = vmatpush1.bf16.msra.mxu0 0
    %254 = vmatprep.subr.bf16.mxu0 0
    %255 = vmatpush1.bf16.msra.mxu0 0
    %256 = vmatprep.subr.bf16.mxu0 0
    %257 = vmatpush1.bf16.msra.mxu0 0
    %258 = vmatprep.subr.bf16.mxu0 0
    %259 = vmatpush1.bf16.msra.mxu0 0
    %260 = vmatprep.subr.bf16.mxu0 0
    %261 = vmatpush1.bf16.msra.mxu0 0
    %262 = vmatprep.subr.bf16.mxu0 0
    %263 = vmatpush1.bf16.msra.mxu0 0
    %264 = vmatprep.mubr.bf16.mxu0 0
    %265 = vmatmul.mubr.bf16.gmra.mrb[0].mxu0 %v230
    %v266 = vpop.f32.mrb[0].mxu0
    %v267 = vadd.f32 %v202, %v266
    %v268 = vpop.f32.mrb[0].mxu0
    %v269 = vpop.f32.mrb[0].mxu0
    %v270 = vadd.f32 %v202, %v269
    %v271 = vpop.f32.mrb[0].mxu0
    %272 = vdwg.mxu0
    %v273 = vadd.f32 %v267, %v115
    %v274 = vadd.f32 %v270, %v116
    %v275 = vsel %vm141, %v273, 0.0
    %276 = vadd.xlane.f32.xlu0 %v275
    %v277 = vpop.xlane.xlu0 %276
    %v278 = vsel %vm141, %v274, 0.0
    %279 = vadd.xlane.f32.xlu0 %v278
    %v280 = vpop.xlane.xlu0 %279
    %v281 = vrcp.pop 32.0
    %v282 = vmul.f32 %v277, %v281
    %v283 = vmul.f32 %v280, %v281
    %v284 = vsub.f32 %v273, %v282
    %v285 = vsub.f32 %v274, %v283
    %v286 = vmul.f32 %v284, %v284
    %v287 = vmul.f32 %v285, %v285
    %v288 = vsel %vm141, %v286, 0.0
    %289 = vadd.xlane.f32.xlu0 %v288
    %v290 = vpop.xlane.xlu0 %289
    %v291 = vsel %vm141, %v287, 0.0
    %292 = vadd.xlane.f32.xlu0 %v291
    %v293 = vpop.xlane.xlu0 %292
    %v294 = vmul.f32 %v290, %v281
    %v295 = vmul.f32 %v293, %v281
    %v296 = vadd.f32 %v294, 1e-12
    %v297 = vadd.f32 %v295, 1e-12
    %v298 = vrsqrt.pop %v296
    %v299 = vrsqrt.pop %v297
    %v300 = vmul.f32 %v284, %v298
    %v301 = vmul.f32 %v285, %v299
    %v302 = vld [vmem:[#allocation11] sm:$0x1]
    %v304 = vlaneseq
    %v305 = vshrl.u32 %v304, 7
    %v306 = vsub.s32 0, %v305
    %v307 = vrot.slane %v302, %v306
    %v309 = vmul.f32 %v307, %v300
    %v310 = vmul.f32 %v307, %v301
    %v311 = vld [vmem:[#allocation13] sm:$0x1]
    %v313 = vlaneseq
    %v314 = vshrl.u32 %v313, 7
    %v315 = vsub.s32 0, %v314
    %v316 = vrot.slane %v311, %v315
    %v318 = vadd.f32 %v309, %v316
    %v319 = vadd.f32 %v310, %v316
    %320 = vst.msk [vmem:[#allocation14] sm:$0xff] %vm141, %v318
    %321 = vst.msk [vmem:[#allocation14 + $0x8] sm:$0xff] %vm141, %v319
    // Predicated region
    $region58: #{transformer_forward.28} parent=1 // pred_check
      _
    $region59: #{transformer_forward.28} parent=1 // pred_check_branch
      %323 = sbr.rel (0) target = $region61
    $region60: #{transformer_forward.28} parent=1 // pred_region
      %s325 = ssub.s32 256, 256
      %326 = vsyncadd [#allocation4], %s325
      %s327 = sshll.u32 [#allocation14], 4
      %s328 = int_to_ptr.vmem [resolvable:$true] %s327
      %333 = dma.vmem_to_hbm [thread:$0]  %s328, 256, %s7, [#allocation4], 128, 128, 8
    $region61: #{transformer_forward.28} parent=1 // pred_fallthru
      _
    // Predicated region
    $region62: #{transformer_forward.28} parent=1 // pred_check
      _
    $region63: #{transformer_forward.28} parent=1 // pred_check_branch
      %335 = sbr.rel (0) target = $region65
    $region64: #{transformer_forward.28} parent=1 // pred_region
      %336 = dma.done [#allocation4], 256
    $region65: #{transformer_forward.28} parent=1 // pred_fallthru
      _
    %337 = vsyncpa [#allocation3], 1
    %338 = vsyncpa [#allocation6], 1
    %339 = vsyncpa [#allocation9], 1
    %340 = vsyncpa [#allocation12], 1
    %341 = vsyncpa [#allocation4], 1

</llo_original>
